<compile_context>
chip_gen: v7x
topology: tpu7x:2x2x1
jax: 0.10.0
libtpu: 0.0.40
codegen_flags: <defaults>
</compile_context>

<pallas_src>
import functools

import numpy as np
import jax
import jax.numpy as jnp
from jax.experimental import pallas as pl
from jax.experimental.pallas import tpu as pltpu

_VMEM_LIMIT = 48 * 1024 * 1024   # fits v5e(128M)/v6e(128M)/v7x(64M physical)


# ---------------------------------------------------------------------------
# Shared helpers (work on both numpy and jax arrays)
# ---------------------------------------------------------------------------
def window_partition(x, ws):
    B, S, H, W, C = x.shape
    x = x.reshape(B, S // ws, ws, H // ws, ws, W // ws, ws, C)
    return x.transpose(0, 1, 3, 5, 2, 4, 6, 7).reshape(-1, ws, ws, ws, C)


def window_reverse(windows, ws, S, H, W):
    B = windows.shape[0] // (S * H * W // (ws * ws * ws))
    x = windows.reshape(B, S // ws, H // ws, W // ws, ws, ws, ws, -1)
    return x.transpose(0, 1, 4, 2, 5, 3, 6, 7).reshape(B, S, H, W, -1)


def make_relative_position_index(window_size):
    ws0, ws1, ws2 = window_size
    coords = np.stack(np.meshgrid(np.arange(ws0), np.arange(ws1), np.arange(ws2),
                                  indexing="ij"))
    coords_flatten = coords.reshape(3, -1)
    rel = coords_flatten[:, :, None] - coords_flatten[:, None, :]
    rel = rel.transpose(1, 2, 0).astype(np.int64)
    rel[:, :, 0] += ws0 - 1
    rel[:, :, 1] += ws1 - 1
    rel[:, :, 2] += ws2 - 1
    rel[:, :, 0] *= 3 * ws1 - 1      # replicates the original module's arithmetic
    rel[:, :, 1] *= 2 * ws1 - 1
    return rel.sum(-1)               # (N, N)


def compute_attn_mask(Sp, Hp, Wp, ws, shift):
    """Replicates BasicLayer.forward's shifted-window mask. Returns (nW, N, N)."""
    img = np.zeros((1, Sp, Hp, Wp, 1), np.float32)
    sl = (slice(0, -ws), slice(-ws, -shift), slice(-shift, None))
    cnt = 0
    for s in sl:
        for h in sl:
            for w in sl:
                img[:, s, h, w, :] = cnt
                cnt += 1
    mw = window_partition(img, ws).reshape(-1, ws * ws * ws)
    diff = mw[:, None, :] - mw[:, :, None]
    return np.where(diff != 0, -100.0, 0.0).astype(np.float32)


def layer_norm(x, gamma, beta, eps=1e-5):
    mu = jnp.mean(x, axis=-1, keepdims=True)
    var = jnp.mean((x - mu) ** 2, axis=-1, keepdims=True)
    return (x - mu) * jax.lax.rsqrt(var + eps) * gamma + beta


# ---------------------------------------------------------------------------
# Pallas kernel 1: fused norm1 + window attention + proj + residual
# ---------------------------------------------------------------------------
def _window_attn_kernel(x_ref, bias_ref, *rest, num_heads, head_dim, bw, n,
                        has_mask, fused_ln_res):
    if has_mask:
        (mask_ref, g_ref, b_ref, wq_ref, bq_ref, wk_ref, bk_ref,
         wv_ref, bv_ref, wp_ref, bp_ref, out_ref) = rest
    else:
        (g_ref, b_ref, wq_ref, bq_ref, wk_ref, bk_ref,
         wv_ref, bv_ref, wp_ref, bp_ref, out_ref) = rest
        mask_ref = None

    C = num_heads * head_dim
    M = bw * n

    x = x_ref[...]                                   # (M, C) f32 window tokens

    if fused_ln_res:                                 # fused norm1 (f32 statistics)
        mu = jnp.mean(x, axis=-1, keepdims=True)
        xc = x - mu
        var = jnp.mean(xc * xc, axis=-1, keepdims=True)
        xn = xc * jax.lax.rsqrt(var + 1e-5) * g_ref[...] + b_ref[...]
    else:                                            # padded path: x already normed
        xn = x
    xn_bf = xn.astype(jnp.bfloat16)

    # fused full-width QKV projections (q-scale folded into Wq/bq at prep time)
    q = jnp.dot(xn_bf, wq_ref[...], preferred_element_type=jnp.float32) + bq_ref[...]
    k = jnp.dot(xn_bf, wk_ref[...], preferred_element_type=jnp.float32) + bk_ref[...]
    v = jnp.dot(xn_bf, wv_ref[...], preferred_element_type=jnp.float32) + bv_ref[...]

    def split_heads(t):                              # (M, C) -> (H*bw, n, hd)
        return jnp.concatenate(
            [t[:, h * head_dim:(h + 1) * head_dim].reshape(bw, n, head_dim)
             for h in range(num_heads)], axis=0)

    q3 = split_heads(q).astype(jnp.bfloat16)
    k3 = split_heads(k).astype(jnp.bfloat16)
    v3 = split_heads(v).astype(jnp.bfloat16)

    # head-batched scores + rel-pos bias (+ shift mask); bias stays VMEM-resident
    s = jnp.einsum('bnd,bmd->bnm', q3, k3, preferred_element_type=jnp.float32)
    s = s.reshape(num_heads, bw, n, n) + bias_ref[...][:, None]
    if has_mask:
        s = s + mask_ref[...][None, :]
    s = s.reshape(num_heads * bw, n, n)

    # numerically stable softmax in f32, reciprocal on the EUP slot
    s = s - jnp.max(s, axis=-1, keepdims=True)
    p = jnp.exp(s)
    p = p * pl.reciprocal(jnp.sum(p, axis=-1, keepdims=True), approx=True)

    o = jnp.einsum('bnm,bmd->bnd', p.astype(jnp.bfloat16), v3,
                   preferred_element_type=jnp.float32)          # (H*bw, n, hd)

    # re-concatenate heads on the channel dim -> single full-width projection
    o2 = jnp.concatenate(
        [o[h * bw:(h + 1) * bw].reshape(M, head_dim) for h in range(num_heads)],
        axis=-1)
    y = jnp.dot(o2.astype(jnp.bfloat16), wp_ref[...],
                preferred_element_type=jnp.float32) + bp_ref[...]

    out_ref[...] = x + y if fused_ln_res else y      # fused first residual


def _choose_block_windows(B_, N, nW, target_rows=512):
    """Largest bw with bw | nW, (bw*N) % 8 == 0 and bw*N <= target_rows.
    Falls back to the smallest legal divisor, then to the full window batch."""
    best = 0
    smallest_legal = 0
    for bw in range(1, nW + 1):
        if nW % bw:
            continue
        if (bw * N) % 8:
            continue
        if smallest_legal == 0:
            smallest_legal = bw
        if bw * N <= target_rows:
            best = bw
    if best:
        return best
    if smallest_legal:
        return smallest_legal
    return B_                         # single full-size block (always legal)


def window_attention_pallas(x_win_tok, rel_bias, mask, gamma1, beta1,
                            wq, bq, wk, bk, wv, bv, wp, bp,
                            *, num_heads, B_, N, nW, fused_ln_res,
                            target_rows=512):
    """x_win_tok: (B_*N, C) raw (or pre-normed) window tokens; returns (B_*N, C)."""
    C = x_win_tok.shape[-1]
    head_dim = C // num_heads
    bw = _choose_block_windows(B_, N, nW, target_rows)

    has_mask = mask is not None
    if bw > nW:                                       # full-batch fallback
        if has_mask:
            mask = jnp.tile(mask, (B_ // nW, 1, 1))
        steps_per_image = 1
    else:
        steps_per_image = nW // bw

    M = bw * N
    n_steps = B_ // bw

    kernel = functools.partial(_window_attn_kernel, num_heads=num_heads,
                               head_dim=head_dim, bw=bw, n=N,
                               has_mask=has_mask, fused_ln_res=fused_ln_res)

    in_specs = [
        pl.BlockSpec((M, C), lambda i: (i, 0)),                # window tokens
        pl.BlockSpec((num_heads, N, N), lambda i: (0, 0, 0)),  # rel-pos bias (resident)
    ]
    args = [x_win_tok, rel_bias]
    if has_mask:
        in_specs.append(
            pl.BlockSpec((bw, N, N), lambda i: (i % steps_per_image, 0, 0)))
        args.append(mask)
    in_specs += [
        pl.BlockSpec((1, C), lambda i: (0, 0)),                # norm1 gamma
        pl.BlockSpec((1, C), lambda i: (0, 0)),                # norm1 beta
        pl.BlockSpec((C, C), lambda i: (0, 0)),                # Wq (scaled, bf16)
        pl.BlockSpec((1, C), lambda i: (0, 0)),                # bq (scaled)
        pl.BlockSpec((C, C), lambda i: (0, 0)),                # Wk
        pl.BlockSpec((1, C), lambda i: (0, 0)),                # bk
        pl.BlockSpec((C, C), lambda i: (0, 0)),                # Wv
        pl.BlockSpec((1, C), lambda i: (0, 0)),                # bv
        pl.BlockSpec((C, C), lambda i: (0, 0)),                # Wproj
        pl.BlockSpec((1, C), lambda i: (0, 0)),                # bproj
    ]
    args += [gamma1, beta1, wq, bq, wk, bk, wv, bv, wp, bp]

    out = pl.pallas_call(
        kernel,
        out_shape=jax.ShapeDtypeStruct((B_ * N, C), jnp.float32),
        grid_spec=pltpu.PrefetchScalarGridSpec(
            num_scalar_prefetch=0,
            grid=(n_steps,),
            in_specs=in_specs,
            out_specs=pl.BlockSpec((M, C), lambda i: (i, 0)),
        ),
        compiler_params=pltpu.CompilerParams(
            dimension_semantics=("parallel",),
            vmem_limit_bytes=_VMEM_LIMIT),
    )(*args)
    return out


# ---------------------------------------------------------------------------
# Pallas kernel 2: fused norm2 + MLP + residual
# ---------------------------------------------------------------------------
def _ln_mlp_kernel(x_ref, g_ref, b_ref, w1_ref, b1_ref, w2_ref, b2_ref, out_ref):
    x = x_ref[...]                                   # (TM, C) f32
    mu = jnp.mean(x, axis=-1, keepdims=True)
    xc = x - mu
    var = jnp.mean(xc * xc, axis=-1, keepdims=True)
    xn = xc * jax.lax.rsqrt(var + 1e-5) * g_ref[...] + b_ref[...]

    h = jnp.dot(xn.astype(jnp.bfloat16), w1_ref[...],
                preferred_element_type=jnp.float32) + b1_ref[...]
    # TODO(synk): torch nn.GELU is the exact erf form; tanh approximation used here.
    h = jax.nn.gelu(h, approximate=True)
    y = jnp.dot(h.astype(jnp.bfloat16), w2_ref[...],
                preferred_element_type=jnp.float32) + b2_ref[...]
    out_ref[...] = x + y                             # fused residual


def ln_mlp_residual_pallas(x_tok, gamma, beta, w1, b1, w2, b2, *, block_rows=1024):
    T, C = x_tok.shape
    hidden = w1.shape[1]
    tm = min(block_rows, T)
    tm = max(8, (tm // 8) * 8)                       # (8,128)-legal second-to-last dim
    T_pad = ((T + tm - 1) // tm) * tm
    x_in = jnp.pad(x_tok, ((0, T_pad - T), (0, 0))) if T_pad != T else x_tok

    out = pl.pallas_call(
        _ln_mlp_kernel,
        out_shape=jax.ShapeDtypeStruct((T_pad, C), jnp.float32),
        grid_spec=pltpu.PrefetchScalarGridSpec(
            num_scalar_prefetch=0,
            grid=(T_pad // tm,),
            in_specs=[
                pl.BlockSpec((tm, C), lambda i: (i, 0)),
                pl.BlockSpec((1, C), lambda i: (0, 0)),
                pl.BlockSpec((1, C), lambda i: (0, 0)),
                pl.BlockSpec((C, hidden), lambda i: (0, 0)),
                pl.BlockSpec((1, hidden), lambda i: (0, 0)),
                pl.BlockSpec((hidden, C), lambda i: (0, 0)),
                pl.BlockSpec((1, C), lambda i: (0, 0)),
            ],
            out_specs=pl.BlockSpec((tm, C), lambda i: (i, 0)),
        ),
        compiler_params=pltpu.CompilerParams(
            dimension_semantics=("parallel",),
            vmem_limit_bytes=_VMEM_LIMIT),
    )(x_in, gamma, beta, w1, b1, w2, b2)
    return out[:T] if T_pad != T else out


# ---------------------------------------------------------------------------
# Parameter construction (torch layouts) and kernel-layout prep
# ---------------------------------------------------------------------------
def init_block_params(key, dim, num_heads, window_size, mlp_ratio):
    hidden = int(dim * mlp_ratio)
    tbl = (2 * window_size - 1) ** 3
    ks = jax.random.split(key, 13)
    std = 0.05
    return dict(
        norm1_g=1.0 + 0.1 * jax.random.normal(ks[0], (dim,), jnp.float32),
        norm1_b=0.02 * jax.random.normal(ks[1], (dim,), jnp.float32),
        qkv_w=std * jax.random.normal(ks[2], (3 * dim, dim), jnp.float32),   # (out, in)
        qkv_b=0.02 * jax.random.normal(ks[3], (3 * dim,), jnp.float32),
        proj_w=std * jax.random.normal(ks[4], (dim, dim), jnp.float32),
        proj_b=0.02 * jax.random.normal(ks[5], (dim,), jnp.float32),
        rel_tbl=0.02 * jax.random.normal(ks[6], (tbl, num_heads), jnp.float32),
        norm2_g=1.0 + 0.1 * jax.random.normal(ks[7], (dim,), jnp.float32),
        norm2_b=0.02 * jax.random.normal(ks[8], (dim,), jnp.float32),
        fc1_w=std * jax.random.normal(ks[9], (hidden, dim), jnp.float32),
        fc1_b=0.02 * jax.random.normal(ks[10], (hidden,), jnp.float32),
        fc2_w=std * jax.random.normal(ks[11], (dim, hidden), jnp.float32),
        fc2_b=0.02 * jax.random.normal(ks[12], (dim,), jnp.float32),
    )


def prep_attn_params(p, dim, num_heads, window_size):
    hd = dim // num_heads
    scale = hd ** (-0.5)
    Wqkv, bqkv = p['qkv_w'], p['qkv_b']                       # (3C, C), (3C,)

    wq = (Wqkv[0:dim].T * scale).astype(jnp.bfloat16)         # scale folded into q
    bq = (bqkv[0:dim] * scale)[None, :].astype(jnp.float32)
    wk = Wqkv[dim:2 * dim].T.astype(jnp.bfloat16)
    bk = bqkv[dim:2 * dim][None, :].astype(jnp.float32)
    wv = Wqkv[2 * dim:3 * dim].T.astype(jnp.bfloat16)
    bv = bqkv[2 * dim:3 * dim][None, :].astype(jnp.float32)
    wp = p['proj_w'].T.astype(jnp.bfloat16)                   # (C, C)
    bp = p['proj_b'][None, :].astype(jnp.float32)

    N = window_size ** 3
    rel_idx = make_relative_position_index((window_size,) * 3)
    rel_bias = p['rel_tbl'][rel_idx.reshape(-1)].reshape(N, N, num_heads)
    rel_bias = jnp.transpose(rel_bias, (2, 0, 1)).astype(jnp.float32)   # (H, N, N)

    return dict(g1=p['norm1_g'][None, :], b1=p['norm1_b'][None, :],
                wq=wq, bq=bq, wk=wk, bk=bk, wv=wv, bv=bv,
                wp=wp, bp=bp, rel_bias=rel_bias)


def prep_mlp_params(p):
    return dict(g=p['norm2_g'][None, :], b=p['norm2_b'][None, :],
                w1=p['fc1_w'].T.astype(jnp.bfloat16), b1=p['fc1_b'][None, :],
                w2=p['fc2_w'].T.astype(jnp.bfloat16), b2=p['fc2_b'][None, :])


# ---------------------------------------------------------------------------
# BasicLayer forward (Pallas path)
# ---------------------------------------------------------------------------
def swin_block_forward(x, kp, mkp, input_resolution, ws, shift_size, num_heads,
                       attn_mask):
    B, L, C = x.shape
    S, H, W = input_resolution
    N = ws ** 3

    pad_r = (ws - W % ws) % ws
    pad_b = (ws - H % ws) % ws
    pad_g = (ws - S % ws) % ws
    fuse = (pad_r == 0 and pad_b == 0 and pad_g == 0)

    if fuse:
        # norm1 + first residual are fused inside the attention kernel
        base = x.reshape(B, S, H, W, C)
    else:
        # TODO(synk): with spatial padding, pad-then-norm != norm-then-pad, so norm1
        # and the first residual stay outside the kernel on this (padded) path.
        base = layer_norm(x, kp['g1'], kp['b1']).reshape(B, S, H, W, C)
        base = jnp.pad(base, ((0, 0), (0, pad_g), (0, pad_b), (0, pad_r), (0, 0)))

    _, Sp, Hp, Wp, _ = base.shape
    nW = (Sp // ws) * (Hp // ws) * (Wp // ws)

    if shift_size > 0:
        base = jnp.roll(base, (-shift_size, -shift_size, -shift_size), axis=(1, 2, 3))
        mask = attn_mask
    else:
        mask = None                                   # non-shifted: no mask input at all

    x_win = window_partition(base, ws).reshape(B * nW * N, C)

    y_win = window_attention_pallas(
        x_win, kp['rel_bias'], mask, kp['g1'], kp['b1'],
        kp['wq'], kp['bq'], kp['wk'], kp['bk'], kp['wv'], kp['bv'],
        kp['wp'], kp['bp'],
        num_heads=num_heads, B_=B * nW, N=N, nW=nW, fused_ln_res=fuse)

    y = window_reverse(y_win.reshape(-1, ws, ws, ws, C), ws, Sp, Hp, Wp)
    if shift_size > 0:
        y = jnp.roll(y, (shift_size, shift_size, shift_size), axis=(1, 2, 3))
    y = y[:, :S, :H, :W, :].reshape(B, L, C)
    x = y if fuse else (x + y)                        # residual-1 (in-kernel when fused)

    x = ln_mlp_residual_pallas(x.reshape(B * L, C), mkp['g'], mkp['b'],
                               mkp['w1'], mkp['b1'], mkp['w2'], mkp['b2'])
    return x.reshape(B, L, C)


def basic_layer_forward(x, attn_kparams, mlp_kparams, input_resolution,
                        window_size, num_heads):
    S, H, W = input_resolution
    ws = window_size
    shift = ws // 2
    assert min(input_resolution) > ws, "demo assumes window_size < min(resolution)"
    Sp = int(np.ceil(S / ws)) * ws
    Hp = int(np.ceil(H / ws)) * ws
    Wp = int(np.ceil(W / ws)) * ws
    attn_mask = jnp.asarray(compute_attn_mask(Sp, Hp, Wp, ws, shift))
    for i, (kp, mkp) in enumerate(zip(attn_kparams, mlp_kparams)):
        shift_size = 0 if i % 2 == 0 else shift
        x = swin_block_forward(x, kp, mkp, input_resolution, ws, shift_size,
                               num_heads, attn_mask)
    # TODO(synk): downsample=None path only (PatchMerging class not provided).
    return x


# ---------------------------------------------------------------------------
# Pure-JAX f32 reference mirroring the torch module op-for-op
# ---------------------------------------------------------------------------
def reference_basic_layer(x, block_params, input_resolution, window_size, num_heads):
    S, H, W = input_resolution
    B, L, C = x.shape
    ws = window_size
    shift = ws // 2
    hd = C // num_heads
    scale = hd ** (-0.5)
    N = ws ** 3
    Sp = int(np.ceil(S / ws)) * ws
    Hp = int(np.ceil(H / ws)) * ws
    Wp = int(np.ceil(W / ws)) * ws
    attn_mask = jnp.asarray(compute_attn_mask(Sp, Hp, Wp, ws, shift))
    rel_idx = make_relative_position_index((ws, ws, ws))

    for i, p in enumerate(block_params):
        shift_size = 0 if i % 2 == 0 else shift
        rel_bias = p['rel_tbl'][rel_idx.reshape(-1)].reshape(N, N, num_heads)
        rel_bias = jnp.transpose(rel_bias, (2, 0, 1))

        shortcut = x
        xn = layer_norm(x, p['norm1_g'], p['norm1_b']).reshape(B, S, H, W, C)
        pad_r = (ws - W % ws) % ws
        pad_b = (ws - H % ws) % ws
        pad_g = (ws - S % ws) % ws
        if pad_r or pad_b or pad_g:
            xn = jnp.pad(xn, ((0, 0), (0, pad_g), (0, pad_b), (0, pad_r), (0, 0)))
        if shift_size > 0:
            xn = jnp.roll(xn, (-shift_size,) * 3, axis=(1, 2, 3))
            mask = attn_mask
        else:
            mask = None
        xw = window_partition(xn, ws).reshape(-1, N, C)

        qkv = xw @ p['qkv_w'].T + p['qkv_b']
        qkv = qkv.reshape(-1, N, 3, num_heads, hd).transpose(2, 0, 3, 1, 4)
        q, k, v = qkv[0] * scale, qkv[1], qkv[2]
        attn = jnp.einsum('bhnd,bhmd->bhnm', q, k) + rel_bias[None]
        if mask is not None:
            nW = mask.shape[0]
            attn = attn.reshape(-1, nW, num_heads, N, N) + mask[None, :, None]
            attn = attn.reshape(-1, num_heads, N, N)
        attn = jax.nn.softmax(attn, axis=-1)
        xo = jnp.einsum('bhnm,bhmd->bhnd', attn, v).transpose(0, 2, 1, 3).reshape(-1, N, C)
        xo = xo @ p['proj_w'].T + p['proj_b']

        xo = window_reverse(xo.reshape(-1, ws, ws, ws, C), ws, Sp, Hp, Wp)
        if shift_size > 0:
            xo = jnp.roll(xo, (shift_size,) * 3, axis=(1, 2, 3))
        xo = xo[:, :S, :H, :W, :].reshape(B, L, C)

        x = shortcut + xo
        xn2 = layer_norm(x, p['norm2_g'], p['norm2_b'])
        h1 = jax.nn.gelu(xn2 @ p['fc1_w'].T + p['fc1_b'], approximate=False)
        x = x + (h1 @ p['fc2_w'].T + p['fc2_b'])
    return x


# ---------------------------------------------------------------------------
if __name__ == "__main__":
    B = 2
    dim = 32
    num_heads = 4
    window_size = 2
    depth = 2                      # one regular + one shifted block (exercises the mask)
    mlp_ratio = 4.0
    S = H = W = 4
    L = S * H * W                  # 64 tokens per image, 8 windows of 8 tokens each

    key = jax.random.PRNGKey(0)
    keys = jax.random.split(key, depth + 1)
    x = jax.random.normal(keys[0], (B, L, dim), jnp.float32)

    block_params = [init_block_params(keys[i + 1], dim, num_heads, window_size, mlp_ratio)
                    for i in range(depth)]
    attn_kparams = [prep_attn_params(p, dim, num_heads, window_size) for p in block_params]
    mlp_kparams = [prep_mlp_params(p) for p in block_params]

    out = basic_layer_forward(x, attn_kparams, mlp_kparams,
                              (S, H, W), window_size, num_heads)
    out = jax.block_until_ready(out)

    ref = reference_basic_layer(x, block_params, (S, H, W), window_size, num_heads)
    np.testing.assert_allclose(np.asarray(out), np.asarray(ref), rtol=2e-2, atol=2e-2)

    print("KERNEL_OK")
</pallas_src>

<mosaic_0001>
module attributes {stable_mosaic.version = 11 : i64} {
  func.func @_window_attn_kernel(%arg0: i32, %arg1: memref<64x32xf32, #tpu.memory_space<vmem>>, %arg2: memref<4x8x8xf32, #tpu.memory_space<vmem>>, %arg3: memref<1x32xf32, #tpu.memory_space<vmem>>, %arg4: memref<1x32xf32, #tpu.memory_space<vmem>>, %arg5: memref<32x32xbf16, #tpu.memory_space<vmem>>, %arg6: memref<1x32xf32, #tpu.memory_space<vmem>>, %arg7: memref<32x32xbf16, #tpu.memory_space<vmem>>, %arg8: memref<1x32xf32, #tpu.memory_space<vmem>>, %arg9: memref<32x32xbf16, #tpu.memory_space<vmem>>, %arg10: memref<1x32xf32, #tpu.memory_space<vmem>>, %arg11: memref<32x32xbf16, #tpu.memory_space<vmem>>, %arg12: memref<1x32xf32, #tpu.memory_space<vmem>>, %arg13: memref<64x32xf32, #tpu.memory_space<vmem>>) attributes {dimension_semantics = [#tpu.dimension_semantics<parallel>], iteration_bounds = array<i64: 2>, scalar_prefetch = 0 : i64, scratch_operands = 0 : i64, tpu.core_type = #tpu.core_type<tc>, window_params = [{transform_indices = @transform_0, window_bounds = array<i64: 64, 32>}, {pipeline_mode = #tpu.pipeline_mode<synchronous>, transform_indices = @transform_1, window_bounds = array<i64: 4, 8, 8>}, {pipeline_mode = #tpu.pipeline_mode<synchronous>, transform_indices = @transform_2, window_bounds = array<i64: 1, 32>}, {pipeline_mode = #tpu.pipeline_mode<synchronous>, transform_indices = @transform_3, window_bounds = array<i64: 1, 32>}, {pipeline_mode = #tpu.pipeline_mode<synchronous>, transform_indices = @transform_4, window_bounds = array<i64: 32, 32>}, {pipeline_mode = #tpu.pipeline_mode<synchronous>, transform_indices = @transform_5, window_bounds = array<i64: 1, 32>}, {pipeline_mode = #tpu.pipeline_mode<synchronous>, transform_indices = @transform_6, window_bounds = array<i64: 32, 32>}, {pipeline_mode = #tpu.pipeline_mode<synchronous>, transform_indices = @transform_7, window_bounds = array<i64: 1, 32>}, {pipeline_mode = #tpu.pipeline_mode<synchronous>, transform_indices = @transform_8, window_bounds = array<i64: 32, 32>}, {pipeline_mode = #tpu.pipeline_mode<synchronous>, transform_indices = @transform_9, window_bounds = array<i64: 1, 32>}, {pipeline_mode = #tpu.pipeline_mode<synchronous>, transform_indices = @transform_10, window_bounds = array<i64: 32, 32>}, {pipeline_mode = #tpu.pipeline_mode<synchronous>, transform_indices = @transform_11, window_bounds = array<i64: 1, 32>}, {transform_indices = @transform_12, window_bounds = array<i64: 64, 32>}]} {
    %c0 = arith.constant 0 : index
    %c0_0 = arith.constant 0 : index
    %0 = vector.load %arg1[%c0, %c0_0] : memref<64x32xf32, #tpu.memory_space<vmem>>, vector<64x32xf32>
    %cst = arith.constant dense<0.000000e+00> : vector<64xf32>
    %1 = vector.multi_reduction <add>, %0, %cst [1] : vector<64x32xf32> to vector<64xf32>
    %2 = vector.shape_cast %1 : vector<64xf32> to vector<64x1xf32>
    %cst_1 = arith.constant 3.200000e+01 : f32
    %3 = vector.broadcast %cst_1 : f32 to vector<64x1xf32>
    %4 = arith.divf %2, %3 : vector<64x1xf32>
    %5 = vector.broadcast %4 : vector<64x1xf32> to vector<64x32xf32>
    %6 = arith.subf %0, %5 : vector<64x32xf32>
    %7 = arith.mulf %6, %6 : vector<64x32xf32>
    %cst_2 = arith.constant dense<0.000000e+00> : vector<64xf32>
    %8 = vector.multi_reduction <add>, %7, %cst_2 [1] : vector<64x32xf32> to vector<64xf32>
    %9 = vector.shape_cast %8 : vector<64xf32> to vector<64x1xf32>
    %cst_3 = arith.constant 3.200000e+01 : f32
    %10 = vector.broadcast %cst_3 : f32 to vector<64x1xf32>
    %11 = arith.divf %9, %10 : vector<64x1xf32>
    %cst_4 = arith.constant 9.99999974E-6 : f32
    %12 = vector.broadcast %cst_4 : f32 to vector<64x1xf32>
    %13 = arith.addf %11, %12 : vector<64x1xf32>
    %14 = math.rsqrt %13 : vector<64x1xf32>
    %15 = vector.broadcast %14 : vector<64x1xf32> to vector<64x32xf32>
    %16 = arith.mulf %6, %15 : vector<64x32xf32>
    %c0_5 = arith.constant 0 : index
    %c0_6 = arith.constant 0 : index
    %17 = vector.load %arg3[%c0_5, %c0_6] : memref<1x32xf32, #tpu.memory_space<vmem>>, vector<1x32xf32>
    %18 = vector.broadcast %17 : vector<1x32xf32> to vector<64x32xf32>
    %19 = arith.mulf %16, %18 : vector<64x32xf32>
    %c0_7 = arith.constant 0 : index
    %c0_8 = arith.constant 0 : index
    %20 = vector.load %arg4[%c0_7, %c0_8] : memref<1x32xf32, #tpu.memory_space<vmem>>, vector<1x32xf32>
    %21 = vector.broadcast %20 : vector<1x32xf32> to vector<64x32xf32>
    %22 = arith.addf %19, %21 : vector<64x32xf32>
    %23 = arith.truncf %22 : vector<64x32xf32> to vector<64x32xbf16>
    %c0_9 = arith.constant 0 : index
    %c0_10 = arith.constant 0 : index
    %24 = vector.load %arg5[%c0_9, %c0_10] : memref<32x32xbf16, #tpu.memory_space<vmem>>, vector<32x32xbf16>
    %cst_11 = arith.constant dense<0.000000e+00> : vector<64x32xf32>
    %25 = tpu.matmul %23, %24, %cst_11 {dimension_numbers = #tpu.dot_dimension_numbers<[1], [0], [0], [1], [0, 0, 1, 1], [], []>} : vector<64x32xbf16>, vector<32x32xbf16>, vector<64x32xf32> -> vector<64x32xf32>
    %c0_12 = arith.constant 0 : index
    %c0_13 = arith.constant 0 : index
    %26 = vector.load %arg6[%c0_12, %c0_13] : memref<1x32xf32, #tpu.memory_space<vmem>>, vector<1x32xf32>
    %27 = vector.broadcast %26 : vector<1x32xf32> to vector<64x32xf32>
    %28 = arith.addf %25, %27 : vector<64x32xf32>
    %c0_14 = arith.constant 0 : index
    %c0_15 = arith.constant 0 : index
    %29 = vector.load %arg7[%c0_14, %c0_15] : memref<32x32xbf16, #tpu.memory_space<vmem>>, vector<32x32xbf16>
    %cst_16 = arith.constant dense<0.000000e+00> : vector<64x32xf32>
    %30 = tpu.matmul %23, %29, %cst_16 {dimension_numbers = #tpu.dot_dimension_numbers<[1], [0], [0], [1], [0, 0, 1, 1], [], []>} : vector<64x32xbf16>, vector<32x32xbf16>, vector<64x32xf32> -> vector<64x32xf32>
    %c0_17 = arith.constant 0 : index
    %c0_18 = arith.constant 0 : index
    %31 = vector.load %arg8[%c0_17, %c0_18] : memref<1x32xf32, #tpu.memory_space<vmem>>, vector<1x32xf32>
    %32 = vector.broadcast %31 : vector<1x32xf32> to vector<64x32xf32>
    %33 = arith.addf %30, %32 : vector<64x32xf32>
    %c0_19 = arith.constant 0 : index
    %c0_20 = arith.constant 0 : index
    %34 = vector.load %arg9[%c0_19, %c0_20] : memref<32x32xbf16, #tpu.memory_space<vmem>>, vector<32x32xbf16>
    %cst_21 = arith.constant dense<0.000000e+00> : vector<64x32xf32>
    %35 = tpu.matmul %23, %34, %cst_21 {dimension_numbers = #tpu.dot_dimension_numbers<[1], [0], [0], [1], [0, 0, 1, 1], [], []>} : vector<64x32xbf16>, vector<32x32xbf16>, vector<64x32xf32> -> vector<64x32xf32>
    %c0_22 = arith.constant 0 : index
    %c0_23 = arith.constant 0 : index
    %36 = vector.load %arg10[%c0_22, %c0_23] : memref<1x32xf32, #tpu.memory_space<vmem>>, vector<1x32xf32>
    %37 = vector.broadcast %36 : vector<1x32xf32> to vector<64x32xf32>
    %38 = arith.addf %35, %37 : vector<64x32xf32>
    %39 = vector.extract_strided_slice %28 {offsets = [0, 0], sizes = [64, 8], strides = [1, 1]} : vector<64x32xf32> to vector<64x8xf32>
    %40 = vector.shape_cast %39 : vector<64x8xf32> to vector<8x8x8xf32>
    %41 = vector.extract_strided_slice %28 {offsets = [0, 8], sizes = [64, 8], strides = [1, 1]} : vector<64x32xf32> to vector<64x8xf32>
    %42 = vector.shape_cast %41 : vector<64x8xf32> to vector<8x8x8xf32>
    %43 = vector.extract_strided_slice %28 {offsets = [0, 16], sizes = [64, 8], strides = [1, 1]} : vector<64x32xf32> to vector<64x8xf32>
    %44 = vector.shape_cast %43 : vector<64x8xf32> to vector<8x8x8xf32>
    %45 = vector.extract_strided_slice %28 {offsets = [0, 24], sizes = [64, 8], strides = [1, 1]} : vector<64x32xf32> to vector<64x8xf32>
    %46 = vector.shape_cast %45 : vector<64x8xf32> to vector<8x8x8xf32>
    %47 = tpu.concatenate %40, %42, %44, %46 in 0 : vector<8x8x8xf32>, vector<8x8x8xf32>, vector<8x8x8xf32>, vector<8x8x8xf32> -> vector<32x8x8xf32>
    %48 = arith.truncf %47 : vector<32x8x8xf32> to vector<32x8x8xbf16>
    %49 = vector.extract_strided_slice %33 {offsets = [0, 0], sizes = [64, 8], strides = [1, 1]} : vector<64x32xf32> to vector<64x8xf32>
    %50 = vector.shape_cast %49 : vector<64x8xf32> to vector<8x8x8xf32>
    %51 = vector.extract_strided_slice %33 {offsets = [0, 8], sizes = [64, 8], strides = [1, 1]} : vector<64x32xf32> to vector<64x8xf32>
    %52 = vector.shape_cast %51 : vector<64x8xf32> to vector<8x8x8xf32>
    %53 = vector.extract_strided_slice %33 {offsets = [0, 16], sizes = [64, 8], strides = [1, 1]} : vector<64x32xf32> to vector<64x8xf32>
    %54 = vector.shape_cast %53 : vector<64x8xf32> to vector<8x8x8xf32>
    %55 = vector.extract_strided_slice %33 {offsets = [0, 24], sizes = [64, 8], strides = [1, 1]} : vector<64x32xf32> to vector<64x8xf32>
    %56 = vector.shape_cast %55 : vector<64x8xf32> to vector<8x8x8xf32>
    %57 = tpu.concatenate %50, %52, %54, %56 in 0 : vector<8x8x8xf32>, vector<8x8x8xf32>, vector<8x8x8xf32>, vector<8x8x8xf32> -> vector<32x8x8xf32>
    %58 = arith.truncf %57 : vector<32x8x8xf32> to vector<32x8x8xbf16>
    %59 = vector.extract_strided_slice %38 {offsets = [0, 0], sizes = [64, 8], strides = [1, 1]} : vector<64x32xf32> to vector<64x8xf32>
    %60 = vector.shape_cast %59 : vector<64x8xf32> to vector<8x8x8xf32>
    %61 = vector.extract_strided_slice %38 {offsets = [0, 8], sizes = [64, 8], strides = [1, 1]} : vector<64x32xf32> to vector<64x8xf32>
    %62 = vector.shape_cast %61 : vector<64x8xf32> to vector<8x8x8xf32>
    %63 = vector.extract_strided_slice %38 {offsets = [0, 16], sizes = [64, 8], strides = [1, 1]} : vector<64x32xf32> to vector<64x8xf32>
    %64 = vector.shape_cast %63 : vector<64x8xf32> to vector<8x8x8xf32>
    %65 = vector.extract_strided_slice %38 {offsets = [0, 24], sizes = [64, 8], strides = [1, 1]} : vector<64x32xf32> to vector<64x8xf32>
    %66 = vector.shape_cast %65 : vector<64x8xf32> to vector<8x8x8xf32>
    %67 = tpu.concatenate %60, %62, %64, %66 in 0 : vector<8x8x8xf32>, vector<8x8x8xf32>, vector<8x8x8xf32>, vector<8x8x8xf32> -> vector<32x8x8xf32>
    %68 = arith.truncf %67 : vector<32x8x8xf32> to vector<32x8x8xbf16>
    "tpu.trace_start"() <{level = 10 : i32, message = "bnd,bmd->bnm"}> : () -> ()
    %cst_24 = arith.constant dense<0.000000e+00> : vector<32x8x8xf32>
    %69 = tpu.matmul %48, %58, %cst_24 {dimension_numbers = #tpu.dot_dimension_numbers<[2], [2], [1], [1], [0, 0, 0, 1, 1, 1], [0], [0]>} : vector<32x8x8xbf16>, vector<32x8x8xbf16>, vector<32x8x8xf32> -> vector<32x8x8xf32>
    "tpu.trace_stop"() : () -> ()
    %70 = vector.shape_cast %69 : vector<32x8x8xf32> to vector<4x8x8x8xf32>
    %c0_25 = arith.constant 0 : index
    %c0_26 = arith.constant 0 : index
    %c0_27 = arith.constant 0 : index
    %71 = vector.load %arg2[%c0_25, %c0_26, %c0_27] : memref<4x8x8xf32, #tpu.memory_space<vmem>>, vector<4x8x8xf32>
    %72 = vector.shape_cast %71 : vector<4x8x8xf32> to vector<4x1x8x8xf32>
    %73 = vector.broadcast %72 : vector<4x1x8x8xf32> to vector<4x8x8x8xf32>
    %74 = arith.addf %70, %73 : vector<4x8x8x8xf32>
    %75 = vector.shape_cast %74 : vector<4x8x8x8xf32> to vector<32x8x8xf32>
    %cst_28 = arith.constant dense<0xFF800000> : vector<32x8xf32>
    %76 = vector.multi_reduction <maximumf>, %75, %cst_28 [2] : vector<32x8x8xf32> to vector<32x8xf32>
    %77 = vector.shape_cast %76 : vector<32x8xf32> to vector<32x8x1xf32>
    %78 = vector.broadcast %77 : vector<32x8x1xf32> to vector<32x8x8xf32>
    %79 = arith.subf %75, %78 : vector<32x8x8xf32>
    %80 = math.exp %79 : vector<32x8x8xf32>
    %cst_29 = arith.constant dense<0.000000e+00> : vector<32x8xf32>
    %81 = vector.multi_reduction <add>, %80, %cst_29 [2] : vector<32x8x8xf32> to vector<32x8xf32>
    %82 = vector.shape_cast %81 : vector<32x8xf32> to vector<32x8x1xf32>
    %83 = tpu.reciprocal %82 {approx = true} : vector<32x8x1xf32> -> vector<32x8x1xf32>
    %84 = vector.broadcast %83 : vector<32x8x1xf32> to vector<32x8x8xf32>
    %85 = arith.mulf %80, %84 : vector<32x8x8xf32>
    %86 = arith.truncf %85 : vector<32x8x8xf32> to vector<32x8x8xbf16>
    "tpu.trace_start"() <{level = 10 : i32, message = "bnm,bmd->bnd"}> : () -> ()
    %cst_30 = arith.constant dense<0.000000e+00> : vector<32x8x8xf32>
    %87 = tpu.matmul %86, %68, %cst_30 {dimension_numbers = #tpu.dot_dimension_numbers<[2], [1], [1], [2], [0, 0, 0, 1, 1, 2], [0], [0]>} : vector<32x8x8xbf16>, vector<32x8x8xbf16>, vector<32x8x8xf32> -> vector<32x8x8xf32>
    "tpu.trace_stop"() : () -> ()
    %88 = vector.extract_strided_slice %87 {offsets = [0, 0, 0], sizes = [8, 8, 8], strides = [1, 1, 1]} : vector<32x8x8xf32> to vector<8x8x8xf32>
    %89 = vector.shape_cast %88 : vector<8x8x8xf32> to vector<64x8xf32>
    %90 = vector.extract_strided_slice %87 {offsets = [8, 0, 0], sizes = [8, 8, 8], strides = [1, 1, 1]} : vector<32x8x8xf32> to vector<8x8x8xf32>
    %91 = vector.shape_cast %90 : vector<8x8x8xf32> to vector<64x8xf32>
    %92 = vector.extract_strided_slice %87 {offsets = [16, 0, 0], sizes = [8, 8, 8], strides = [1, 1, 1]} : vector<32x8x8xf32> to vector<8x8x8xf32>
    %93 = vector.shape_cast %92 : vector<8x8x8xf32> to vector<64x8xf32>
    %94 = vector.extract_strided_slice %87 {offsets = [24, 0, 0], sizes = [8, 8, 8], strides = [1, 1, 1]} : vector<32x8x8xf32> to vector<8x8x8xf32>
    %95 = vector.shape_cast %94 : vector<8x8x8xf32> to vector<64x8xf32>
    %96 = tpu.concatenate %89, %91, %93, %95 in 1 : vector<64x8xf32>, vector<64x8xf32>, vector<64x8xf32>, vector<64x8xf32> -> vector<64x32xf32>
    %97 = arith.truncf %96 : vector<64x32xf32> to vector<64x32xbf16>
    %c0_31 = arith.constant 0 : index
    %c0_32 = arith.constant 0 : index
    %98 = vector.load %arg11[%c0_31, %c0_32] : memref<32x32xbf16, #tpu.memory_space<vmem>>, vector<32x32xbf16>
    %cst_33 = arith.constant dense<0.000000e+00> : vector<64x32xf32>
    %99 = tpu.matmul %97, %98, %cst_33 {dimension_numbers = #tpu.dot_dimension_numbers<[1], [0], [0], [1], [0, 0, 1, 1], [], []>} : vector<64x32xbf16>, vector<32x32xbf16>, vector<64x32xf32> -> vector<64x32xf32>
    %c0_34 = arith.constant 0 : index
    %c0_35 = arith.constant 0 : index
    %100 = vector.load %arg12[%c0_34, %c0_35] : memref<1x32xf32, #tpu.memory_space<vmem>>, vector<1x32xf32>
    %101 = vector.broadcast %100 : vector<1x32xf32> to vector<64x32xf32>
    %102 = arith.addf %99, %101 : vector<64x32xf32>
    %103 = arith.addf %0, %102 : vector<64x32xf32>
    %c0_36 = arith.constant 0 : index
    %c0_37 = arith.constant 0 : index
    %104 = vector.load %arg13[%c0_36, %c0_37] : memref<64x32xf32, #tpu.memory_space<vmem>>, vector<64x32xf32>
    tpu.vector_store %arg13[%c0_36, %c0_37], %103 {strides = array<i32>} : memref<64x32xf32, #tpu.memory_space<vmem>>, vector<64x32xf32>,
    return
  }
  func.func @transform_0(%arg0: i32) -> (i32, i32) {
    %c0_i32 = arith.constant 0 : i32
    %c0_i32_0 = arith.constant 0 : i32
    return %arg0, %c0_i32 : i32, i32
  }
  func.func @transform_1(%arg0: i32) -> (i32, i32, i32) {
    %c0_i32 = arith.constant 0 : i32
    %c0_i32_0 = arith.constant 0 : i32
    %c0_i32_1 = arith.constant 0 : i32
    %c0_i32_2 = arith.constant 0 : i32
    return %c0_i32, %c0_i32_0, %c0_i32_1 : i32, i32, i32
  }
  func.func @transform_2(%arg0: i32) -> (i32, i32) {
    %c0_i32 = arith.constant 0 : i32
    %c0_i32_0 = arith.constant 0 : i32
    %c0_i32_1 = arith.constant 0 : i32
    return %c0_i32, %c0_i32_0 : i32, i32
  }
  func.func @transform_3(%arg0: i32) -> (i32, i32) {
    %c0_i32 = arith.constant 0 : i32
    %c0_i32_0 = arith.constant 0 : i32
    %c0_i32_1 = arith.constant 0 : i32
    return %c0_i32, %c0_i32_0 : i32, i32
  }
  func.func @transform_4(%arg0: i32) -> (i32, i32) {
    %c0_i32 = arith.constant 0 : i32
    %c0_i32_0 = arith.constant 0 : i32
    %c0_i32_1 = arith.constant 0 : i32
    return %c0_i32, %c0_i32_0 : i32, i32
  }
  func.func @transform_5(%arg0: i32) -> (i32, i32) {
    %c0_i32 = arith.constant 0 : i32
    %c0_i32_0 = arith.constant 0 : i32
    %c0_i32_1 = arith.constant 0 : i32
    return %c0_i32, %c0_i32_0 : i32, i32
  }
  func.func @transform_6(%arg0: i32) -> (i32, i32) {
    %c0_i32 = arith.constant 0 : i32
    %c0_i32_0 = arith.constant 0 : i32
    %c0_i32_1 = arith.constant 0 : i32
    return %c0_i32, %c0_i32_0 : i32, i32
  }
  func.func @transform_7(%arg0: i32) -> (i32, i32) {
    %c0_i32 = arith.constant 0 : i32
    %c0_i32_0 = arith.constant 0 : i32
    %c0_i32_1 = arith.constant 0 : i32
    return %c0_i32, %c0_i32_0 : i32, i32
  }
  func.func @transform_8(%arg0: i32) -> (i32, i32) {
    %c0_i32 = arith.constant 0 : i32
    %c0_i32_0 = arith.constant 0 : i32
    %c0_i32_1 = arith.constant 0 : i32
    return %c0_i32, %c0_i32_0 : i32, i32
  }
  func.func @transform_9(%arg0: i32) -> (i32, i32) {
    %c0_i32 = arith.constant 0 : i32
    %c0_i32_0 = arith.constant 0 : i32
    %c0_i32_1 = arith.constant 0 : i32
    return %c0_i32, %c0_i32_0 : i32, i32
  }
  func.func @transform_10(%arg0: i32) -> (i32, i32) {
    %c0_i32 = arith.constant 0 : i32
    %c0_i32_0 = arith.constant 0 : i32
    %c0_i32_1 = arith.constant 0 : i32
    return %c0_i32, %c0_i32_0 : i32, i32
  }
  func.func @transform_11(%arg0: i32) -> (i32, i32) {
    %c0_i32 = arith.constant 0 : i32
    %c0_i32_0 = arith.constant 0 : i32
    %c0_i32_1 = arith.constant 0 : i32
    return %c0_i32, %c0_i32_0 : i32, i32
  }
  func.func @transform_12(%arg0: i32) -> (i32, i32) {
    %c0_i32 = arith.constant 0 : i32
    %c0_i32_0 = arith.constant 0 : i32
    return %arg0, %c0_i32 : i32, i32
  }
}

</mosaic_0001>

<llo_original>
// kernel: tpu_custom_call.1
$region0: #{tpu_custom_call.1}
  #allocation0 [shape = 'u32[]', space=smem, size = 0x4, offset = 0x4, fixed_abs, tag = 'smem constant byte address 0x4 - core index']
  #allocation1 [shape = 'u32[144,128]{1,0:T(1,128)}', space=vmem, size = 0x12000, scoped, tag = 'internal scratch']
  %s0 = inlined_call_operand.vmem [shape: f32[128,32], index: 0, kind: input, shape index: {}]
  %s1 = inlined_call_operand.vmem [shape: f32[4,8,8], index: 1, kind: input, shape index: {}]
  %s2 = inlined_call_operand.vmem [shape: f32[1,32], index: 2, kind: input, shape index: {}]
  %s3 = inlined_call_operand.vmem [shape: f32[1,32], index: 3, kind: input, shape index: {}]
  %s4 = inlined_call_operand.vmem [shape: bf16[32,32], index: 4, kind: input, shape index: {}]
  %s5 = inlined_call_operand.vmem [shape: f32[1,32], index: 5, kind: input, shape index: {}]
  %s6 = inlined_call_operand.vmem [shape: bf16[32,32], index: 6, kind: input, shape index: {}]
  %s7 = inlined_call_operand.vmem [shape: f32[1,32], index: 7, kind: input, shape index: {}]
  %s8 = inlined_call_operand.vmem [shape: bf16[32,32], index: 8, kind: input, shape index: {}]
  %s9 = inlined_call_operand.vmem [shape: f32[1,32], index: 9, kind: input, shape index: {}]
  %s10 = inlined_call_operand.vmem [shape: bf16[32,32], index: 10, kind: input, shape index: {}]
  %s11 = inlined_call_operand.vmem [shape: f32[1,32], index: 11, kind: input, shape index: {}]
  %s12 = inlined_call_operand.vmem [shape: f32[128,32], index: 12, kind: output, shape index: {}]
  %s13 = sld [smem:[#allocation0]]
  $region81: #{tpu_custom_call.1} parent=0
    _
  %s15 = ssub.s32 1, %s13
  %s16 = scalar_select 0, %s15, %s13
  loop: start=0, step=1, limit=4
  $region2: #{tpu_custom_call.1} parent=0 // loop_pre_header
    _
  $region3: #{tpu_custom_call.1} parent=0 // loop_header
    %s18 = sphi 0, %s22
    %p19 = scmp.ge.s32.totalorder %s18, 4
    %s28 = sphi 0, %s30
    %s31 = sphi 0, %s28
    %s32 = sphi 0, %s31
    %s48 = sphi 0, %s32
    %s52 = sphi 0, %s52
    %s54 = sphi 0, %s52
    %s55 = sphi 0, %s54
    %s69 = sphi 0, %s55
    %s73 = sphi 0, %s73
    %s75 = sphi 0, %s73
    %s76 = sphi 0, %s75
    %s90 = sphi 0, %s76
    %s94 = sphi 0, %s94
    %s96 = sphi 0, %s94
    %s97 = sphi 0, %s96
    %s111 = sphi 0, %s97
    %s115 = sphi 0, %s115
    %s117 = sphi 0, %s115
    %s118 = sphi 0, %s117
    %s132 = sphi 0, %s118
    %s136 = sphi 0, %s136
    %s138 = sphi 0, %s136
    %s139 = sphi 0, %s138
    %s153 = sphi 0, %s139
    %s157 = sphi 0, %s157
    %s159 = sphi 0, %s157
    %s160 = sphi 0, %s159
    %s174 = sphi 0, %s160
    %s178 = sphi 0, %s178
    %s180 = sphi 0, %s178
    %s181 = sphi 0, %s180
    %s195 = sphi 0, %s181
    %s199 = sphi 0, %s199
    %s201 = sphi 0, %s199
    %s202 = sphi 0, %s201
    %s216 = sphi 0, %s202
    %s220 = sphi 0, %s220
    %s222 = sphi 0, %s220
    %s223 = sphi 0, %s222
    %s237 = sphi 0, %s223
    %s241 = sphi 0, %s241
    %s243 = sphi 0, %s241
    %s244 = sphi 0, %s243
    %s258 = sphi 0, %s244
    %s262 = sphi 0, %s262
    %s264 = sphi 0, %s262
    %s265 = sphi 0, %s264
    %s279 = sphi 0, %s265
    %s285 = sphi 0, %s287
    %s288 = sphi 0, %s285
    %s289 = sphi 0, %s288
    %s305 = sphi 0, %s289
  $region4: #{tpu_custom_call.1} parent=0 // loop_header_branch
    %21 = sbr.rel (%p19) target = $region8
  $region5: #{tpu_custom_call.1} parent=0 // loop_body
    %s23 = ssub.s32 %s18, 1
    %s24 = ssub.s32 %s18, 2
    %s25 = sadd.s32 %s18, 1
    %s26 = ssub.s32 %s18, %s25
    %p27 = scmp.eq.s32.totalorder %s26, 0
    %s29 = sadd.s32 %s28, 1
    %s30 = scalar_select %p27, %s28, %s29
    %p33 = pneg %p27
    %p34 = scmp.eq.s32.totalorder %s18, 1
    %p35 = por %p33, %p34
    %p36 = scmp.ne.s32.totalorder %s28, %s31
    %p37 = scmp.eq.s32.totalorder %s18, 0
    %p38 = por %p36, %p37
    %p39 = scmp.ne.s32.totalorder %s28, %s31
    %p40 = scmp.eq.s32.totalorder %s23, 1
    %p41 = por %p39, %p40
    %p42 = scmp.ne.s32.totalorder %s31, %s32
    %p43 = scmp.eq.s32.totalorder %s23, 0
    %p44 = por %p42, %p43
    %p45 = scmp.ne.s32.totalorder %s31, %s32
    %p46 = scmp.eq.s32.totalorder %s24, 1
    %p47 = por %p45, %p46
    %p49 = scmp.ne.s32.totalorder %s32, %s48
    %p50 = scmp.eq.s32.totalorder %s24, 0
    %p51 = por %p49, %p50
    %s53 = sadd.s32 %s52, 1
    %p56 = scmp.eq.s32.totalorder %s18, 1
    %p57 = scmp.ne.s32.totalorder %s52, %s54
    %p58 = scmp.eq.s32.totalorder %s18, 0
    %p59 = por %p57, %p58
    %p60 = scmp.ne.s32.totalorder %s52, %s54
    %p61 = scmp.eq.s32.totalorder %s23, 1
    %p62 = por %p60, %p61
    %p63 = scmp.ne.s32.totalorder %s54, %s55
    %p64 = scmp.eq.s32.totalorder %s23, 0
    %p65 = por %p63, %p64
    %p66 = scmp.ne.s32.totalorder %s54, %s55
    %p67 = scmp.eq.s32.totalorder %s24, 1
    %p68 = por %p66, %p67
    %p70 = scmp.ne.s32.totalorder %s55, %s69
    %p71 = scmp.eq.s32.totalorder %s24, 0
    %p72 = por %p70, %p71
    %s74 = sadd.s32 %s73, 1
    %p77 = scmp.eq.s32.totalorder %s18, 1
    %p78 = scmp.ne.s32.totalorder %s73, %s75
    %p79 = scmp.eq.s32.totalorder %s18, 0
    %p80 = por %p78, %p79
    %p81 = scmp.ne.s32.totalorder %s73, %s75
    %p82 = scmp.eq.s32.totalorder %s23, 1
    %p83 = por %p81, %p82
    %p84 = scmp.ne.s32.totalorder %s75, %s76
    %p85 = scmp.eq.s32.totalorder %s23, 0
    %p86 = por %p84, %p85
    %p87 = scmp.ne.s32.totalorder %s75, %s76
    %p88 = scmp.eq.s32.totalorder %s24, 1
    %p89 = por %p87, %p88
    %p91 = scmp.ne.s32.totalorder %s76, %s90
    %p92 = scmp.eq.s32.totalorder %s24, 0
    %p93 = por %p91, %p92
    %s95 = sadd.s32 %s94, 1
    %p98 = scmp.eq.s32.totalorder %s18, 1
    %p99 = scmp.ne.s32.totalorder %s94, %s96
    %p100 = scmp.eq.s32.totalorder %s18, 0
    %p101 = por %p99, %p100
    %p102 = scmp.ne.s32.totalorder %s94, %s96
    %p103 = scmp.eq.s32.totalorder %s23, 1
    %p104 = por %p102, %p103
    %p105 = scmp.ne.s32.totalorder %s96, %s97
    %p106 = scmp.eq.s32.totalorder %s23, 0
    %p107 = por %p105, %p106
    %p108 = scmp.ne.s32.totalorder %s96, %s97
    %p109 = scmp.eq.s32.totalorder %s24, 1
    %p110 = por %p108, %p109
    %p112 = scmp.ne.s32.totalorder %s97, %s111
    %p113 = scmp.eq.s32.totalorder %s24, 0
    %p114 = por %p112, %p113
    %s116 = sadd.s32 %s115, 1
    %p119 = scmp.eq.s32.totalorder %s18, 1
    %p120 = scmp.ne.s32.totalorder %s115, %s117
    %p121 = scmp.eq.s32.totalorder %s18, 0
    %p122 = por %p120, %p121
    %p123 = scmp.ne.s32.totalorder %s115, %s117
    %p124 = scmp.eq.s32.totalorder %s23, 1
    %p125 = por %p123, %p124
    %p126 = scmp.ne.s32.totalorder %s117, %s118
    %p127 = scmp.eq.s32.totalorder %s23, 0
    %p128 = por %p126, %p127
    %p129 = scmp.ne.s32.totalorder %s117, %s118
    %p130 = scmp.eq.s32.totalorder %s24, 1
    %p131 = por %p129, %p130
    %p133 = scmp.ne.s32.totalorder %s118, %s132
    %p134 = scmp.eq.s32.totalorder %s24, 0
    %p135 = por %p133, %p134
    %s137 = sadd.s32 %s136, 1
    %p140 = scmp.eq.s32.totalorder %s18, 1
    %p141 = scmp.ne.s32.totalorder %s136, %s138
    %p142 = scmp.eq.s32.totalorder %s18, 0
    %p143 = por %p141, %p142
    %p144 = scmp.ne.s32.totalorder %s136, %s138
    %p145 = scmp.eq.s32.totalorder %s23, 1
    %p146 = por %p144, %p145
    %p147 = scmp.ne.s32.totalorder %s138, %s139
    %p148 = scmp.eq.s32.totalorder %s23, 0
    %p149 = por %p147, %p148
    %p150 = scmp.ne.s32.totalorder %s138, %s139
    %p151 = scmp.eq.s32.totalorder %s24, 1
    %p152 = por %p150, %p151
    %p154 = scmp.ne.s32.totalorder %s139, %s153
    %p155 = scmp.eq.s32.totalorder %s24, 0
    %p156 = por %p154, %p155
    %s158 = sadd.s32 %s157, 1
    %p161 = scmp.eq.s32.totalorder %s18, 1
    %p162 = scmp.ne.s32.totalorder %s157, %s159
    %p163 = scmp.eq.s32.totalorder %s18, 0
    %p164 = por %p162, %p163
    %p165 = scmp.ne.s32.totalorder %s157, %s159
    %p166 = scmp.eq.s32.totalorder %s23, 1
    %p167 = por %p165, %p166
    %p168 = scmp.ne.s32.totalorder %s159, %s160
    %p169 = scmp.eq.s32.totalorder %s23, 0
    %p170 = por %p168, %p169
    %p171 = scmp.ne.s32.totalorder %s159, %s160
    %p172 = scmp.eq.s32.totalorder %s24, 1
    %p173 = por %p171, %p172
    %p175 = scmp.ne.s32.totalorder %s160, %s174
    %p176 = scmp.eq.s32.totalorder %s24, 0
    %p177 = por %p175, %p176
    %s179 = sadd.s32 %s178, 1
    %p182 = scmp.eq.s32.totalorder %s18, 1
    %p183 = scmp.ne.s32.totalorder %s178, %s180
    %p184 = scmp.eq.s32.totalorder %s18, 0
    %p185 = por %p183, %p184
    %p186 = scmp.ne.s32.totalorder %s178, %s180
    %p187 = scmp.eq.s32.totalorder %s23, 1
    %p188 = por %p186, %p187
    %p189 = scmp.ne.s32.totalorder %s180, %s181
    %p190 = scmp.eq.s32.totalorder %s23, 0
    %p191 = por %p189, %p190
    %p192 = scmp.ne.s32.totalorder %s180, %s181
    %p193 = scmp.eq.s32.totalorder %s24, 1
    %p194 = por %p192, %p193
    %p196 = scmp.ne.s32.totalorder %s181, %s195
    %p197 = scmp.eq.s32.totalorder %s24, 0
    %p198 = por %p196, %p197
    %s200 = sadd.s32 %s199, 1
    %p203 = scmp.eq.s32.totalorder %s18, 1
    %p204 = scmp.ne.s32.totalorder %s199, %s201
    %p205 = scmp.eq.s32.totalorder %s18, 0
    %p206 = por %p204, %p205
    %p207 = scmp.ne.s32.totalorder %s199, %s201
    %p208 = scmp.eq.s32.totalorder %s23, 1
    %p209 = por %p207, %p208
    %p210 = scmp.ne.s32.totalorder %s201, %s202
    %p211 = scmp.eq.s32.totalorder %s23, 0
    %p212 = por %p210, %p211
    %p213 = scmp.ne.s32.totalorder %s201, %s202
    %p214 = scmp.eq.s32.totalorder %s24, 1
    %p215 = por %p213, %p214
    %p217 = scmp.ne.s32.totalorder %s202, %s216
    %p218 = scmp.eq.s32.totalorder %s24, 0
    %p219 = por %p217, %p218
    %s221 = sadd.s32 %s220, 1
    %p224 = scmp.eq.s32.totalorder %s18, 1
    %p225 = scmp.ne.s32.totalorder %s220, %s222
    %p226 = scmp.eq.s32.totalorder %s18, 0
    %p227 = por %p225, %p226
    %p228 = scmp.ne.s32.totalorder %s220, %s222
    %p229 = scmp.eq.s32.totalorder %s23, 1
    %p230 = por %p228, %p229
    %p231 = scmp.ne.s32.totalorder %s222, %s223
    %p232 = scmp.eq.s32.totalorder %s23, 0
    %p233 = por %p231, %p232
    %p234 = scmp.ne.s32.totalorder %s222, %s223
    %p235 = scmp.eq.s32.totalorder %s24, 1
    %p236 = por %p234, %p235
    %p238 = scmp.ne.s32.totalorder %s223, %s237
    %p239 = scmp.eq.s32.totalorder %s24, 0
    %p240 = por %p238, %p239
    %s242 = sadd.s32 %s241, 1
    %p245 = scmp.eq.s32.totalorder %s18, 1
    %p246 = scmp.ne.s32.totalorder %s241, %s243
    %p247 = scmp.eq.s32.totalorder %s18, 0
    %p248 = por %p246, %p247
    %p249 = scmp.ne.s32.totalorder %s241, %s243
    %p250 = scmp.eq.s32.totalorder %s23, 1
    %p251 = por %p249, %p250
    %p252 = scmp.ne.s32.totalorder %s243, %s244
    %p253 = scmp.eq.s32.totalorder %s23, 0
    %p254 = por %p252, %p253
    %p255 = scmp.ne.s32.totalorder %s243, %s244
    %p256 = scmp.eq.s32.totalorder %s24, 1
    %p257 = por %p255, %p256
    %p259 = scmp.ne.s32.totalorder %s244, %s258
    %p260 = scmp.eq.s32.totalorder %s24, 0
    %p261 = por %p259, %p260
    %s263 = sadd.s32 %s262, 1
    %p266 = scmp.eq.s32.totalorder %s18, 1
    %p267 = scmp.ne.s32.totalorder %s262, %s264
    %p268 = scmp.eq.s32.totalorder %s18, 0
    %p269 = por %p267, %p268
    %p270 = scmp.ne.s32.totalorder %s262, %s264
    %p271 = scmp.eq.s32.totalorder %s23, 1
    %p272 = por %p270, %p271
    %p273 = scmp.ne.s32.totalorder %s264, %s265
    %p274 = scmp.eq.s32.totalorder %s23, 0
    %p275 = por %p273, %p274
    %p276 = scmp.ne.s32.totalorder %s264, %s265
    %p277 = scmp.eq.s32.totalorder %s24, 1
    %p278 = por %p276, %p277
    %p280 = scmp.ne.s32.totalorder %s265, %s279
    %p281 = scmp.eq.s32.totalorder %s24, 0
    %p282 = por %p280, %p281
    %s283 = ssub.s32 %s18, %s25
    %p284 = scmp.eq.s32.totalorder %s283, 0
    %s286 = sadd.s32 %s285, 1
    %s287 = scalar_select %p284, %s285, %s286
    %p290 = pneg %p284
    %p291 = scmp.eq.s32.totalorder %s18, 1
    %p292 = por %p290, %p291
    %p293 = scmp.ne.s32.totalorder %s285, %s288
    %p294 = scmp.eq.s32.totalorder %s18, 0
    %p295 = por %p293, %p294
    %p296 = scmp.ne.s32.totalorder %s285, %s288
    %p297 = scmp.eq.s32.totalorder %s23, 1
    %p298 = por %p296, %p297
    %p299 = scmp.ne.s32.totalorder %s288, %s289
    %p300 = scmp.eq.s32.totalorder %s23, 0
    %p301 = por %p299, %p300
    %p302 = scmp.ne.s32.totalorder %s288, %s289
    %p303 = scmp.eq.s32.totalorder %s24, 1
    %p304 = por %p302, %p303
    %p306 = scmp.ne.s32.totalorder %s289, %s305
    %p307 = scmp.eq.s32.totalorder %s24, 0
    %p308 = por %p306, %p307
    %p309 = scmp.le.s32.totalorder 1, %s18
    %p310 = scmp.lt.s32.totalorder %s18, 3
    %p311 = pnand %p309, %p310
    %p312 = pneg %p311
    // Predicated region
    $region9: #{tpu_custom_call.1} parent=5 // pred_check
      _
    $region10: #{tpu_custom_call.1} parent=5 // pred_check_branch
      %314 = sbr.rel (%p311) target = $region12
    $region11: #{tpu_custom_call.1} parent=5 // pred_region
      %s315 = ssub.s32 %s18, 1
      // Predicated region
      $region13: #{tpu_custom_call.1} parent=11 // pred_check
        %p316 = pneg %p65
      $region14: #{tpu_custom_call.1} parent=11 // pred_check_branch
        %318 = sbr.rel (%p316) target = $region16
      $region15: #{tpu_custom_call.1} parent=11 // pred_region
        _
      $region16: #{tpu_custom_call.1} parent=11 // pred_fallthru
        _
      // Predicated region
      $region17: #{tpu_custom_call.1} parent=11 // pred_check
        %p319 = pneg %p86
      $region18: #{tpu_custom_call.1} parent=11 // pred_check_branch
        %321 = sbr.rel (%p319) target = $region20
      $region19: #{tpu_custom_call.1} parent=11 // pred_region
        _
      $region20: #{tpu_custom_call.1} parent=11 // pred_fallthru
        _
      // Predicated region
      $region21: #{tpu_custom_call.1} parent=11 // pred_check
        %p322 = pneg %p107
      $region22: #{tpu_custom_call.1} parent=11 // pred_check_branch
        %324 = sbr.rel (%p322) target = $region24
      $region23: #{tpu_custom_call.1} parent=11 // pred_region
        _
      $region24: #{tpu_custom_call.1} parent=11 // pred_fallthru
        _
      // Predicated region
      $region25: #{tpu_custom_call.1} parent=11 // pred_check
        %p325 = pneg %p128
      $region26: #{tpu_custom_call.1} parent=11 // pred_check_branch
        %327 = sbr.rel (%p325) target = $region28
      $region27: #{tpu_custom_call.1} parent=11 // pred_region
        _
      $region28: #{tpu_custom_call.1} parent=11 // pred_fallthru
        _
      // Predicated region
      $region29: #{tpu_custom_call.1} parent=11 // pred_check
        %p328 = pneg %p149
      $region30: #{tpu_custom_call.1} parent=11 // pred_check_branch
        %330 = sbr.rel (%p328) target = $region32
      $region31: #{tpu_custom_call.1} parent=11 // pred_region
        _
      $region32: #{tpu_custom_call.1} parent=11 // pred_fallthru
        _
      // Predicated region
      $region33: #{tpu_custom_call.1} parent=11 // pred_check
        %p331 = pneg %p170
      $region34: #{tpu_custom_call.1} parent=11 // pred_check_branch
        %333 = sbr.rel (%p331) target = $region36
      $region35: #{tpu_custom_call.1} parent=11 // pred_region
        _
      $region36: #{tpu_custom_call.1} parent=11 // pred_fallthru
        _
      // Predicated region
      $region37: #{tpu_custom_call.1} parent=11 // pred_check
        %p334 = pneg %p191
      $region38: #{tpu_custom_call.1} parent=11 // pred_check_branch
        %336 = sbr.rel (%p334) target = $region40
      $region39: #{tpu_custom_call.1} parent=11 // pred_region
        _
      $region40: #{tpu_custom_call.1} parent=11 // pred_fallthru
        _
      // Predicated region
      $region41: #{tpu_custom_call.1} parent=11 // pred_check
        %p337 = pneg %p212
      $region42: #{tpu_custom_call.1} parent=11 // pred_check_branch
        %339 = sbr.rel (%p337) target = $region44
      $region43: #{tpu_custom_call.1} parent=11 // pred_region
        _
      $region44: #{tpu_custom_call.1} parent=11 // pred_fallthru
        _
      // Predicated region
      $region45: #{tpu_custom_call.1} parent=11 // pred_check
        %p340 = pneg %p233
      $region46: #{tpu_custom_call.1} parent=11 // pred_check_branch
        %342 = sbr.rel (%p340) target = $region48
      $region47: #{tpu_custom_call.1} parent=11 // pred_region
        _
      $region48: #{tpu_custom_call.1} parent=11 // pred_fallthru
        _
      // Predicated region
      $region49: #{tpu_custom_call.1} parent=11 // pred_check
        %p343 = pneg %p254
      $region50: #{tpu_custom_call.1} parent=11 // pred_check_branch
        %345 = sbr.rel (%p343) target = $region52
      $region51: #{tpu_custom_call.1} parent=11 // pred_region
        _
      $region52: #{tpu_custom_call.1} parent=11 // pred_fallthru
        _
      // Predicated region
      $region53: #{tpu_custom_call.1} parent=11 // pred_check
        %p346 = pneg %p275
      $region54: #{tpu_custom_call.1} parent=11 // pred_check_branch
        %348 = sbr.rel (%p346) target = $region56
      $region55: #{tpu_custom_call.1} parent=11 // pred_region
        _
      $region56: #{tpu_custom_call.1} parent=11 // pred_fallthru
        _
    $region12: #{tpu_custom_call.1} parent=5 // pred_fallthru
      _
    %p349 = scmp.lt.s32.totalorder %s18, 2
    // Predicated region
    $region57: #{tpu_custom_call.1} parent=5 // pred_check
      %p350 = pneg %p349
    $region58: #{tpu_custom_call.1} parent=5 // pred_check_branch
      %352 = sbr.rel (%p350) target = $region60
    $region59: #{tpu_custom_call.1} parent=5 // pred_region
      // Predicated region
      $region61: #{tpu_custom_call.1} parent=59 // pred_check
        %p353 = pneg %p38
      $region62: #{tpu_custom_call.1} parent=59 // pred_check_branch
        %355 = sbr.rel (%p353) target = $region64
      $region63: #{tpu_custom_call.1} parent=59 // pred_region
        %s356 = smul.u32 8, %s18
        %p357 = scmp.lt.s32.totalorder %s356, 15
        %s358 = scalar_select %p357, %s356, 15
        %s359 = smul.addr %s358, 8
        %s360 = scalar_lea.vmem %s0, %s359
        %s361 = smul.u32 8, %s18
      $region64: #{tpu_custom_call.1} parent=59 // pred_fallthru
        _
    $region60: #{tpu_custom_call.1} parent=5 // pred_fallthru
      _
    %p362 = scmp.le.s32.totalorder 1, %s18
    %p363 = scmp.lt.s32.totalorder %s18, 3
    %p364 = pnand %p362, %p363
    %p365 = pneg %p364
    // Predicated region
    $region65: #{tpu_custom_call.1} parent=5 // pred_check
      _
    $region66: #{tpu_custom_call.1} parent=5 // pred_check_branch
      %367 = sbr.rel (%p364) target = $region68
    $region67: #{tpu_custom_call.1} parent=5 // pred_region
      %s368 = ssub.s32 %s18, 1
      %s369 = smul.u32 8, %s23
      %p370 = scmp.lt.s32.totalorder %s369, 15
      %s371 = scalar_select %p370, %s369, 15
      %s372 = smul.addr %s371, 8
      %s373 = scalar_lea.vmem %s0, %s372
      %p374 = pneg %p44
      %p375 = pneg %p41
      %p376 = pneg %p65
      %p377 = pneg %p62
      %p378 = pneg %p86
      %p379 = pneg %p83
      %p380 = pneg %p107
      %p381 = pneg %p104
      %p382 = pneg %p128
      %p383 = pneg %p125
      %p384 = pneg %p149
      %p385 = pneg %p146
      %p386 = pneg %p170
      %p387 = pneg %p167
      %p388 = pneg %p191
      %p389 = pneg %p188
      %p390 = pneg %p212
      %p391 = pneg %p209
      %p392 = pneg %p233
      %p393 = pneg %p230
      %p394 = pneg %p254
      %p395 = pneg %p251
      %p396 = pneg %p275
      %p397 = pneg %p272
      %p398 = pneg %p301
      %p399 = pneg %p298
      %s400 = smul.u32 8, %s23
      %p401 = scmp.lt.s32.totalorder %s400, 15
      %s402 = scalar_select %p401, %s400, 15
      %s403 = smul.addr %s402, 8
      %s404 = scalar_lea.vmem %s12, %s403
      %s405 = smul.u32 8, %s23
      %p406 = scmp.lt.s32.totalorder %s405, 15
      %s407 = scalar_select %p406, %s405, 15
      %s408 = smul.addr %s407, 8
      %s409 = scalar_lea.vmem %s0, %s408
      %s410 = smul.u32 8, %s23
      %s411 = smul.u32 8, %s23
      %p412 = scmp.lt.s32.totalorder %s411, 15
      %s413 = scalar_select %p412, %s411, 15
      %s414 = smul.addr %s413, 8
      %s415 = scalar_lea.vmem %s12, %s414
      %s416 = smul.u32 8, %s23
      %v418 = vld [vmem:[%s409] sm:$0xff]
      %v419 = vld [vmem:[%s409 + $0x8] sm:$0xff]
      %v420 = vld [vmem:[%s409 + $0x10] sm:$0xff]
      %v421 = vld [vmem:[%s409 + $0x18] sm:$0xff]
      %v422 = vld [vmem:[%s409 + $0x20] sm:$0xff]
      %v423 = vld [vmem:[%s409 + $0x28] sm:$0xff]
      %v424 = vld [vmem:[%s409 + $0x30] sm:$0xff]
      %v425 = vld [vmem:[%s409 + $0x38] sm:$0xff]
      %vm426 = vcmask 261120
      %v427 = vsel %vm426, %v418, 0.0
      %428 = vadd.xlane.f32.xlu0 %v427
      %v429 = vpop.xlane.xlu0 %428
      %v430 = vsel %vm426, %v419, 0.0
      %431 = vadd.xlane.f32.xlu0 %v430
      %v432 = vpop.xlane.xlu0 %431
      %v433 = vsel %vm426, %v420, 0.0
      %434 = vadd.xlane.f32.xlu0 %v433
      %v435 = vpop.xlane.xlu0 %434
      %v436 = vsel %vm426, %v421, 0.0
      %437 = vadd.xlane.f32.xlu0 %v436
      %v438 = vpop.xlane.xlu0 %437
      %v439 = vsel %vm426, %v422, 0.0
      %440 = vadd.xlane.f32.xlu0 %v439
      %v441 = vpop.xlane.xlu0 %440
      %v442 = vsel %vm426, %v423, 0.0
      %443 = vadd.xlane.f32.xlu0 %v442
      %v444 = vpop.xlane.xlu0 %443
      %v445 = vsel %vm426, %v424, 0.0
      %446 = vadd.xlane.f32.xlu0 %v445
      %v447 = vpop.xlane.xlu0 %446
      %v448 = vsel %vm426, %v425, 0.0
      %449 = vadd.xlane.f32.xlu0 %v448
      %v450 = vpop.xlane.xlu0 %449
      %v451 = vrcp.pop 32.0
      %v452 = vmul.f32 %v429, %v451
      %v453 = vmul.f32 %v432, %v451
      %v454 = vmul.f32 %v435, %v451
      %v455 = vmul.f32 %v438, %v451
      %v456 = vmul.f32 %v441, %v451
      %v457 = vmul.f32 %v444, %v451
      %v458 = vmul.f32 %v447, %v451
      %v459 = vmul.f32 %v450, %v451
      %v460 = vsub.f32 %v418, %v452
      %v461 = vsub.f32 %v419, %v453
      %v462 = vsub.f32 %v420, %v454
      %v463 = vsub.f32 %v421, %v455
      %v464 = vsub.f32 %v422, %v456
      %v465 = vsub.f32 %v423, %v457
      %v466 = vsub.f32 %v424, %v458
      %v467 = vsub.f32 %v425, %v459
      %v468 = vmul.f32 %v460, %v460
      %v469 = vmul.f32 %v461, %v461
      %v470 = vmul.f32 %v462, %v462
      %v471 = vmul.f32 %v463, %v463
      %v472 = vmul.f32 %v464, %v464
      %v473 = vmul.f32 %v465, %v465
      %v474 = vmul.f32 %v466, %v466
      %v475 = vmul.f32 %v467, %v467
      %v476 = vsel %vm426, %v468, 0.0
      %477 = vadd.xlane.f32.xlu0 %v476
      %v478 = vpop.xlane.xlu0 %477
      %v479 = vsel %vm426, %v469, 0.0
      %480 = vadd.xlane.f32.xlu0 %v479
      %v481 = vpop.xlane.xlu0 %480
      %v482 = vsel %vm426, %v470, 0.0
      %483 = vadd.xlane.f32.xlu0 %v482
      %v484 = vpop.xlane.xlu0 %483
      %v485 = vsel %vm426, %v471, 0.0
      %486 = vadd.xlane.f32.xlu0 %v485
      %v487 = vpop.xlane.xlu0 %486
      %v488 = vsel %vm426, %v472, 0.0
      %489 = vadd.xlane.f32.xlu0 %v488
      %v490 = vpop.xlane.xlu0 %489
      %v491 = vsel %vm426, %v473, 0.0
      %492 = vadd.xlane.f32.xlu0 %v491
      %v493 = vpop.xlane.xlu0 %492
      %v494 = vsel %vm426, %v474, 0.0
      %495 = vadd.xlane.f32.xlu0 %v494
      %v496 = vpop.xlane.xlu0 %495
      %v497 = vsel %vm426, %v475, 0.0
      %498 = vadd.xlane.f32.xlu0 %v497
      %v499 = vpop.xlane.xlu0 %498
      %v500 = vmul.f32 %v478, %v451
      %v501 = vmul.f32 %v481, %v451
      %v502 = vmul.f32 %v484, %v451
      %v503 = vmul.f32 %v487, %v451
      %v504 = vmul.f32 %v490, %v451
      %v505 = vmul.f32 %v493, %v451
      %v506 = vmul.f32 %v496, %v451
      %v507 = vmul.f32 %v499, %v451
      %v508 = vadd.f32 %v500, 1e-05
      %v509 = vadd.f32 %v501, 1e-05
      %v510 = vadd.f32 %v502, 1e-05
      %v511 = vadd.f32 %v503, 1e-05
      %v512 = vadd.f32 %v504, 1e-05
      %v513 = vadd.f32 %v505, 1e-05
      %v514 = vadd.f32 %v506, 1e-05
      %v515 = vadd.f32 %v507, 1e-05
      %v516 = vrsqrt.pop %v508
      %v517 = vrsqrt.pop %v509
      %v518 = vrsqrt.pop %v510
      %v519 = vrsqrt.pop %v511
      %v520 = vrsqrt.pop %v512
      %v521 = vrsqrt.pop %v513
      %v522 = vrsqrt.pop %v514
      %v523 = vrsqrt.pop %v515
      %v524 = vmul.f32 %v460, %v516
      %v525 = vmul.f32 %v461, %v517
      %v526 = vmul.f32 %v462, %v518
      %v527 = vmul.f32 %v463, %v519
      %v528 = vmul.f32 %v464, %v520
      %v529 = vmul.f32 %v465, %v521
      %v530 = vmul.f32 %v466, %v522
      %v531 = vmul.f32 %v467, %v523
      %v532 = vld [vmem:[%s2] sm:$0x1]
      %v534 = vlaneseq
      %v535 = vshrl.u32 %v534, 7
      %v536 = vsub.s32 0, %v535
      %v537 = vrot.slane %v532, %v536
      %v539 = vmul.f32 %v524, %v537
      %v540 = vmul.f32 %v525, %v537
      %v541 = vmul.f32 %v526, %v537
      %v542 = vmul.f32 %v527, %v537
      %v543 = vmul.f32 %v528, %v537
      %v544 = vmul.f32 %v529, %v537
      %v545 = vmul.f32 %v530, %v537
      %v546 = vmul.f32 %v531, %v537
      %v547 = vld [vmem:[%s3] sm:$0x1]
      %v549 = vlaneseq
      %v550 = vshrl.u32 %v549, 7
      %v551 = vsub.s32 0, %v550
      %v552 = vrot.slane %v547, %v551
      %v554 = vadd.f32 %v539, %v552
      %v555 = vadd.f32 %v540, %v552
      %v556 = vadd.f32 %v541, %v552
      %v557 = vadd.f32 %v542, %v552
      %v558 = vadd.f32 %v543, %v552
      %v559 = vadd.f32 %v544, %v552
      %v560 = vadd.f32 %v545, %v552
      %v561 = vadd.f32 %v546, %v552
      %v562 = vpack.c.bf16 %v555, %v554
      %v563 = vpack.c.bf16 %v557, %v556
      %v564 = vpack.c.bf16 %v559, %v558
      %v565 = vpack.c.bf16 %v561, %v560
      %v566 = vld [vmem:[%s4] sm:$0xf]
      %v567 = vld [vmem:[%s4 + $0x4] sm:$0xf]
      %v568 = vld [vmem:[%s4 + $0x8] sm:$0xf]
      %v569 = vld [vmem:[%s4 + $0xc] sm:$0xf]
      %v570 = vld [vmem:[%s5] sm:$0x1]
      %v572 = vlaneseq
      %v573 = vshrl.u32 %v572, 7
      %v574 = vsub.s32 0, %v573
      %v575 = vrot.slane %v570, %v574
      %v581 = vunpack.c.l.b16 %v566
      %v582 = vunpack.c.l.b16 %v567
      %v583 = vunpack.c.l.b16 %v568
      %v584 = vunpack.c.l.b16 %v569
      %v585 = vpack.c.b16 %v582, %v581
      %v586 = vpack.c.b16 %v584, %v583
      %v590 = vsel %vm426, %v562, 0
      %v593 = vsel %vm426, %v563, 0
      %v596 = vsel %vm426, %v564, 0
      %v599 = vsel %vm426, %v565, 0
      %601 = vmatprep.subr.bf16.mxu0 0
      %602 = vmatpush1.bf16.msra.mxu0 %v585
      %603 = vmatprep.subr.bf16.mxu0 0
      %604 = vmatpush1.bf16.msra.mxu0 %v586
      %605 = vmatprep.subr.bf16.mxu0 0
      %606 = vmatpush1.bf16.msra.mxu0 0
      %607 = vmatprep.subr.bf16.mxu0 0
      %608 = vmatpush1.bf16.msra.mxu0 0
      %609 = vmatprep.subr.bf16.mxu0 0
      %610 = vmatpush1.bf16.msra.mxu0 0
      %611 = vmatprep.subr.bf16.mxu0 0
      %612 = vmatpush1.bf16.msra.mxu0 0
      %613 = vmatprep.subr.bf16.mxu0 0
      %614 = vmatpush1.bf16.msra.mxu0 0
      %615 = vmatprep.subr.bf16.mxu0 0
      %616 = vmatpush1.bf16.msra.mxu0 0
      %617 = vmatprep.subr.bf16.mxu0 0
      %618 = vmatpush1.bf16.msra.mxu0 0
      %619 = vmatprep.subr.bf16.mxu0 0
      %620 = vmatpush1.bf16.msra.mxu0 0
      %621 = vmatprep.subr.bf16.mxu0 0
      %622 = vmatpush1.bf16.msra.mxu0 0
      %623 = vmatprep.subr.bf16.mxu0 0
      %624 = vmatpush1.bf16.msra.mxu0 0
      %625 = vmatprep.subr.bf16.mxu0 0
      %626 = vmatpush1.bf16.msra.mxu0 0
      %627 = vmatprep.subr.bf16.mxu0 0
      %628 = vmatpush1.bf16.msra.mxu0 0
      %629 = vmatprep.subr.bf16.mxu0 0
      %630 = vmatpush1.bf16.msra.mxu0 0
      %631 = vmatprep.subr.bf16.mxu0 0
      %632 = vmatpush1.bf16.msra.mxu0 0
      %633 = vmatprep.mubr.bf16.mxu0 0
      %634 = vmatmul.mubr.bf16.gmra.mrb[0].mxu0 %v590
      %v635 = vpop.f32.mrb[0].mxu0
      %v636 = vadd.f32 %v575, %v635
      %v637 = vpop.f32.mrb[0].mxu0
      %v638 = vpop.f32.mrb[0].mxu0
      %v639 = vadd.f32 %v575, %v638
      %v640 = vpop.f32.mrb[0].mxu0
      %641 = vmatprep.mubr.bf16.mxu0 0
      %642 = vmatmul.mubr.bf16.gmra.mrb[0].mxu0 %v593
      %v643 = vpop.f32.mrb[0].mxu0
      %v644 = vadd.f32 %v575, %v643
      %v645 = vpop.f32.mrb[0].mxu0
      %v646 = vpop.f32.mrb[0].mxu0
      %v647 = vadd.f32 %v575, %v646
      %v648 = vpop.f32.mrb[0].mxu0
      %649 = vmatprep.mubr.bf16.mxu0 0
      %650 = vmatmul.mubr.bf16.gmra.mrb[0].mxu0 %v596
      %v651 = vpop.f32.mrb[0].mxu0
      %v652 = vadd.f32 %v575, %v651
      %v653 = vpop.f32.mrb[0].mxu0
      %v654 = vpop.f32.mrb[0].mxu0
      %v655 = vadd.f32 %v575, %v654
      %v656 = vpop.f32.mrb[0].mxu0
      %657 = vmatprep.mubr.bf16.mxu0 0
      %658 = vmatmul.mubr.bf16.gmra.mrb[0].mxu0 %v599
      %v659 = vpop.f32.mrb[0].mxu0
      %v660 = vadd.f32 %v575, %v659
      %v661 = vpop.f32.mrb[0].mxu0
      %v662 = vpop.f32.mrb[0].mxu0
      %v663 = vadd.f32 %v575, %v662
      %v664 = vpop.f32.mrb[0].mxu0
      %665 = vdwg.mxu0
      %v666 = vld [vmem:[%s6] sm:$0xf]
      %v667 = vld [vmem:[%s6 + $0x4] sm:$0xf]
      %v668 = vld [vmem:[%s6 + $0x8] sm:$0xf]
      %v669 = vld [vmem:[%s6 + $0xc] sm:$0xf]
      %v670 = vld [vmem:[%s7] sm:$0x1]
      %v672 = vlaneseq
      %v673 = vshrl.u32 %v672, 7
      %v674 = vsub.s32 0, %v673
      %v675 = vrot.slane %v670, %v674
      %v681 = vunpack.c.l.b16 %v666
      %v682 = vunpack.c.l.b16 %v667
      %v683 = vunpack.c.l.b16 %v668
      %v684 = vunpack.c.l.b16 %v669
      %v685 = vpack.c.b16 %v682, %v681
      %v686 = vpack.c.b16 %v684, %v683
      %689 = vmatprep.subr.bf16.mxu0 0
      %690 = vmatpush1.bf16.msra.mxu0 %v685
      %691 = vmatprep.subr.bf16.mxu0 0
      %692 = vmatpush1.bf16.msra.mxu0 %v686
      %693 = vmatprep.subr.bf16.mxu0 0
      %694 = vmatpush1.bf16.msra.mxu0 0
      %695 = vmatprep.subr.bf16.mxu0 0
      %696 = vmatpush1.bf16.msra.mxu0 0
      %697 = vmatprep.subr.bf16.mxu0 0
      %698 = vmatpush1.bf16.msra.mxu0 0
      %699 = vmatprep.subr.bf16.mxu0 0
      %700 = vmatpush1.bf16.msra.mxu0 0
      %701 = vmatprep.subr.bf16.mxu0 0
      %702 = vmatpush1.bf16.msra.mxu0 0
      %703 = vmatprep.subr.bf16.mxu0 0
      %704 = vmatpush1.bf16.msra.mxu0 0
      %705 = vmatprep.subr.bf16.mxu0 0
      %706 = vmatpush1.bf16.msra.mxu0 0
      %707 = vmatprep.subr.bf16.mxu0 0
      %708 = vmatpush1.bf16.msra.mxu0 0
      %709 = vmatprep.subr.bf16.mxu0 0
      %710 = vmatpush1.bf16.msra.mxu0 0
      %711 = vmatprep.subr.bf16.mxu0 0
      %712 = vmatpush1.bf16.msra.mxu0 0
      %713 = vmatprep.subr.bf16.mxu0 0
      %714 = vmatpush1.bf16.msra.mxu0 0
      %715 = vmatprep.subr.bf16.mxu0 0
      %716 = vmatpush1.bf16.msra.mxu0 0
      %717 = vmatprep.subr.bf16.mxu0 0
      %718 = vmatpush1.bf16.msra.mxu0 0
      %719 = vmatprep.subr.bf16.mxu0 0
      %720 = vmatpush1.bf16.msra.mxu0 0
      %721 = vmatprep.mubr.bf16.mxu0 0
      %722 = vmatmul.mubr.bf16.gmra.mrb[0].mxu0 %v590
      %v723 = vpop.f32.mrb[0].mxu0
      %v724 = vadd.f32 %v675, %v723
      %v725 = vpop.f32.mrb[0].mxu0
      %v726 = vpop.f32.mrb[0].mxu0
      %v727 = vadd.f32 %v675, %v726
      %v728 = vpop.f32.mrb[0].mxu0
      %729 = vmatprep.mubr.bf16.mxu0 0
      %730 = vmatmul.mubr.bf16.gmra.mrb[0].mxu0 %v593
      %v731 = vpop.f32.mrb[0].mxu0
      %v732 = vadd.f32 %v675, %v731
      %v733 = vpop.f32.mrb[0].mxu0
      %v734 = vpop.f32.mrb[0].mxu0
      %v735 = vadd.f32 %v675, %v734
      %v736 = vpop.f32.mrb[0].mxu0
      %737 = vmatprep.mubr.bf16.mxu0 0
      %738 = vmatmul.mubr.bf16.gmra.mrb[0].mxu0 %v596
      %v739 = vpop.f32.mrb[0].mxu0
      %v740 = vadd.f32 %v675, %v739
      %v741 = vpop.f32.mrb[0].mxu0
      %v742 = vpop.f32.mrb[0].mxu0
      %v743 = vadd.f32 %v675, %v742
      %v744 = vpop.f32.mrb[0].mxu0
      %745 = vmatprep.mubr.bf16.mxu0 0
      %746 = vmatmul.mubr.bf16.gmra.mrb[0].mxu0 %v599
      %v747 = vpop.f32.mrb[0].mxu0
      %v748 = vadd.f32 %v675, %v747
      %v749 = vpop.f32.mrb[0].mxu0
      %v750 = vpop.f32.mrb[0].mxu0
      %v751 = vadd.f32 %v675, %v750
      %v752 = vpop.f32.mrb[0].mxu0
      %753 = vdwg.mxu0
      %v754 = vld [vmem:[%s8] sm:$0xf]
      %v755 = vld [vmem:[%s8 + $0x4] sm:$0xf]
      %v756 = vld [vmem:[%s8 + $0x8] sm:$0xf]
      %v757 = vld [vmem:[%s8 + $0xc] sm:$0xf]
      %v758 = vld [vmem:[%s9] sm:$0x1]
      %v760 = vlaneseq
      %v761 = vshrl.u32 %v760, 7
      %v762 = vsub.s32 0, %v761
      %v763 = vrot.slane %v758, %v762
      %v769 = vunpack.c.l.b16 %v754
      %v770 = vunpack.c.l.b16 %v755
      %v771 = vunpack.c.l.b16 %v756
      %v772 = vunpack.c.l.b16 %v757
      %v773 = vpack.c.b16 %v770, %v769
      %v774 = vpack.c.b16 %v772, %v771
      %777 = vmatprep.subr.bf16.mxu0 0
      %778 = vmatpush1.bf16.msra.mxu0 %v773
      %779 = vmatprep.subr.bf16.mxu0 0
      %780 = vmatpush1.bf16.msra.mxu0 %v774
      %781 = vmatprep.subr.bf16.mxu0 0
      %782 = vmatpush1.bf16.msra.mxu0 0
      %783 = vmatprep.subr.bf16.mxu0 0
      %784 = vmatpush1.bf16.msra.mxu0 0
      %785 = vmatprep.subr.bf16.mxu0 0
      %786 = vmatpush1.bf16.msra.mxu0 0
      %787 = vmatprep.subr.bf16.mxu0 0
      %788 = vmatpush1.bf16.msra.mxu0 0
      %789 = vmatprep.subr.bf16.mxu0 0
      %790 = vmatpush1.bf16.msra.mxu0 0
      %791 = vmatprep.subr.bf16.mxu0 0
      %792 = vmatpush1.bf16.msra.mxu0 0
      %793 = vmatprep.subr.bf16.mxu0 0
      %794 = vmatpush1.bf16.msra.mxu0 0
      %795 = vmatprep.subr.bf16.mxu0 0
      %796 = vmatpush1.bf16.msra.mxu0 0
      %797 = vmatprep.subr.bf16.mxu0 0
      %798 = vmatpush1.bf16.msra.mxu0 0
      %799 = vmatprep.subr.bf16.mxu0 0
      %800 = vmatpush1.bf16.msra.mxu0 0
      %801 = vmatprep.subr.bf16.mxu0 0
      %802 = vmatpush1.bf16.msra.mxu0 0
      %803 = vmatprep.subr.bf16.mxu0 0
      %804 = vmatpush1.bf16.msra.mxu0 0
      %805 = vmatprep.subr.bf16.mxu0 0
      %806 = vmatpush1.bf16.msra.mxu0 0
      %807 = vmatprep.subr.bf16.mxu0 0
      %808 = vmatpush1.bf16.msra.mxu0 0
      %809 = vmatprep.mubr.bf16.mxu0 0
      %810 = vmatmul.mubr.bf16.gmra.mrb[0].mxu0 %v590
      %v811 = vpop.f32.mrb[0].mxu0
      %v812 = vadd.f32 %v763, %v811
      %v813 = vpop.f32.mrb[0].mxu0
      %v814 = vpop.f32.mrb[0].mxu0
      %v815 = vadd.f32 %v763, %v814
      %v816 = vpop.f32.mrb[0].mxu0
      %817 = vmatprep.mubr.bf16.mxu0 0
      %818 = vmatmul.mubr.bf16.gmra.mrb[0].mxu0 %v593
      %v819 = vpop.f32.mrb[0].mxu0
      %v820 = vadd.f32 %v763, %v819
      %v821 = vpop.f32.mrb[0].mxu0
      %v822 = vpop.f32.mrb[0].mxu0
      %v823 = vadd.f32 %v763, %v822
      %v824 = vpop.f32.mrb[0].mxu0
      %825 = vmatprep.mubr.bf16.mxu0 0
      %826 = vmatmul.mubr.bf16.gmra.mrb[0].mxu0 %v596
      %v827 = vpop.f32.mrb[0].mxu0
      %v828 = vadd.f32 %v763, %v827
      %v829 = vpop.f32.mrb[0].mxu0
      %v830 = vpop.f32.mrb[0].mxu0
      %v831 = vadd.f32 %v763, %v830
      %v832 = vpop.f32.mrb[0].mxu0
      %833 = vmatprep.mubr.bf16.mxu0 0
      %834 = vmatmul.mubr.bf16.gmra.mrb[0].mxu0 %v599
      %v835 = vpop.f32.mrb[0].mxu0
      %v836 = vadd.f32 %v763, %v835
      %v837 = vpop.f32.mrb[0].mxu0
      %v838 = vpop.f32.mrb[0].mxu0
      %v839 = vadd.f32 %v763, %v838
      %v840 = vpop.f32.mrb[0].mxu0
      %841 = vdwg.mxu0
      %850 = vrot.lane.b32.xlu0 %v636, 120
      %v851 = vpop.permute.xlu0 %850
      %852 = vrot.lane.b32.xlu0 %v639, 120
      %v853 = vpop.permute.xlu0 %852
      %854 = vrot.lane.b32.xlu0 %v644, 120
      %v855 = vpop.permute.xlu0 %854
      %856 = vrot.lane.b32.xlu0 %v647, 120
      %v857 = vpop.permute.xlu0 %856
      %858 = vrot.lane.b32.xlu0 %v652, 120
      %v859 = vpop.permute.xlu0 %858
      %860 = vrot.lane.b32.xlu0 %v655, 120
      %v861 = vpop.permute.xlu0 %860
      %862 = vrot.lane.b32.xlu0 %v660, 120
      %v863 = vpop.permute.xlu0 %862
      %864 = vrot.lane.b32.xlu0 %v663, 120
      %v865 = vpop.permute.xlu0 %864
      %874 = vrot.lane.b32.xlu0 %v636, 112
      %v875 = vpop.permute.xlu0 %874
      %876 = vrot.lane.b32.xlu0 %v639, 112
      %v877 = vpop.permute.xlu0 %876
      %878 = vrot.lane.b32.xlu0 %v644, 112
      %v879 = vpop.permute.xlu0 %878
      %880 = vrot.lane.b32.xlu0 %v647, 112
      %v881 = vpop.permute.xlu0 %880
      %882 = vrot.lane.b32.xlu0 %v652, 112
      %v883 = vpop.permute.xlu0 %882
      %884 = vrot.lane.b32.xlu0 %v655, 112
      %v885 = vpop.permute.xlu0 %884
      %886 = vrot.lane.b32.xlu0 %v660, 112
      %v887 = vpop.permute.xlu0 %886
      %888 = vrot.lane.b32.xlu0 %v663, 112
      %v889 = vpop.permute.xlu0 %888
      %898 = vrot.lane.b32.xlu0 %v636, 104
      %v899 = vpop.permute.xlu0 %898
      %900 = vrot.lane.b32.xlu0 %v639, 104
      %v901 = vpop.permute.xlu0 %900
      %902 = vrot.lane.b32.xlu0 %v644, 104
      %v903 = vpop.permute.xlu0 %902
      %904 = vrot.lane.b32.xlu0 %v647, 104
      %v905 = vpop.permute.xlu0 %904
      %906 = vrot.lane.b32.xlu0 %v652, 104
      %v907 = vpop.permute.xlu0 %906
      %908 = vrot.lane.b32.xlu0 %v655, 104
      %v909 = vpop.permute.xlu0 %908
      %910 = vrot.lane.b32.xlu0 %v660, 104
      %v911 = vpop.permute.xlu0 %910
      %912 = vrot.lane.b32.xlu0 %v663, 104
      %v913 = vpop.permute.xlu0 %912
      %v922 = vpack.c.bf16 %v636, %v636
      %v923 = vpack.c.bf16 %v639, %v639
      %v924 = vpack.c.bf16 %v644, %v644
      %v925 = vpack.c.bf16 %v647, %v647
      %v926 = vpack.c.bf16 %v652, %v652
      %v927 = vpack.c.bf16 %v655, %v655
      %v928 = vpack.c.bf16 %v660, %v660
      %v929 = vpack.c.bf16 %v663, %v663
      %v930 = vpack.c.bf16 %v851, %v851
      %v931 = vpack.c.bf16 %v853, %v853
      %v932 = vpack.c.bf16 %v855, %v855
      %v933 = vpack.c.bf16 %v857, %v857
      %v934 = vpack.c.bf16 %v859, %v859
      %v935 = vpack.c.bf16 %v861, %v861
      %v936 = vpack.c.bf16 %v863, %v863
      %v937 = vpack.c.bf16 %v865, %v865
      %v938 = vpack.c.bf16 %v875, %v875
      %v939 = vpack.c.bf16 %v877, %v877
      %v940 = vpack.c.bf16 %v879, %v879
      %v941 = vpack.c.bf16 %v881, %v881
      %v942 = vpack.c.bf16 %v883, %v883
      %v943 = vpack.c.bf16 %v885, %v885
      %v944 = vpack.c.bf16 %v887, %v887
      %v945 = vpack.c.bf16 %v889, %v889
      %v946 = vpack.c.bf16 %v899, %v899
      %v947 = vpack.c.bf16 %v901, %v901
      %v948 = vpack.c.bf16 %v903, %v903
      %v949 = vpack.c.bf16 %v905, %v905
      %v950 = vpack.c.bf16 %v907, %v907
      %v951 = vpack.c.bf16 %v909, %v909
      %v952 = vpack.c.bf16 %v911, %v911
      %v953 = vpack.c.bf16 %v913, %v913
      %962 = vrot.lane.b32.xlu0 %v724, 120
      %v963 = vpop.permute.xlu0 %962
      %964 = vrot.lane.b32.xlu0 %v727, 120
      %v965 = vpop.permute.xlu0 %964
      %966 = vrot.lane.b32.xlu0 %v732, 120
      %v967 = vpop.permute.xlu0 %966
      %968 = vrot.lane.b32.xlu0 %v735, 120
      %v969 = vpop.permute.xlu0 %968
      %970 = vrot.lane.b32.xlu0 %v740, 120
      %v971 = vpop.permute.xlu0 %970
      %972 = vrot.lane.b32.xlu0 %v743, 120
      %v973 = vpop.permute.xlu0 %972
      %974 = vrot.lane.b32.xlu0 %v748, 120
      %v975 = vpop.permute.xlu0 %974
      %976 = vrot.lane.b32.xlu0 %v751, 120
      %v977 = vpop.permute.xlu0 %976
      %986 = vrot.lane.b32.xlu0 %v724, 112
      %v987 = vpop.permute.xlu0 %986
      %988 = vrot.lane.b32.xlu0 %v727, 112
      %v989 = vpop.permute.xlu0 %988
      %990 = vrot.lane.b32.xlu0 %v732, 112
      %v991 = vpop.permute.xlu0 %990
      %992 = vrot.lane.b32.xlu0 %v735, 112
      %v993 = vpop.permute.xlu0 %992
      %994 = vrot.lane.b32.xlu0 %v740, 112
      %v995 = vpop.permute.xlu0 %994
      %996 = vrot.lane.b32.xlu0 %v743, 112
      %v997 = vpop.permute.xlu0 %996
      %998 = vrot.lane.b32.xlu0 %v748, 112
      %v999 = vpop.permute.xlu0 %998
      %1000 = vrot.lane.b32.xlu0 %v751, 112
      %v1001 = vpop.permute.xlu0 %1000
      %1010 = vrot.lane.b32.xlu0 %v724, 104
      %v1011 = vpop.permute.xlu0 %1010
      %1012 = vrot.lane.b32.xlu0 %v727, 104
      %v1013 = vpop.permute.xlu0 %1012
      %1014 = vrot.lane.b32.xlu0 %v732, 104
      %v1015 = vpop.permute.xlu0 %1014
      %1016 = vrot.lane.b32.xlu0 %v735, 104
      %v1017 = vpop.permute.xlu0 %1016
      %1018 = vrot.lane.b32.xlu0 %v740, 104
      %v1019 = vpop.permute.xlu0 %1018
      %1020 = vrot.lane.b32.xlu0 %v743, 104
      %v1021 = vpop.permute.xlu0 %1020
      %1022 = vrot.lane.b32.xlu0 %v748, 104
      %v1023 = vpop.permute.xlu0 %1022
      %1024 = vrot.lane.b32.xlu0 %v751, 104
      %v1025 = vpop.permute.xlu0 %1024
      %v1034 = vpack.c.bf16 %v724, %v724
      %v1035 = vpack.c.bf16 %v727, %v727
      %v1036 = vpack.c.bf16 %v732, %v732
      %v1037 = vpack.c.bf16 %v735, %v735
      %v1038 = vpack.c.bf16 %v740, %v740
      %v1039 = vpack.c.bf16 %v743, %v743
      %v1040 = vpack.c.bf16 %v748, %v748
      %v1041 = vpack.c.bf16 %v751, %v751
      %v1042 = vpack.c.bf16 %v963, %v963
      %v1043 = vpack.c.bf16 %v965, %v965
      %v1044 = vpack.c.bf16 %v967, %v967
      %v1045 = vpack.c.bf16 %v969, %v969
      %v1046 = vpack.c.bf16 %v971, %v971
      %v1047 = vpack.c.bf16 %v973, %v973
      %v1048 = vpack.c.bf16 %v975, %v975
      %v1049 = vpack.c.bf16 %v977, %v977
      %v1050 = vpack.c.bf16 %v987, %v987
      %v1051 = vpack.c.bf16 %v989, %v989
      %v1052 = vpack.c.bf16 %v991, %v991
      %v1053 = vpack.c.bf16 %v993, %v993
      %v1054 = vpack.c.bf16 %v995, %v995
      %v1055 = vpack.c.bf16 %v997, %v997
      %v1056 = vpack.c.bf16 %v999, %v999
      %v1057 = vpack.c.bf16 %v1001, %v1001
      %v1058 = vpack.c.bf16 %v1011, %v1011
      %v1059 = vpack.c.bf16 %v1013, %v1013
      %v1060 = vpack.c.bf16 %v1015, %v1015
      %v1061 = vpack.c.bf16 %v1017, %v1017
      %v1062 = vpack.c.bf16 %v1019, %v1019
      %v1063 = vpack.c.bf16 %v1021, %v1021
      %v1064 = vpack.c.bf16 %v1023, %v1023
      %v1065 = vpack.c.bf16 %v1025, %v1025
      %1074 = vrot.lane.b32.xlu0 %v812, 120
      %v1075 = vpop.permute.xlu0 %1074
      %1076 = vrot.lane.b32.xlu0 %v815, 120
      %v1077 = vpop.permute.xlu0 %1076
      %1078 = vrot.lane.b32.xlu0 %v820, 120
      %v1079 = vpop.permute.xlu0 %1078
      %1080 = vrot.lane.b32.xlu0 %v823, 120
      %v1081 = vpop.permute.xlu0 %1080
      %1082 = vrot.lane.b32.xlu0 %v828, 120
      %v1083 = vpop.permute.xlu0 %1082
      %1084 = vrot.lane.b32.xlu0 %v831, 120
      %v1085 = vpop.permute.xlu0 %1084
      %1086 = vrot.lane.b32.xlu0 %v836, 120
      %v1087 = vpop.permute.xlu0 %1086
      %1088 = vrot.lane.b32.xlu0 %v839, 120
      %v1089 = vpop.permute.xlu0 %1088
      %1098 = vrot.lane.b32.xlu0 %v812, 112
      %v1099 = vpop.permute.xlu0 %1098
      %1100 = vrot.lane.b32.xlu0 %v815, 112
      %v1101 = vpop.permute.xlu0 %1100
      %1102 = vrot.lane.b32.xlu0 %v820, 112
      %v1103 = vpop.permute.xlu0 %1102
      %1104 = vrot.lane.b32.xlu0 %v823, 112
      %v1105 = vpop.permute.xlu0 %1104
      %1106 = vrot.lane.b32.xlu0 %v828, 112
      %v1107 = vpop.permute.xlu0 %1106
      %1108 = vrot.lane.b32.xlu0 %v831, 112
      %v1109 = vpop.permute.xlu0 %1108
      %1110 = vrot.lane.b32.xlu0 %v836, 112
      %v1111 = vpop.permute.xlu0 %1110
      %1112 = vrot.lane.b32.xlu0 %v839, 112
      %v1113 = vpop.permute.xlu0 %1112
      %1122 = vrot.lane.b32.xlu0 %v812, 104
      %v1123 = vpop.permute.xlu0 %1122
      %1124 = vrot.lane.b32.xlu0 %v815, 104
      %v1125 = vpop.permute.xlu0 %1124
      %1126 = vrot.lane.b32.xlu0 %v820, 104
      %v1127 = vpop.permute.xlu0 %1126
      %1128 = vrot.lane.b32.xlu0 %v823, 104
      %v1129 = vpop.permute.xlu0 %1128
      %1130 = vrot.lane.b32.xlu0 %v828, 104
      %v1131 = vpop.permute.xlu0 %1130
      %1132 = vrot.lane.b32.xlu0 %v831, 104
      %v1133 = vpop.permute.xlu0 %1132
      %1134 = vrot.lane.b32.xlu0 %v836, 104
      %v1135 = vpop.permute.xlu0 %1134
      %1136 = vrot.lane.b32.xlu0 %v839, 104
      %v1137 = vpop.permute.xlu0 %1136
      %v1146 = vpack.c.bf16 %v812, %v812
      %v1147 = vpack.c.bf16 %v815, %v815
      %v1148 = vpack.c.bf16 %v820, %v820
      %v1149 = vpack.c.bf16 %v823, %v823
      %v1150 = vpack.c.bf16 %v828, %v828
      %v1151 = vpack.c.bf16 %v831, %v831
      %v1152 = vpack.c.bf16 %v836, %v836
      %v1153 = vpack.c.bf16 %v839, %v839
      %v1154 = vpack.c.bf16 %v1075, %v1075
      %v1155 = vpack.c.bf16 %v1077, %v1077
      %v1156 = vpack.c.bf16 %v1079, %v1079
      %v1157 = vpack.c.bf16 %v1081, %v1081
      %v1158 = vpack.c.bf16 %v1083, %v1083
      %v1159 = vpack.c.bf16 %v1085, %v1085
      %v1160 = vpack.c.bf16 %v1087, %v1087
      %v1161 = vpack.c.bf16 %v1089, %v1089
      %v1162 = vpack.c.bf16 %v1099, %v1099
      %v1163 = vpack.c.bf16 %v1101, %v1101
      %v1164 = vpack.c.bf16 %v1103, %v1103
      %v1165 = vpack.c.bf16 %v1105, %v1105
      %v1166 = vpack.c.bf16 %v1107, %v1107
      %v1167 = vpack.c.bf16 %v1109, %v1109
      %v1168 = vpack.c.bf16 %v1111, %v1111
      %v1169 = vpack.c.bf16 %v1113, %v1113
      %v1170 = vpack.c.bf16 %v1123, %v1123
      %v1171 = vpack.c.bf16 %v1125, %v1125
      %v1172 = vpack.c.bf16 %v1127, %v1127
      %v1173 = vpack.c.bf16 %v1129, %v1129
      %v1174 = vpack.c.bf16 %v1131, %v1131
      %v1175 = vpack.c.bf16 %v1133, %v1133
      %v1176 = vpack.c.bf16 %v1135, %v1135
      %v1177 = vpack.c.bf16 %v1137, %v1137
      %vm1178 = vcmask 64512
      %v1180 = vsel %vm1178, %v922, 0
      %v1183 = vsel %vm1178, %v1034, 0
      %1185 = vmatprep.subr.bf16.mxu0 0
      %1186 = vmatpush1.bf16.xpose.msra.mxu0 %v1183
      %1187 = vmatprep.subr.bf16.mxu0 0
      %1188 = vmatpush1.bf16.xpose.msra.mxu0 0
      %1189 = vmatprep.subr.bf16.mxu0 0
      %1190 = vmatpush1.bf16.xpose.msra.mxu0 0
      %1191 = vmatprep.subr.bf16.mxu0 0
      %1192 = vmatpush1.bf16.xpose.msra.mxu0 0
      %1193 = vmatprep.subr.bf16.mxu0 0
      %1194 = vmatpush1.bf16.xpose.msra.mxu0 0
      %1195 = vmatprep.subr.bf16.mxu0 0
      %1196 = vmatpush1.bf16.xpose.msra.mxu0 0
      %1197 = vmatprep.subr.bf16.mxu0 0
      %1198 = vmatpush1.bf16.xpose.msra.mxu0 0
      %1199 = vmatprep.subr.bf16.mxu0 0
      %1200 = vmatpush1.bf16.xpose.msra.mxu0 0
      %1201 = vmatprep.subr.bf16.mxu0 0
      %1202 = vmatpush1.bf16.xpose.msra.mxu0 0
      %1203 = vmatprep.subr.bf16.mxu0 0
      %1204 = vmatpush1.bf16.xpose.msra.mxu0 0
      %1205 = vmatprep.subr.bf16.mxu0 0
      %1206 = vmatpush1.bf16.xpose.msra.mxu0 0
      %1207 = vmatprep.subr.bf16.mxu0 0
      %1208 = vmatpush1.bf16.xpose.msra.mxu0 0
      %1209 = vmatprep.subr.bf16.mxu0 0
      %1210 = vmatpush1.bf16.xpose.msra.mxu0 0
      %1211 = vmatprep.subr.bf16.mxu0 0
      %1212 = vmatpush1.bf16.xpose.msra.mxu0 0
      %1213 = vmatprep.subr.bf16.mxu0 0
      %1214 = vmatpush1.bf16.xpose.msra.mxu0 0
      %1215 = vmatprep.subr.bf16.mxu0 0
      %1216 = vmatpush1.bf16.xpose.msra.mxu0 0
      %1217 = vmatprep.mubr.bf16.mxu0 0
      %1218 = vmatmul.mubr.bf16.gmra.mrb[0].mxu0 %v1180
      %v1219 = vpop.f32.mrb[0].mxu0
      %v1220 = vadd.f32 0.0, %v1219
      %v1221 = vpop.f32.mrb[0].mxu0
      %v1222 = vpop.f32.mrb[0].mxu0
      %v1223 = vpop.f32.mrb[0].mxu0
      %1224 = vdwg.mxu0
      %v1226 = vsel %vm1178, %v923, 0
      %v1229 = vsel %vm1178, %v1035, 0
      %1231 = vmatprep.subr.bf16.mxu0 0
      %1232 = vmatpush1.bf16.xpose.msra.mxu0 %v1229
      %1233 = vmatprep.subr.bf16.mxu0 0
      %1234 = vmatpush1.bf16.xpose.msra.mxu0 0
      %1235 = vmatprep.subr.bf16.mxu0 0
      %1236 = vmatpush1.bf16.xpose.msra.mxu0 0
      %1237 = vmatprep.subr.bf16.mxu0 0
      %1238 = vmatpush1.bf16.xpose.msra.mxu0 0
      %1239 = vmatprep.subr.bf16.mxu0 0
      %1240 = vmatpush1.bf16.xpose.msra.mxu0 0
      %1241 = vmatprep.subr.bf16.mxu0 0
      %1242 = vmatpush1.bf16.xpose.msra.mxu0 0
      %1243 = vmatprep.subr.bf16.mxu0 0
      %1244 = vmatpush1.bf16.xpose.msra.mxu0 0
      %1245 = vmatprep.subr.bf16.mxu0 0
      %1246 = vmatpush1.bf16.xpose.msra.mxu0 0
      %1247 = vmatprep.subr.bf16.mxu0 0
      %1248 = vmatpush1.bf16.xpose.msra.mxu0 0
      %1249 = vmatprep.subr.bf16.mxu0 0
      %1250 = vmatpush1.bf16.xpose.msra.mxu0 0
      %1251 = vmatprep.subr.bf16.mxu0 0
      %1252 = vmatpush1.bf16.xpose.msra.mxu0 0
      %1253 = vmatprep.subr.bf16.mxu0 0
      %1254 = vmatpush1.bf16.xpose.msra.mxu0 0
      %1255 = vmatprep.subr.bf16.mxu0 0
      %1256 = vmatpush1.bf16.xpose.msra.mxu0 0
      %1257 = vmatprep.subr.bf16.mxu0 0
      %1258 = vmatpush1.bf16.xpose.msra.mxu0 0
      %1259 = vmatprep.subr.bf16.mxu0 0
      %1260 = vmatpush1.bf16.xpose.msra.mxu0 0
      %1261 = vmatprep.subr.bf16.mxu0 0
      %1262 = vmatpush1.bf16.xpose.msra.mxu0 0
      %1263 = vmatprep.mubr.bf16.mxu0 0
      %1264 = vmatmul.mubr.bf16.gmra.mrb[0].mxu0 %v1226
      %v1265 = vpop.f32.mrb[0].mxu0
      %v1266 = vadd.f32 0.0, %v1265
      %v1267 = vpop.f32.mrb[0].mxu0
      %v1268 = vpop.f32.mrb[0].mxu0
      %v1269 = vpop.f32.mrb[0].mxu0
      %1270 = vdwg.mxu0
      %v1272 = vsel %vm1178, %v924, 0
      %v1275 = vsel %vm1178, %v1036, 0
      %1277 = vmatprep.subr.bf16.mxu0 0
      %1278 = vmatpush1.bf16.xpose.msra.mxu0 %v1275
      %1279 = vmatprep.subr.bf16.mxu0 0
      %1280 = vmatpush1.bf16.xpose.msra.mxu0 0
      %1281 = vmatprep.subr.bf16.mxu0 0
      %1282 = vmatpush1.bf16.xpose.msra.mxu0 0
      %1283 = vmatprep.subr.bf16.mxu0 0
      %1284 = vmatpush1.bf16.xpose.msra.mxu0 0
      %1285 = vmatprep.subr.bf16.mxu0 0
      %1286 = vmatpush1.bf16.xpose.msra.mxu0 0
      %1287 = vmatprep.subr.bf16.mxu0 0
      %1288 = vmatpush1.bf16.xpose.msra.mxu0 0
      %1289 = vmatprep.subr.bf16.mxu0 0
      %1290 = vmatpush1.bf16.xpose.msra.mxu0 0
      %1291 = vmatprep.subr.bf16.mxu0 0
      %1292 = vmatpush1.bf16.xpose.msra.mxu0 0
      %1293 = vmatprep.subr.bf16.mxu0 0
      %1294 = vmatpush1.bf16.xpose.msra.mxu0 0
      %1295 = vmatprep.subr.bf16.mxu0 0
      %1296 = vmatpush1.bf16.xpose.msra.mxu0 0
      %1297 = vmatprep.subr.bf16.mxu0 0
      %1298 = vmatpush1.bf16.xpose.msra.mxu0 0
      %1299 = vmatprep.subr.bf16.mxu0 0
      %1300 = vmatpush1.bf16.xpose.msra.mxu0 0
      %1301 = vmatprep.subr.bf16.mxu0 0
      %1302 = vmatpush1.bf16.xpose.msra.mxu0 0
      %1303 = vmatprep.subr.bf16.mxu0 0
      %1304 = vmatpush1.bf16.xpose.msra.mxu0 0
      %1305 = vmatprep.subr.bf16.mxu0 0
      %1306 = vmatpush1.bf16.xpose.msra.mxu0 0
      %1307 = vmatprep.subr.bf16.mxu0 0
      %1308 = vmatpush1.bf16.xpose.msra.mxu0 0
      %1309 = vmatprep.mubr.bf16.mxu0 0
      %1310 = vmatmul.mubr.bf16.gmra.mrb[0].mxu0 %v1272
      %v1311 = vpop.f32.mrb[0].mxu0
      %v1312 = vadd.f32 0.0, %v1311
      %v1313 = vpop.f32.mrb[0].mxu0
      %v1314 = vpop.f32.mrb[0].mxu0
      %v1315 = vpop.f32.mrb[0].mxu0
      %1316 = vdwg.mxu0
      %v1318 = vsel %vm1178, %v925, 0
      %v1321 = vsel %vm1178, %v1037, 0
      %1323 = vmatprep.subr.bf16.mxu0 0
      %1324 = vmatpush1.bf16.xpose.msra.mxu0 %v1321
      %1325 = vmatprep.subr.bf16.mxu0 0
      %1326 = vmatpush1.bf16.xpose.msra.mxu0 0
      %1327 = vmatprep.subr.bf16.mxu0 0
      %1328 = vmatpush1.bf16.xpose.msra.mxu0 0
      %1329 = vmatprep.subr.bf16.mxu0 0
      %1330 = vmatpush1.bf16.xpose.msra.mxu0 0
      %1331 = vmatprep.subr.bf16.mxu0 0
      %1332 = vmatpush1.bf16.xpose.msra.mxu0 0
      %1333 = vmatprep.subr.bf16.mxu0 0
      %1334 = vmatpush1.bf16.xpose.msra.mxu0 0
      %1335 = vmatprep.subr.bf16.mxu0 0
      %1336 = vmatpush1.bf16.xpose.msra.mxu0 0
      %1337 = vmatprep.subr.bf16.mxu0 0
      %1338 = vmatpush1.bf16.xpose.msra.mxu0 0
      %1339 = vmatprep.subr.bf16.mxu0 0
      %1340 = vmatpush1.bf16.xpose.msra.mxu0 0
      %1341 = vmatprep.subr.bf16.mxu0 0
      %1342 = vmatpush1.bf16.xpose.msra.mxu0 0
      %1343 = vmatprep.subr.bf16.mxu0 0
      %1344 = vmatpush1.bf16.xpose.msra.mxu0 0
      %1345 = vmatprep.subr.bf16.mxu0 0
      %1346 = vmatpush1.bf16.xpose.msra.mxu0 0
      %1347 = vmatprep.subr.bf16.mxu0 0
      %1348 = vmatpush1.bf16.xpose.msra.mxu0 0
      %1349 = vmatprep.subr.bf16.mxu0 0
      %1350 = vmatpush1.bf16.xpose.msra.mxu0 0
      %1351 = vmatprep.subr.bf16.mxu0 0
      %1352 = vmatpush1.bf16.xpose.msra.mxu0 0
      %1353 = vmatprep.subr.bf16.mxu0 0
      %1354 = vmatpush1.bf16.xpose.msra.mxu0 0
      %1355 = vmatprep.mubr.bf16.mxu0 0
      %1356 = vmatmul.mubr.bf16.gmra.mrb[0].mxu0 %v1318
      %v1357 = vpop.f32.mrb[0].mxu0
      %v1358 = vadd.f32 0.0, %v1357
      %v1359 = vpop.f32.mrb[0].mxu0
      %v1360 = vpop.f32.mrb[0].mxu0
      %v1361 = vpop.f32.mrb[0].mxu0
      %1362 = vdwg.mxu0
      %v1364 = vsel %vm1178, %v926, 0
      %v1367 = vsel %vm1178, %v1038, 0
      %1369 = vmatprep.subr.bf16.mxu0 0
      %1370 = vmatpush1.bf16.xpose.msra.mxu0 %v1367
      %1371 = vmatprep.subr.bf16.mxu0 0
      %1372 = vmatpush1.bf16.xpose.msra.mxu0 0
      %1373 = vmatprep.subr.bf16.mxu0 0
      %1374 = vmatpush1.bf16.xpose.msra.mxu0 0
      %1375 = vmatprep.subr.bf16.mxu0 0
      %1376 = vmatpush1.bf16.xpose.msra.mxu0 0
      %1377 = vmatprep.subr.bf16.mxu0 0
      %1378 = vmatpush1.bf16.xpose.msra.mxu0 0
      %1379 = vmatprep.subr.bf16.mxu0 0
      %1380 = vmatpush1.bf16.xpose.msra.mxu0 0
      %1381 = vmatprep.subr.bf16.mxu0 0
      %1382 = vmatpush1.bf16.xpose.msra.mxu0 0
      %1383 = vmatprep.subr.bf16.mxu0 0
      %1384 = vmatpush1.bf16.xpose.msra.mxu0 0
      %1385 = vmatprep.subr.bf16.mxu0 0
      %1386 = vmatpush1.bf16.xpose.msra.mxu0 0
      %1387 = vmatprep.subr.bf16.mxu0 0
      %1388 = vmatpush1.bf16.xpose.msra.mxu0 0
      %1389 = vmatprep.subr.bf16.mxu0 0
      %1390 = vmatpush1.bf16.xpose.msra.mxu0 0
      %1391 = vmatprep.subr.bf16.mxu0 0
      %1392 = vmatpush1.bf16.xpose.msra.mxu0 0
      %1393 = vmatprep.subr.bf16.mxu0 0
      %1394 = vmatpush1.bf16.xpose.msra.mxu0 0
      %1395 = vmatprep.subr.bf16.mxu0 0
      %1396 = vmatpush1.bf16.xpose.msra.mxu0 0
      %1397 = vmatprep.subr.bf16.mxu0 0
      %1398 = vmatpush1.bf16.xpose.msra.mxu0 0
      %1399 = vmatprep.subr.bf16.mxu0 0
      %1400 = vmatpush1.bf16.xpose.msra.mxu0 0
      %1401 = vmatprep.mubr.bf16.mxu0 0
      %1402 = vmatmul.mubr.bf16.gmra.mrb[0].mxu0 %v1364
      %v1403 = vpop.f32.mrb[0].mxu0
      %v1404 = vadd.f32 0.0, %v1403
      %v1405 = vpop.f32.mrb[0].mxu0
      %v1406 = vpop.f32.mrb[0].mxu0
      %v1407 = vpop.f32.mrb[0].mxu0
      %1408 = vdwg.mxu0
      %v1410 = vsel %vm1178, %v927, 0
      %v1413 = vsel %vm1178, %v1039, 0
      %1415 = vmatprep.subr.bf16.mxu0 0
      %1416 = vmatpush1.bf16.xpose.msra.mxu0 %v1413
      %1417 = vmatprep.subr.bf16.mxu0 0
      %1418 = vmatpush1.bf16.xpose.msra.mxu0 0
      %1419 = vmatprep.subr.bf16.mxu0 0
      %1420 = vmatpush1.bf16.xpose.msra.mxu0 0
      %1421 = vmatprep.subr.bf16.mxu0 0
      %1422 = vmatpush1.bf16.xpose.msra.mxu0 0
      %1423 = vmatprep.subr.bf16.mxu0 0
      %1424 = vmatpush1.bf16.xpose.msra.mxu0 0
      %1425 = vmatprep.subr.bf16.mxu0 0
      %1426 = vmatpush1.bf16.xpose.msra.mxu0 0
      %1427 = vmatprep.subr.bf16.mxu0 0
      %1428 = vmatpush1.bf16.xpose.msra.mxu0 0
      %1429 = vmatprep.subr.bf16.mxu0 0
      %1430 = vmatpush1.bf16.xpose.msra.mxu0 0
      %1431 = vmatprep.subr.bf16.mxu0 0
      %1432 = vmatpush1.bf16.xpose.msra.mxu0 0
      %1433 = vmatprep.subr.bf16.mxu0 0
      %1434 = vmatpush1.bf16.xpose.msra.mxu0 0
      %1435 = vmatprep.subr.bf16.mxu0 0
      %1436 = vmatpush1.bf16.xpose.msra.mxu0 0
      %1437 = vmatprep.subr.bf16.mxu0 0
      %1438 = vmatpush1.bf16.xpose.msra.mxu0 0
      %1439 = vmatprep.subr.bf16.mxu0 0
      %1440 = vmatpush1.bf16.xpose.msra.mxu0 0
      %1441 = vmatprep.subr.bf16.mxu0 0
      %1442 = vmatpush1.bf16.xpose.msra.mxu0 0
      %1443 = vmatprep.subr.bf16.mxu0 0
      %1444 = vmatpush1.bf16.xpose.msra.mxu0 0
      %1445 = vmatprep.subr.bf16.mxu0 0
      %1446 = vmatpush1.bf16.xpose.msra.mxu0 0
      %1447 = vmatprep.mubr.bf16.mxu0 0
      %1448 = vmatmul.mubr.bf16.gmra.mrb[0].mxu0 %v1410
      %v1449 = vpop.f32.mrb[0].mxu0
      %v1450 = vadd.f32 0.0, %v1449
      %v1451 = vpop.f32.mrb[0].mxu0
      %v1452 = vpop.f32.mrb[0].mxu0
      %v1453 = vpop.f32.mrb[0].mxu0
      %1454 = vdwg.mxu0
      %v1456 = vsel %vm1178, %v928, 0
      %v1459 = vsel %vm1178, %v1040, 0
      %1461 = vmatprep.subr.bf16.mxu0 0
      %1462 = vmatpush1.bf16.xpose.msra.mxu0 %v1459
      %1463 = vmatprep.subr.bf16.mxu0 0
      %1464 = vmatpush1.bf16.xpose.msra.mxu0 0
      %1465 = vmatprep.subr.bf16.mxu0 0
      %1466 = vmatpush1.bf16.xpose.msra.mxu0 0
      %1467 = vmatprep.subr.bf16.mxu0 0
      %1468 = vmatpush1.bf16.xpose.msra.mxu0 0
      %1469 = vmatprep.subr.bf16.mxu0 0
      %1470 = vmatpush1.bf16.xpose.msra.mxu0 0
      %1471 = vmatprep.subr.bf16.mxu0 0
      %1472 = vmatpush1.bf16.xpose.msra.mxu0 0
      %1473 = vmatprep.subr.bf16.mxu0 0
      %1474 = vmatpush1.bf16.xpose.msra.mxu0 0
      %1475 = vmatprep.subr.bf16.mxu0 0
      %1476 = vmatpush1.bf16.xpose.msra.mxu0 0
      %1477 = vmatprep.subr.bf16.mxu0 0
      %1478 = vmatpush1.bf16.xpose.msra.mxu0 0
      %1479 = vmatprep.subr.bf16.mxu0 0
      %1480 = vmatpush1.bf16.xpose.msra.mxu0 0
      %1481 = vmatprep.subr.bf16.mxu0 0
      %1482 = vmatpush1.bf16.xpose.msra.mxu0 0
      %1483 = vmatprep.subr.bf16.mxu0 0
      %1484 = vmatpush1.bf16.xpose.msra.mxu0 0
      %1485 = vmatprep.subr.bf16.mxu0 0
      %1486 = vmatpush1.bf16.xpose.msra.mxu0 0
      %1487 = vmatprep.subr.bf16.mxu0 0
      %1488 = vmatpush1.bf16.xpose.msra.mxu0 0
      %1489 = vmatprep.subr.bf16.mxu0 0
      %1490 = vmatpush1.bf16.xpose.msra.mxu0 0
      %1491 = vmatprep.subr.bf16.mxu0 0
      %1492 = vmatpush1.bf16.xpose.msra.mxu0 0
      %1493 = vmatprep.mubr.bf16.mxu0 0
      %1494 = vmatmul.mubr.bf16.gmra.mrb[0].mxu0 %v1456
      %v1495 = vpop.f32.mrb[0].mxu0
      %v1496 = vadd.f32 0.0, %v1495
      %v1497 = vpop.f32.mrb[0].mxu0
      %v1498 = vpop.f32.mrb[0].mxu0
      %v1499 = vpop.f32.mrb[0].mxu0
      %1500 = vdwg.mxu0
      %v1502 = vsel %vm1178, %v929, 0
      %v1505 = vsel %vm1178, %v1041, 0
      %1507 = vmatprep.subr.bf16.mxu0 0
      %1508 = vmatpush1.bf16.xpose.msra.mxu0 %v1505
      %1509 = vmatprep.subr.bf16.mxu0 0
      %1510 = vmatpush1.bf16.xpose.msra.mxu0 0
      %1511 = vmatprep.subr.bf16.mxu0 0
      %1512 = vmatpush1.bf16.xpose.msra.mxu0 0
      %1513 = vmatprep.subr.bf16.mxu0 0
      %1514 = vmatpush1.bf16.xpose.msra.mxu0 0
      %1515 = vmatprep.subr.bf16.mxu0 0
      %1516 = vmatpush1.bf16.xpose.msra.mxu0 0
      %1517 = vmatprep.subr.bf16.mxu0 0
      %1518 = vmatpush1.bf16.xpose.msra.mxu0 0
      %1519 = vmatprep.subr.bf16.mxu0 0
      %1520 = vmatpush1.bf16.xpose.msra.mxu0 0
      %1521 = vmatprep.subr.bf16.mxu0 0
      %1522 = vmatpush1.bf16.xpose.msra.mxu0 0
      %1523 = vmatprep.subr.bf16.mxu0 0
      %1524 = vmatpush1.bf16.xpose.msra.mxu0 0
      %1525 = vmatprep.subr.bf16.mxu0 0
      %1526 = vmatpush1.bf16.xpose.msra.mxu0 0
      %1527 = vmatprep.subr.bf16.mxu0 0
      %1528 = vmatpush1.bf16.xpose.msra.mxu0 0
      %1529 = vmatprep.subr.bf16.mxu0 0
      %1530 = vmatpush1.bf16.xpose.msra.mxu0 0
      %1531 = vmatprep.subr.bf16.mxu0 0
      %1532 = vmatpush1.bf16.xpose.msra.mxu0 0
      %1533 = vmatprep.subr.bf16.mxu0 0
      %1534 = vmatpush1.bf16.xpose.msra.mxu0 0
      %1535 = vmatprep.subr.bf16.mxu0 0
      %1536 = vmatpush1.bf16.xpose.msra.mxu0 0
      %1537 = vmatprep.subr.bf16.mxu0 0
      %1538 = vmatpush1.bf16.xpose.msra.mxu0 0
      %1539 = vmatprep.mubr.bf16.mxu0 0
      %1540 = vmatmul.mubr.bf16.gmra.mrb[0].mxu0 %v1502
      %v1541 = vpop.f32.mrb[0].mxu0
      %v1542 = vadd.f32 0.0, %v1541
      %v1543 = vpop.f32.mrb[0].mxu0
      %v1544 = vpop.f32.mrb[0].mxu0
      %v1545 = vpop.f32.mrb[0].mxu0
      %1546 = vdwg.mxu0
      %v1548 = vsel %vm1178, %v930, 0
      %v1551 = vsel %vm1178, %v1042, 0
      %1553 = vmatprep.subr.bf16.mxu0 0
      %1554 = vmatpush1.bf16.xpose.msra.mxu0 %v1551
      %1555 = vmatprep.subr.bf16.mxu0 0
      %1556 = vmatpush1.bf16.xpose.msra.mxu0 0
      %1557 = vmatprep.subr.bf16.mxu0 0
      %1558 = vmatpush1.bf16.xpose.msra.mxu0 0
      %1559 = vmatprep.subr.bf16.mxu0 0
      %1560 = vmatpush1.bf16.xpose.msra.mxu0 0
      %1561 = vmatprep.subr.bf16.mxu0 0
      %1562 = vmatpush1.bf16.xpose.msra.mxu0 0
      %1563 = vmatprep.subr.bf16.mxu0 0
      %1564 = vmatpush1.bf16.xpose.msra.mxu0 0
      %1565 = vmatprep.subr.bf16.mxu0 0
      %1566 = vmatpush1.bf16.xpose.msra.mxu0 0
      %1567 = vmatprep.subr.bf16.mxu0 0
      %1568 = vmatpush1.bf16.xpose.msra.mxu0 0
      %1569 = vmatprep.subr.bf16.mxu0 0
      %1570 = vmatpush1.bf16.xpose.msra.mxu0 0
      %1571 = vmatprep.subr.bf16.mxu0 0
      %1572 = vmatpush1.bf16.xpose.msra.mxu0 0
      %1573 = vmatprep.subr.bf16.mxu0 0
      %1574 = vmatpush1.bf16.xpose.msra.mxu0 0
      %1575 = vmatprep.subr.bf16.mxu0 0
      %1576 = vmatpush1.bf16.xpose.msra.mxu0 0
      %1577 = vmatprep.subr.bf16.mxu0 0
      %1578 = vmatpush1.bf16.xpose.msra.mxu0 0
      %1579 = vmatprep.subr.bf16.mxu0 0
      %1580 = vmatpush1.bf16.xpose.msra.mxu0 0
      %1581 = vmatprep.subr.bf16.mxu0 0
      %1582 = vmatpush1.bf16.xpose.msra.mxu0 0
      %1583 = vmatprep.subr.bf16.mxu0 0
      %1584 = vmatpush1.bf16.xpose.msra.mxu0 0
      %1585 = vmatprep.mubr.bf16.mxu0 0
      %1586 = vmatmul.mubr.bf16.gmra.mrb[0].mxu0 %v1548
      %v1587 = vpop.f32.mrb[0].mxu0
      %v1588 = vadd.f32 0.0, %v1587
      %v1589 = vpop.f32.mrb[0].mxu0
      %v1590 = vpop.f32.mrb[0].mxu0
      %v1591 = vpop.f32.mrb[0].mxu0
      %1592 = vdwg.mxu0
      %v1594 = vsel %vm1178, %v931, 0
      %v1597 = vsel %vm1178, %v1043, 0
      %1599 = vmatprep.subr.bf16.mxu0 0
      %1600 = vmatpush1.bf16.xpose.msra.mxu0 %v1597
      %1601 = vmatprep.subr.bf16.mxu0 0
      %1602 = vmatpush1.bf16.xpose.msra.mxu0 0
      %1603 = vmatprep.subr.bf16.mxu0 0
      %1604 = vmatpush1.bf16.xpose.msra.mxu0 0
      %1605 = vmatprep.subr.bf16.mxu0 0
      %1606 = vmatpush1.bf16.xpose.msra.mxu0 0
      %1607 = vmatprep.subr.bf16.mxu0 0
      %1608 = vmatpush1.bf16.xpose.msra.mxu0 0
      %1609 = vmatprep.subr.bf16.mxu0 0
      %1610 = vmatpush1.bf16.xpose.msra.mxu0 0
      %1611 = vmatprep.subr.bf16.mxu0 0
      %1612 = vmatpush1.bf16.xpose.msra.mxu0 0
      %1613 = vmatprep.subr.bf16.mxu0 0
      %1614 = vmatpush1.bf16.xpose.msra.mxu0 0
      %1615 = vmatprep.subr.bf16.mxu0 0
      %1616 = vmatpush1.bf16.xpose.msra.mxu0 0
      %1617 = vmatprep.subr.bf16.mxu0 0
      %1618 = vmatpush1.bf16.xpose.msra.mxu0 0
      %1619 = vmatprep.subr.bf16.mxu0 0
      %1620 = vmatpush1.bf16.xpose.msra.mxu0 0
      %1621 = vmatprep.subr.bf16.mxu0 0
      %1622 = vmatpush1.bf16.xpose.msra.mxu0 0
      %1623 = vmatprep.subr.bf16.mxu0 0
      %1624 = vmatpush1.bf16.xpose.msra.mxu0 0
      %1625 = vmatprep.subr.bf16.mxu0 0
      %1626 = vmatpush1.bf16.xpose.msra.mxu0 0
      %1627 = vmatprep.subr.bf16.mxu0 0
      %1628 = vmatpush1.bf16.xpose.msra.mxu0 0
      %1629 = vmatprep.subr.bf16.mxu0 0
      %1630 = vmatpush1.bf16.xpose.msra.mxu0 0
      %1631 = vmatprep.mubr.bf16.mxu0 0
      %1632 = vmatmul.mubr.bf16.gmra.mrb[0].mxu0 %v1594
      %v1633 = vpop.f32.mrb[0].mxu0
      %v1634 = vadd.f32 0.0, %v1633
      %v1635 = vpop.f32.mrb[0].mxu0
      %v1636 = vpop.f32.mrb[0].mxu0
      %v1637 = vpop.f32.mrb[0].mxu0
      %1638 = vdwg.mxu0
      %v1640 = vsel %vm1178, %v932, 0
      %v1643 = vsel %vm1178, %v1044, 0
      %1645 = vmatprep.subr.bf16.mxu0 0
      %1646 = vmatpush1.bf16.xpose.msra.mxu0 %v1643
      %1647 = vmatprep.subr.bf16.mxu0 0
      %1648 = vmatpush1.bf16.xpose.msra.mxu0 0
      %1649 = vmatprep.subr.bf16.mxu0 0
      %1650 = vmatpush1.bf16.xpose.msra.mxu0 0
      %1651 = vmatprep.subr.bf16.mxu0 0
      %1652 = vmatpush1.bf16.xpose.msra.mxu0 0
      %1653 = vmatprep.subr.bf16.mxu0 0
      %1654 = vmatpush1.bf16.xpose.msra.mxu0 0
      %1655 = vmatprep.subr.bf16.mxu0 0
      %1656 = vmatpush1.bf16.xpose.msra.mxu0 0
      %1657 = vmatprep.subr.bf16.mxu0 0
      %1658 = vmatpush1.bf16.xpose.msra.mxu0 0
      %1659 = vmatprep.subr.bf16.mxu0 0
      %1660 = vmatpush1.bf16.xpose.msra.mxu0 0
      %1661 = vmatprep.subr.bf16.mxu0 0
      %1662 = vmatpush1.bf16.xpose.msra.mxu0 0
      %1663 = vmatprep.subr.bf16.mxu0 0
      %1664 = vmatpush1.bf16.xpose.msra.mxu0 0
      %1665 = vmatprep.subr.bf16.mxu0 0
      %1666 = vmatpush1.bf16.xpose.msra.mxu0 0
      %1667 = vmatprep.subr.bf16.mxu0 0
      %1668 = vmatpush1.bf16.xpose.msra.mxu0 0
      %1669 = vmatprep.subr.bf16.mxu0 0
      %1670 = vmatpush1.bf16.xpose.msra.mxu0 0
      %1671 = vmatprep.subr.bf16.mxu0 0
      %1672 = vmatpush1.bf16.xpose.msra.mxu0 0
      %1673 = vmatprep.subr.bf16.mxu0 0
      %1674 = vmatpush1.bf16.xpose.msra.mxu0 0
      %1675 = vmatprep.subr.bf16.mxu0 0
      %1676 = vmatpush1.bf16.xpose.msra.mxu0 0
      %1677 = vmatprep.mubr.bf16.mxu0 0
      %1678 = vmatmul.mubr.bf16.gmra.mrb[0].mxu0 %v1640
      %v1679 = vpop.f32.mrb[0].mxu0
      %v1680 = vadd.f32 0.0, %v1679
      %v1681 = vpop.f32.mrb[0].mxu0
      %v1682 = vpop.f32.mrb[0].mxu0
      %v1683 = vpop.f32.mrb[0].mxu0
      %1684 = vdwg.mxu0
      %v1686 = vsel %vm1178, %v933, 0
      %v1689 = vsel %vm1178, %v1045, 0
      %1691 = vmatprep.subr.bf16.mxu0 0
      %1692 = vmatpush1.bf16.xpose.msra.mxu0 %v1689
      %1693 = vmatprep.subr.bf16.mxu0 0
      %1694 = vmatpush1.bf16.xpose.msra.mxu0 0
      %1695 = vmatprep.subr.bf16.mxu0 0
      %1696 = vmatpush1.bf16.xpose.msra.mxu0 0
      %1697 = vmatprep.subr.bf16.mxu0 0
      %1698 = vmatpush1.bf16.xpose.msra.mxu0 0
      %1699 = vmatprep.subr.bf16.mxu0 0
      %1700 = vmatpush1.bf16.xpose.msra.mxu0 0
      %1701 = vmatprep.subr.bf16.mxu0 0
      %1702 = vmatpush1.bf16.xpose.msra.mxu0 0
      %1703 = vmatprep.subr.bf16.mxu0 0
      %1704 = vmatpush1.bf16.xpose.msra.mxu0 0
      %1705 = vmatprep.subr.bf16.mxu0 0
      %1706 = vmatpush1.bf16.xpose.msra.mxu0 0
      %1707 = vmatprep.subr.bf16.mxu0 0
      %1708 = vmatpush1.bf16.xpose.msra.mxu0 0
      %1709 = vmatprep.subr.bf16.mxu0 0
      %1710 = vmatpush1.bf16.xpose.msra.mxu0 0
      %1711 = vmatprep.subr.bf16.mxu0 0
      %1712 = vmatpush1.bf16.xpose.msra.mxu0 0
      %1713 = vmatprep.subr.bf16.mxu0 0
      %1714 = vmatpush1.bf16.xpose.msra.mxu0 0
      %1715 = vmatprep.subr.bf16.mxu0 0
      %1716 = vmatpush1.bf16.xpose.msra.mxu0 0
      %1717 = vmatprep.subr.bf16.mxu0 0
      %1718 = vmatpush1.bf16.xpose.msra.mxu0 0
      %1719 = vmatprep.subr.bf16.mxu0 0
      %1720 = vmatpush1.bf16.xpose.msra.mxu0 0
      %1721 = vmatprep.subr.bf16.mxu0 0
      %1722 = vmatpush1.bf16.xpose.msra.mxu0 0
      %1723 = vmatprep.mubr.bf16.mxu0 0
      %1724 = vmatmul.mubr.bf16.gmra.mrb[0].mxu0 %v1686
      %v1725 = vpop.f32.mrb[0].mxu0
      %v1726 = vadd.f32 0.0, %v1725
      %v1727 = vpop.f32.mrb[0].mxu0
      %v1728 = vpop.f32.mrb[0].mxu0
      %v1729 = vpop.f32.mrb[0].mxu0
      %1730 = vdwg.mxu0
      %v1732 = vsel %vm1178, %v934, 0
      %v1735 = vsel %vm1178, %v1046, 0
      %1737 = vmatprep.subr.bf16.mxu0 0
      %1738 = vmatpush1.bf16.xpose.msra.mxu0 %v1735
      %1739 = vmatprep.subr.bf16.mxu0 0
      %1740 = vmatpush1.bf16.xpose.msra.mxu0 0
      %1741 = vmatprep.subr.bf16.mxu0 0
      %1742 = vmatpush1.bf16.xpose.msra.mxu0 0
      %1743 = vmatprep.subr.bf16.mxu0 0
      %1744 = vmatpush1.bf16.xpose.msra.mxu0 0
      %1745 = vmatprep.subr.bf16.mxu0 0
      %1746 = vmatpush1.bf16.xpose.msra.mxu0 0
      %1747 = vmatprep.subr.bf16.mxu0 0
      %1748 = vmatpush1.bf16.xpose.msra.mxu0 0
      %1749 = vmatprep.subr.bf16.mxu0 0
      %1750 = vmatpush1.bf16.xpose.msra.mxu0 0
      %1751 = vmatprep.subr.bf16.mxu0 0
      %1752 = vmatpush1.bf16.xpose.msra.mxu0 0
      %1753 = vmatprep.subr.bf16.mxu0 0
      %1754 = vmatpush1.bf16.xpose.msra.mxu0 0
      %1755 = vmatprep.subr.bf16.mxu0 0
      %1756 = vmatpush1.bf16.xpose.msra.mxu0 0
      %1757 = vmatprep.subr.bf16.mxu0 0
      %1758 = vmatpush1.bf16.xpose.msra.mxu0 0
      %1759 = vmatprep.subr.bf16.mxu0 0
      %1760 = vmatpush1.bf16.xpose.msra.mxu0 0
      %1761 = vmatprep.subr.bf16.mxu0 0
      %1762 = vmatpush1.bf16.xpose.msra.mxu0 0
      %1763 = vmatprep.subr.bf16.mxu0 0
      %1764 = vmatpush1.bf16.xpose.msra.mxu0 0
      %1765 = vmatprep.subr.bf16.mxu0 0
      %1766 = vmatpush1.bf16.xpose.msra.mxu0 0
      %1767 = vmatprep.subr.bf16.mxu0 0
      %1768 = vmatpush1.bf16.xpose.msra.mxu0 0
      %1769 = vmatprep.mubr.bf16.mxu0 0
      %1770 = vmatmul.mubr.bf16.gmra.mrb[0].mxu0 %v1732
      %v1771 = vpop.f32.mrb[0].mxu0
      %v1772 = vadd.f32 0.0, %v1771
      %v1773 = vpop.f32.mrb[0].mxu0
      %v1774 = vpop.f32.mrb[0].mxu0
      %v1775 = vpop.f32.mrb[0].mxu0
      %1776 = vdwg.mxu0
      %v1778 = vsel %vm1178, %v935, 0
      %v1781 = vsel %vm1178, %v1047, 0
      %1783 = vmatprep.subr.bf16.mxu0 0
      %1784 = vmatpush1.bf16.xpose.msra.mxu0 %v1781
      %1785 = vmatprep.subr.bf16.mxu0 0
      %1786 = vmatpush1.bf16.xpose.msra.mxu0 0
      %1787 = vmatprep.subr.bf16.mxu0 0
      %1788 = vmatpush1.bf16.xpose.msra.mxu0 0
      %1789 = vmatprep.subr.bf16.mxu0 0
      %1790 = vmatpush1.bf16.xpose.msra.mxu0 0
      %1791 = vmatprep.subr.bf16.mxu0 0
      %1792 = vmatpush1.bf16.xpose.msra.mxu0 0
      %1793 = vmatprep.subr.bf16.mxu0 0
      %1794 = vmatpush1.bf16.xpose.msra.mxu0 0
      %1795 = vmatprep.subr.bf16.mxu0 0
      %1796 = vmatpush1.bf16.xpose.msra.mxu0 0
      %1797 = vmatprep.subr.bf16.mxu0 0
      %1798 = vmatpush1.bf16.xpose.msra.mxu0 0
      %1799 = vmatprep.subr.bf16.mxu0 0
      %1800 = vmatpush1.bf16.xpose.msra.mxu0 0
      %1801 = vmatprep.subr.bf16.mxu0 0
      %1802 = vmatpush1.bf16.xpose.msra.mxu0 0
      %1803 = vmatprep.subr.bf16.mxu0 0
      %1804 = vmatpush1.bf16.xpose.msra.mxu0 0
      %1805 = vmatprep.subr.bf16.mxu0 0
      %1806 = vmatpush1.bf16.xpose.msra.mxu0 0
      %1807 = vmatprep.subr.bf16.mxu0 0
      %1808 = vmatpush1.bf16.xpose.msra.mxu0 0
      %1809 = vmatprep.subr.bf16.mxu0 0
      %1810 = vmatpush1.bf16.xpose.msra.mxu0 0
      %1811 = vmatprep.subr.bf16.mxu0 0
      %1812 = vmatpush1.bf16.xpose.msra.mxu0 0
      %1813 = vmatprep.subr.bf16.mxu0 0
      %1814 = vmatpush1.bf16.xpose.msra.mxu0 0
      %1815 = vmatprep.mubr.bf16.mxu0 0
      %1816 = vmatmul.mubr.bf16.gmra.mrb[0].mxu0 %v1778
      %v1817 = vpop.f32.mrb[0].mxu0
      %v1818 = vadd.f32 0.0, %v1817
      %v1819 = vpop.f32.mrb[0].mxu0
      %v1820 = vpop.f32.mrb[0].mxu0
      %v1821 = vpop.f32.mrb[0].mxu0
      %1822 = vdwg.mxu0
      %v1824 = vsel %vm1178, %v936, 0
      %v1827 = vsel %vm1178, %v1048, 0
      %1829 = vmatprep.subr.bf16.mxu0 0
      %1830 = vmatpush1.bf16.xpose.msra.mxu0 %v1827
      %1831 = vmatprep.subr.bf16.mxu0 0
      %1832 = vmatpush1.bf16.xpose.msra.mxu0 0
      %1833 = vmatprep.subr.bf16.mxu0 0
      %1834 = vmatpush1.bf16.xpose.msra.mxu0 0
      %1835 = vmatprep.subr.bf16.mxu0 0
      %1836 = vmatpush1.bf16.xpose.msra.mxu0 0
      %1837 = vmatprep.subr.bf16.mxu0 0
      %1838 = vmatpush1.bf16.xpose.msra.mxu0 0
      %1839 = vmatprep.subr.bf16.mxu0 0
      %1840 = vmatpush1.bf16.xpose.msra.mxu0 0
      %1841 = vmatprep.subr.bf16.mxu0 0
      %1842 = vmatpush1.bf16.xpose.msra.mxu0 0
      %1843 = vmatprep.subr.bf16.mxu0 0
      %1844 = vmatpush1.bf16.xpose.msra.mxu0 0
      %1845 = vmatprep.subr.bf16.mxu0 0
      %1846 = vmatpush1.bf16.xpose.msra.mxu0 0
      %1847 = vmatprep.subr.bf16.mxu0 0
      %1848 = vmatpush1.bf16.xpose.msra.mxu0 0
      %1849 = vmatprep.subr.bf16.mxu0 0
      %1850 = vmatpush1.bf16.xpose.msra.mxu0 0
      %1851 = vmatprep.subr.bf16.mxu0 0
      %1852 = vmatpush1.bf16.xpose.msra.mxu0 0
      %1853 = vmatprep.subr.bf16.mxu0 0
      %1854 = vmatpush1.bf16.xpose.msra.mxu0 0
      %1855 = vmatprep.subr.bf16.mxu0 0
      %1856 = vmatpush1.bf16.xpose.msra.mxu0 0
      %1857 = vmatprep.subr.bf16.mxu0 0
      %1858 = vmatpush1.bf16.xpose.msra.mxu0 0
      %1859 = vmatprep.subr.bf16.mxu0 0
      %1860 = vmatpush1.bf16.xpose.msra.mxu0 0
      %1861 = vmatprep.mubr.bf16.mxu0 0
      %1862 = vmatmul.mubr.bf16.gmra.mrb[0].mxu0 %v1824
      %v1863 = vpop.f32.mrb[0].mxu0
      %v1864 = vadd.f32 0.0, %v1863
      %v1865 = vpop.f32.mrb[0].mxu0
      %v1866 = vpop.f32.mrb[0].mxu0
      %v1867 = vpop.f32.mrb[0].mxu0
      %1868 = vdwg.mxu0
      %v1870 = vsel %vm1178, %v937, 0
      %v1873 = vsel %vm1178, %v1049, 0
      %1875 = vmatprep.subr.bf16.mxu0 0
      %1876 = vmatpush1.bf16.xpose.msra.mxu0 %v1873
      %1877 = vmatprep.subr.bf16.mxu0 0
      %1878 = vmatpush1.bf16.xpose.msra.mxu0 0
      %1879 = vmatprep.subr.bf16.mxu0 0
      %1880 = vmatpush1.bf16.xpose.msra.mxu0 0
      %1881 = vmatprep.subr.bf16.mxu0 0
      %1882 = vmatpush1.bf16.xpose.msra.mxu0 0
      %1883 = vmatprep.subr.bf16.mxu0 0
      %1884 = vmatpush1.bf16.xpose.msra.mxu0 0
      %1885 = vmatprep.subr.bf16.mxu0 0
      %1886 = vmatpush1.bf16.xpose.msra.mxu0 0
      %1887 = vmatprep.subr.bf16.mxu0 0
      %1888 = vmatpush1.bf16.xpose.msra.mxu0 0
      %1889 = vmatprep.subr.bf16.mxu0 0
      %1890 = vmatpush1.bf16.xpose.msra.mxu0 0
      %1891 = vmatprep.subr.bf16.mxu0 0
      %1892 = vmatpush1.bf16.xpose.msra.mxu0 0
      %1893 = vmatprep.subr.bf16.mxu0 0
      %1894 = vmatpush1.bf16.xpose.msra.mxu0 0
      %1895 = vmatprep.subr.bf16.mxu0 0
      %1896 = vmatpush1.bf16.xpose.msra.mxu0 0
      %1897 = vmatprep.subr.bf16.mxu0 0
      %1898 = vmatpush1.bf16.xpose.msra.mxu0 0
      %1899 = vmatprep.subr.bf16.mxu0 0
      %1900 = vmatpush1.bf16.xpose.msra.mxu0 0
      %1901 = vmatprep.subr.bf16.mxu0 0
      %1902 = vmatpush1.bf16.xpose.msra.mxu0 0
      %1903 = vmatprep.subr.bf16.mxu0 0
      %1904 = vmatpush1.bf16.xpose.msra.mxu0 0
      %1905 = vmatprep.subr.bf16.mxu0 0
      %1906 = vmatpush1.bf16.xpose.msra.mxu0 0
      %1907 = vmatprep.mubr.bf16.mxu0 0
      %1908 = vmatmul.mubr.bf16.gmra.mrb[0].mxu0 %v1870
      %v1909 = vpop.f32.mrb[0].mxu0
      %v1910 = vadd.f32 0.0, %v1909
      %v1911 = vpop.f32.mrb[0].mxu0
      %v1912 = vpop.f32.mrb[0].mxu0
      %v1913 = vpop.f32.mrb[0].mxu0
      %1914 = vdwg.mxu0
      %v1916 = vsel %vm1178, %v938, 0
      %v1919 = vsel %vm1178, %v1050, 0
      %1921 = vmatprep.subr.bf16.mxu0 0
      %1922 = vmatpush1.bf16.xpose.msra.mxu0 %v1919
      %1923 = vmatprep.subr.bf16.mxu0 0
      %1924 = vmatpush1.bf16.xpose.msra.mxu0 0
      %1925 = vmatprep.subr.bf16.mxu0 0
      %1926 = vmatpush1.bf16.xpose.msra.mxu0 0
      %1927 = vmatprep.subr.bf16.mxu0 0
      %1928 = vmatpush1.bf16.xpose.msra.mxu0 0
      %1929 = vmatprep.subr.bf16.mxu0 0
      %1930 = vmatpush1.bf16.xpose.msra.mxu0 0
      %1931 = vmatprep.subr.bf16.mxu0 0
      %1932 = vmatpush1.bf16.xpose.msra.mxu0 0
      %1933 = vmatprep.subr.bf16.mxu0 0
      %1934 = vmatpush1.bf16.xpose.msra.mxu0 0
      %1935 = vmatprep.subr.bf16.mxu0 0
      %1936 = vmatpush1.bf16.xpose.msra.mxu0 0
      %1937 = vmatprep.subr.bf16.mxu0 0
      %1938 = vmatpush1.bf16.xpose.msra.mxu0 0
      %1939 = vmatprep.subr.bf16.mxu0 0
      %1940 = vmatpush1.bf16.xpose.msra.mxu0 0
      %1941 = vmatprep.subr.bf16.mxu0 0
      %1942 = vmatpush1.bf16.xpose.msra.mxu0 0
      %1943 = vmatprep.subr.bf16.mxu0 0
      %1944 = vmatpush1.bf16.xpose.msra.mxu0 0
      %1945 = vmatprep.subr.bf16.mxu0 0
      %1946 = vmatpush1.bf16.xpose.msra.mxu0 0
      %1947 = vmatprep.subr.bf16.mxu0 0
      %1948 = vmatpush1.bf16.xpose.msra.mxu0 0
      %1949 = vmatprep.subr.bf16.mxu0 0
      %1950 = vmatpush1.bf16.xpose.msra.mxu0 0
      %1951 = vmatprep.subr.bf16.mxu0 0
      %1952 = vmatpush1.bf16.xpose.msra.mxu0 0
      %1953 = vmatprep.mubr.bf16.mxu0 0
      %1954 = vmatmul.mubr.bf16.gmra.mrb[0].mxu0 %v1916
      %v1955 = vpop.f32.mrb[0].mxu0
      %v1956 = vadd.f32 0.0, %v1955
      %v1957 = vpop.f32.mrb[0].mxu0
      %v1958 = vpop.f32.mrb[0].mxu0
      %v1959 = vpop.f32.mrb[0].mxu0
      %1960 = vdwg.mxu0
      %v1962 = vsel %vm1178, %v939, 0
      %v1965 = vsel %vm1178, %v1051, 0
      %1967 = vmatprep.subr.bf16.mxu0 0
      %1968 = vmatpush1.bf16.xpose.msra.mxu0 %v1965
      %1969 = vmatprep.subr.bf16.mxu0 0
      %1970 = vmatpush1.bf16.xpose.msra.mxu0 0
      %1971 = vmatprep.subr.bf16.mxu0 0
      %1972 = vmatpush1.bf16.xpose.msra.mxu0 0
      %1973 = vmatprep.subr.bf16.mxu0 0
      %1974 = vmatpush1.bf16.xpose.msra.mxu0 0
      %1975 = vmatprep.subr.bf16.mxu0 0
      %1976 = vmatpush1.bf16.xpose.msra.mxu0 0
      %1977 = vmatprep.subr.bf16.mxu0 0
      %1978 = vmatpush1.bf16.xpose.msra.mxu0 0
      %1979 = vmatprep.subr.bf16.mxu0 0
      %1980 = vmatpush1.bf16.xpose.msra.mxu0 0
      %1981 = vmatprep.subr.bf16.mxu0 0
      %1982 = vmatpush1.bf16.xpose.msra.mxu0 0
      %1983 = vmatprep.subr.bf16.mxu0 0
      %1984 = vmatpush1.bf16.xpose.msra.mxu0 0
      %1985 = vmatprep.subr.bf16.mxu0 0
      %1986 = vmatpush1.bf16.xpose.msra.mxu0 0
      %1987 = vmatprep.subr.bf16.mxu0 0
      %1988 = vmatpush1.bf16.xpose.msra.mxu0 0
      %1989 = vmatprep.subr.bf16.mxu0 0
      %1990 = vmatpush1.bf16.xpose.msra.mxu0 0
      %1991 = vmatprep.subr.bf16.mxu0 0
      %1992 = vmatpush1.bf16.xpose.msra.mxu0 0
      %1993 = vmatprep.subr.bf16.mxu0 0
      %1994 = vmatpush1.bf16.xpose.msra.mxu0 0
      %1995 = vmatprep.subr.bf16.mxu0 0
      %1996 = vmatpush1.bf16.xpose.msra.mxu0 0
      %1997 = vmatprep.subr.bf16.mxu0 0
      %1998 = vmatpush1.bf16.xpose.msra.mxu0 0
      %1999 = vmatprep.mubr.bf16.mxu0 0
      %2000 = vmatmul.mubr.bf16.gmra.mrb[0].mxu0 %v1962
      %v2001 = vpop.f32.mrb[0].mxu0
      %v2002 = vadd.f32 0.0, %v2001
      %v2003 = vpop.f32.mrb[0].mxu0
      %v2004 = vpop.f32.mrb[0].mxu0
      %v2005 = vpop.f32.mrb[0].mxu0
      %2006 = vdwg.mxu0
      %v2008 = vsel %vm1178, %v940, 0
      %v2011 = vsel %vm1178, %v1052, 0
      %2013 = vmatprep.subr.bf16.mxu0 0
      %2014 = vmatpush1.bf16.xpose.msra.mxu0 %v2011
      %2015 = vmatprep.subr.bf16.mxu0 0
      %2016 = vmatpush1.bf16.xpose.msra.mxu0 0
      %2017 = vmatprep.subr.bf16.mxu0 0
      %2018 = vmatpush1.bf16.xpose.msra.mxu0 0
      %2019 = vmatprep.subr.bf16.mxu0 0
      %2020 = vmatpush1.bf16.xpose.msra.mxu0 0
      %2021 = vmatprep.subr.bf16.mxu0 0
      %2022 = vmatpush1.bf16.xpose.msra.mxu0 0
      %2023 = vmatprep.subr.bf16.mxu0 0
      %2024 = vmatpush1.bf16.xpose.msra.mxu0 0
      %2025 = vmatprep.subr.bf16.mxu0 0
      %2026 = vmatpush1.bf16.xpose.msra.mxu0 0
      %2027 = vmatprep.subr.bf16.mxu0 0
      %2028 = vmatpush1.bf16.xpose.msra.mxu0 0
      %2029 = vmatprep.subr.bf16.mxu0 0
      %2030 = vmatpush1.bf16.xpose.msra.mxu0 0
      %2031 = vmatprep.subr.bf16.mxu0 0
      %2032 = vmatpush1.bf16.xpose.msra.mxu0 0
      %2033 = vmatprep.subr.bf16.mxu0 0
      %2034 = vmatpush1.bf16.xpose.msra.mxu0 0
      %2035 = vmatprep.subr.bf16.mxu0 0
      %2036 = vmatpush1.bf16.xpose.msra.mxu0 0
      %2037 = vmatprep.subr.bf16.mxu0 0
      %2038 = vmatpush1.bf16.xpose.msra.mxu0 0
      %2039 = vmatprep.subr.bf16.mxu0 0
      %2040 = vmatpush1.bf16.xpose.msra.mxu0 0
      %2041 = vmatprep.subr.bf16.mxu0 0
      %2042 = vmatpush1.bf16.xpose.msra.mxu0 0
      %2043 = vmatprep.subr.bf16.mxu0 0
      %2044 = vmatpush1.bf16.xpose.msra.mxu0 0
      %2045 = vmatprep.mubr.bf16.mxu0 0
      %2046 = vmatmul.mubr.bf16.gmra.mrb[0].mxu0 %v2008
      %v2047 = vpop.f32.mrb[0].mxu0
      %v2048 = vadd.f32 0.0, %v2047
      %v2049 = vpop.f32.mrb[0].mxu0
      %v2050 = vpop.f32.mrb[0].mxu0
      %v2051 = vpop.f32.mrb[0].mxu0
      %2052 = vdwg.mxu0
      %v2054 = vsel %vm1178, %v941, 0
      %v2057 = vsel %vm1178, %v1053, 0
      %2059 = vmatprep.subr.bf16.mxu0 0
      %2060 = vmatpush1.bf16.xpose.msra.mxu0 %v2057
      %2061 = vmatprep.subr.bf16.mxu0 0
      %2062 = vmatpush1.bf16.xpose.msra.mxu0 0
      %2063 = vmatprep.subr.bf16.mxu0 0
      %2064 = vmatpush1.bf16.xpose.msra.mxu0 0
      %2065 = vmatprep.subr.bf16.mxu0 0
      %2066 = vmatpush1.bf16.xpose.msra.mxu0 0
      %2067 = vmatprep.subr.bf16.mxu0 0
      %2068 = vmatpush1.bf16.xpose.msra.mxu0 0
      %2069 = vmatprep.subr.bf16.mxu0 0
      %2070 = vmatpush1.bf16.xpose.msra.mxu0 0
      %2071 = vmatprep.subr.bf16.mxu0 0
      %2072 = vmatpush1.bf16.xpose.msra.mxu0 0
      %2073 = vmatprep.subr.bf16.mxu0 0
      %2074 = vmatpush1.bf16.xpose.msra.mxu0 0
      %2075 = vmatprep.subr.bf16.mxu0 0
      %2076 = vmatpush1.bf16.xpose.msra.mxu0 0
      %2077 = vmatprep.subr.bf16.mxu0 0
      %2078 = vmatpush1.bf16.xpose.msra.mxu0 0
      %2079 = vmatprep.subr.bf16.mxu0 0
      %2080 = vmatpush1.bf16.xpose.msra.mxu0 0
      %2081 = vmatprep.subr.bf16.mxu0 0
      %2082 = vmatpush1.bf16.xpose.msra.mxu0 0
      %2083 = vmatprep.subr.bf16.mxu0 0
      %2084 = vmatpush1.bf16.xpose.msra.mxu0 0
      %2085 = vmatprep.subr.bf16.mxu0 0
      %2086 = vmatpush1.bf16.xpose.msra.mxu0 0
      %2087 = vmatprep.subr.bf16.mxu0 0
      %2088 = vmatpush1.bf16.xpose.msra.mxu0 0
      %2089 = vmatprep.subr.bf16.mxu0 0
      %2090 = vmatpush1.bf16.xpose.msra.mxu0 0
      %2091 = vmatprep.mubr.bf16.mxu0 0
      %2092 = vmatmul.mubr.bf16.gmra.mrb[0].mxu0 %v2054
      %v2093 = vpop.f32.mrb[0].mxu0
      %v2094 = vadd.f32 0.0, %v2093
      %v2095 = vpop.f32.mrb[0].mxu0
      %v2096 = vpop.f32.mrb[0].mxu0
      %v2097 = vpop.f32.mrb[0].mxu0
      %2098 = vdwg.mxu0
      %v2100 = vsel %vm1178, %v942, 0
      %v2103 = vsel %vm1178, %v1054, 0
      %2105 = vmatprep.subr.bf16.mxu0 0
      %2106 = vmatpush1.bf16.xpose.msra.mxu0 %v2103
      %2107 = vmatprep.subr.bf16.mxu0 0
      %2108 = vmatpush1.bf16.xpose.msra.mxu0 0
      %2109 = vmatprep.subr.bf16.mxu0 0
      %2110 = vmatpush1.bf16.xpose.msra.mxu0 0
      %2111 = vmatprep.subr.bf16.mxu0 0
      %2112 = vmatpush1.bf16.xpose.msra.mxu0 0
      %2113 = vmatprep.subr.bf16.mxu0 0
      %2114 = vmatpush1.bf16.xpose.msra.mxu0 0
      %2115 = vmatprep.subr.bf16.mxu0 0
      %2116 = vmatpush1.bf16.xpose.msra.mxu0 0
      %2117 = vmatprep.subr.bf16.mxu0 0
      %2118 = vmatpush1.bf16.xpose.msra.mxu0 0
      %2119 = vmatprep.subr.bf16.mxu0 0
      %2120 = vmatpush1.bf16.xpose.msra.mxu0 0
      %2121 = vmatprep.subr.bf16.mxu0 0
      %2122 = vmatpush1.bf16.xpose.msra.mxu0 0
      %2123 = vmatprep.subr.bf16.mxu0 0
      %2124 = vmatpush1.bf16.xpose.msra.mxu0 0
      %2125 = vmatprep.subr.bf16.mxu0 0
      %2126 = vmatpush1.bf16.xpose.msra.mxu0 0
      %2127 = vmatprep.subr.bf16.mxu0 0
      %2128 = vmatpush1.bf16.xpose.msra.mxu0 0
      %2129 = vmatprep.subr.bf16.mxu0 0
      %2130 = vmatpush1.bf16.xpose.msra.mxu0 0
      %2131 = vmatprep.subr.bf16.mxu0 0
      %2132 = vmatpush1.bf16.xpose.msra.mxu0 0
      %2133 = vmatprep.subr.bf16.mxu0 0
      %2134 = vmatpush1.bf16.xpose.msra.mxu0 0
      %2135 = vmatprep.subr.bf16.mxu0 0
      %2136 = vmatpush1.bf16.xpose.msra.mxu0 0
      %2137 = vmatprep.mubr.bf16.mxu0 0
      %2138 = vmatmul.mubr.bf16.gmra.mrb[0].mxu0 %v2100
      %v2139 = vpop.f32.mrb[0].mxu0
      %v2140 = vadd.f32 0.0, %v2139
      %v2141 = vpop.f32.mrb[0].mxu0
      %v2142 = vpop.f32.mrb[0].mxu0
      %v2143 = vpop.f32.mrb[0].mxu0
      %2144 = vdwg.mxu0
      %v2146 = vsel %vm1178, %v943, 0
      %v2149 = vsel %vm1178, %v1055, 0
      %2151 = vmatprep.subr.bf16.mxu0 0
      %2152 = vmatpush1.bf16.xpose.msra.mxu0 %v2149
      %2153 = vmatprep.subr.bf16.mxu0 0
      %2154 = vmatpush1.bf16.xpose.msra.mxu0 0
      %2155 = vmatprep.subr.bf16.mxu0 0
      %2156 = vmatpush1.bf16.xpose.msra.mxu0 0
      %2157 = vmatprep.subr.bf16.mxu0 0
      %2158 = vmatpush1.bf16.xpose.msra.mxu0 0
      %2159 = vmatprep.subr.bf16.mxu0 0
      %2160 = vmatpush1.bf16.xpose.msra.mxu0 0
      %2161 = vmatprep.subr.bf16.mxu0 0
      %2162 = vmatpush1.bf16.xpose.msra.mxu0 0
      %2163 = vmatprep.subr.bf16.mxu0 0
      %2164 = vmatpush1.bf16.xpose.msra.mxu0 0
      %2165 = vmatprep.subr.bf16.mxu0 0
      %2166 = vmatpush1.bf16.xpose.msra.mxu0 0
      %2167 = vmatprep.subr.bf16.mxu0 0
      %2168 = vmatpush1.bf16.xpose.msra.mxu0 0
      %2169 = vmatprep.subr.bf16.mxu0 0
      %2170 = vmatpush1.bf16.xpose.msra.mxu0 0
      %2171 = vmatprep.subr.bf16.mxu0 0
      %2172 = vmatpush1.bf16.xpose.msra.mxu0 0
      %2173 = vmatprep.subr.bf16.mxu0 0
      %2174 = vmatpush1.bf16.xpose.msra.mxu0 0
      %2175 = vmatprep.subr.bf16.mxu0 0
      %2176 = vmatpush1.bf16.xpose.msra.mxu0 0
      %2177 = vmatprep.subr.bf16.mxu0 0
      %2178 = vmatpush1.bf16.xpose.msra.mxu0 0
      %2179 = vmatprep.subr.bf16.mxu0 0
      %2180 = vmatpush1.bf16.xpose.msra.mxu0 0
      %2181 = vmatprep.subr.bf16.mxu0 0
      %2182 = vmatpush1.bf16.xpose.msra.mxu0 0
      %2183 = vmatprep.mubr.bf16.mxu0 0
      %2184 = vmatmul.mubr.bf16.gmra.mrb[0].mxu0 %v2146
      %v2185 = vpop.f32.mrb[0].mxu0
      %v2186 = vadd.f32 0.0, %v2185
      %v2187 = vpop.f32.mrb[0].mxu0
      %v2188 = vpop.f32.mrb[0].mxu0
      %v2189 = vpop.f32.mrb[0].mxu0
      %2190 = vdwg.mxu0
      %v2192 = vsel %vm1178, %v944, 0
      %v2195 = vsel %vm1178, %v1056, 0
      %2197 = vmatprep.subr.bf16.mxu0 0
      %2198 = vmatpush1.bf16.xpose.msra.mxu0 %v2195
      %2199 = vmatprep.subr.bf16.mxu0 0
      %2200 = vmatpush1.bf16.xpose.msra.mxu0 0
      %2201 = vmatprep.subr.bf16.mxu0 0
      %2202 = vmatpush1.bf16.xpose.msra.mxu0 0
      %2203 = vmatprep.subr.bf16.mxu0 0
      %2204 = vmatpush1.bf16.xpose.msra.mxu0 0
      %2205 = vmatprep.subr.bf16.mxu0 0
      %2206 = vmatpush1.bf16.xpose.msra.mxu0 0
      %2207 = vmatprep.subr.bf16.mxu0 0
      %2208 = vmatpush1.bf16.xpose.msra.mxu0 0
      %2209 = vmatprep.subr.bf16.mxu0 0
      %2210 = vmatpush1.bf16.xpose.msra.mxu0 0
      %2211 = vmatprep.subr.bf16.mxu0 0
      %2212 = vmatpush1.bf16.xpose.msra.mxu0 0
      %2213 = vmatprep.subr.bf16.mxu0 0
      %2214 = vmatpush1.bf16.xpose.msra.mxu0 0
      %2215 = vmatprep.subr.bf16.mxu0 0
      %2216 = vmatpush1.bf16.xpose.msra.mxu0 0
      %2217 = vmatprep.subr.bf16.mxu0 0
      %2218 = vmatpush1.bf16.xpose.msra.mxu0 0
      %2219 = vmatprep.subr.bf16.mxu0 0
      %2220 = vmatpush1.bf16.xpose.msra.mxu0 0
      %2221 = vmatprep.subr.bf16.mxu0 0
      %2222 = vmatpush1.bf16.xpose.msra.mxu0 0
      %2223 = vmatprep.subr.bf16.mxu0 0
      %2224 = vmatpush1.bf16.xpose.msra.mxu0 0
      %2225 = vmatprep.subr.bf16.mxu0 0
      %2226 = vmatpush1.bf16.xpose.msra.mxu0 0
      %2227 = vmatprep.subr.bf16.mxu0 0
      %2228 = vmatpush1.bf16.xpose.msra.mxu0 0
      %2229 = vmatprep.mubr.bf16.mxu0 0
      %2230 = vmatmul.mubr.bf16.gmra.mrb[0].mxu0 %v2192
      %v2231 = vpop.f32.mrb[0].mxu0
      %v2232 = vadd.f32 0.0, %v2231
      %v2233 = vpop.f32.mrb[0].mxu0
      %v2234 = vpop.f32.mrb[0].mxu0
      %v2235 = vpop.f32.mrb[0].mxu0
      %2236 = vdwg.mxu0
      %v2238 = vsel %vm1178, %v945, 0
      %v2241 = vsel %vm1178, %v1057, 0
      %2243 = vmatprep.subr.bf16.mxu0 0
      %2244 = vmatpush1.bf16.xpose.msra.mxu0 %v2241
      %2245 = vmatprep.subr.bf16.mxu0 0
      %2246 = vmatpush1.bf16.xpose.msra.mxu0 0
      %2247 = vmatprep.subr.bf16.mxu0 0
      %2248 = vmatpush1.bf16.xpose.msra.mxu0 0
      %2249 = vmatprep.subr.bf16.mxu0 0
      %2250 = vmatpush1.bf16.xpose.msra.mxu0 0
      %2251 = vmatprep.subr.bf16.mxu0 0
      %2252 = vmatpush1.bf16.xpose.msra.mxu0 0
      %2253 = vmatprep.subr.bf16.mxu0 0
      %2254 = vmatpush1.bf16.xpose.msra.mxu0 0
      %2255 = vmatprep.subr.bf16.mxu0 0
      %2256 = vmatpush1.bf16.xpose.msra.mxu0 0
      %2257 = vmatprep.subr.bf16.mxu0 0
      %2258 = vmatpush1.bf16.xpose.msra.mxu0 0
      %2259 = vmatprep.subr.bf16.mxu0 0
      %2260 = vmatpush1.bf16.xpose.msra.mxu0 0
      %2261 = vmatprep.subr.bf16.mxu0 0
      %2262 = vmatpush1.bf16.xpose.msra.mxu0 0
      %2263 = vmatprep.subr.bf16.mxu0 0
      %2264 = vmatpush1.bf16.xpose.msra.mxu0 0
      %2265 = vmatprep.subr.bf16.mxu0 0
      %2266 = vmatpush1.bf16.xpose.msra.mxu0 0
      %2267 = vmatprep.subr.bf16.mxu0 0
      %2268 = vmatpush1.bf16.xpose.msra.mxu0 0
      %2269 = vmatprep.subr.bf16.mxu0 0
      %2270 = vmatpush1.bf16.xpose.msra.mxu0 0
      %2271 = vmatprep.subr.bf16.mxu0 0
      %2272 = vmatpush1.bf16.xpose.msra.mxu0 0
      %2273 = vmatprep.subr.bf16.mxu0 0
      %2274 = vmatpush1.bf16.xpose.msra.mxu0 0
      %2275 = vmatprep.mubr.bf16.mxu0 0
      %2276 = vmatmul.mubr.bf16.gmra.mrb[0].mxu0 %v2238
      %v2277 = vpop.f32.mrb[0].mxu0
      %v2278 = vadd.f32 0.0, %v2277
      %v2279 = vpop.f32.mrb[0].mxu0
      %v2280 = vpop.f32.mrb[0].mxu0
      %v2281 = vpop.f32.mrb[0].mxu0
      %2282 = vdwg.mxu0
      %v2284 = vsel %vm1178, %v946, 0
      %v2287 = vsel %vm1178, %v1058, 0
      %2289 = vmatprep.subr.bf16.mxu0 0
      %2290 = vmatpush1.bf16.xpose.msra.mxu0 %v2287
      %2291 = vmatprep.subr.bf16.mxu0 0
      %2292 = vmatpush1.bf16.xpose.msra.mxu0 0
      %2293 = vmatprep.subr.bf16.mxu0 0
      %2294 = vmatpush1.bf16.xpose.msra.mxu0 0
      %2295 = vmatprep.subr.bf16.mxu0 0
      %2296 = vmatpush1.bf16.xpose.msra.mxu0 0
      %2297 = vmatprep.subr.bf16.mxu0 0
      %2298 = vmatpush1.bf16.xpose.msra.mxu0 0
      %2299 = vmatprep.subr.bf16.mxu0 0
      %2300 = vmatpush1.bf16.xpose.msra.mxu0 0
      %2301 = vmatprep.subr.bf16.mxu0 0
      %2302 = vmatpush1.bf16.xpose.msra.mxu0 0
      %2303 = vmatprep.subr.bf16.mxu0 0
      %2304 = vmatpush1.bf16.xpose.msra.mxu0 0
      %2305 = vmatprep.subr.bf16.mxu0 0
      %2306 = vmatpush1.bf16.xpose.msra.mxu0 0
      %2307 = vmatprep.subr.bf16.mxu0 0
      %2308 = vmatpush1.bf16.xpose.msra.mxu0 0
      %2309 = vmatprep.subr.bf16.mxu0 0
      %2310 = vmatpush1.bf16.xpose.msra.mxu0 0
      %2311 = vmatprep.subr.bf16.mxu0 0
      %2312 = vmatpush1.bf16.xpose.msra.mxu0 0
      %2313 = vmatprep.subr.bf16.mxu0 0
      %2314 = vmatpush1.bf16.xpose.msra.mxu0 0
      %2315 = vmatprep.subr.bf16.mxu0 0
      %2316 = vmatpush1.bf16.xpose.msra.mxu0 0
      %2317 = vmatprep.subr.bf16.mxu0 0
      %2318 = vmatpush1.bf16.xpose.msra.mxu0 0
      %2319 = vmatprep.subr.bf16.mxu0 0
      %2320 = vmatpush1.bf16.xpose.msra.mxu0 0
      %2321 = vmatprep.mubr.bf16.mxu0 0
      %2322 = vmatmul.mubr.bf16.gmra.mrb[0].mxu0 %v2284
      %v2323 = vpop.f32.mrb[0].mxu0
      %v2324 = vadd.f32 0.0, %v2323
      %v2325 = vpop.f32.mrb[0].mxu0
      %v2326 = vpop.f32.mrb[0].mxu0
      %v2327 = vpop.f32.mrb[0].mxu0
      %2328 = vdwg.mxu0
      %v2330 = vsel %vm1178, %v947, 0
      %v2333 = vsel %vm1178, %v1059, 0
      %2335 = vmatprep.subr.bf16.mxu0 0
      %2336 = vmatpush1.bf16.xpose.msra.mxu0 %v2333
      %2337 = vmatprep.subr.bf16.mxu0 0
      %2338 = vmatpush1.bf16.xpose.msra.mxu0 0
      %2339 = vmatprep.subr.bf16.mxu0 0
      %2340 = vmatpush1.bf16.xpose.msra.mxu0 0
      %2341 = vmatprep.subr.bf16.mxu0 0
      %2342 = vmatpush1.bf16.xpose.msra.mxu0 0
      %2343 = vmatprep.subr.bf16.mxu0 0
      %2344 = vmatpush1.bf16.xpose.msra.mxu0 0
      %2345 = vmatprep.subr.bf16.mxu0 0
      %2346 = vmatpush1.bf16.xpose.msra.mxu0 0
      %2347 = vmatprep.subr.bf16.mxu0 0
      %2348 = vmatpush1.bf16.xpose.msra.mxu0 0
      %2349 = vmatprep.subr.bf16.mxu0 0
      %2350 = vmatpush1.bf16.xpose.msra.mxu0 0
      %2351 = vmatprep.subr.bf16.mxu0 0
      %2352 = vmatpush1.bf16.xpose.msra.mxu0 0
      %2353 = vmatprep.subr.bf16.mxu0 0
      %2354 = vmatpush1.bf16.xpose.msra.mxu0 0
      %2355 = vmatprep.subr.bf16.mxu0 0
      %2356 = vmatpush1.bf16.xpose.msra.mxu0 0
      %2357 = vmatprep.subr.bf16.mxu0 0
      %2358 = vmatpush1.bf16.xpose.msra.mxu0 0
      %2359 = vmatprep.subr.bf16.mxu0 0
      %2360 = vmatpush1.bf16.xpose.msra.mxu0 0
      %2361 = vmatprep.subr.bf16.mxu0 0
      %2362 = vmatpush1.bf16.xpose.msra.mxu0 0
      %2363 = vmatprep.subr.bf16.mxu0 0
      %2364 = vmatpush1.bf16.xpose.msra.mxu0 0
      %2365 = vmatprep.subr.bf16.mxu0 0
      %2366 = vmatpush1.bf16.xpose.msra.mxu0 0
      %2367 = vmatprep.mubr.bf16.mxu0 0
      %2368 = vmatmul.mubr.bf16.gmra.mrb[0].mxu0 %v2330
      %v2369 = vpop.f32.mrb[0].mxu0
      %v2370 = vadd.f32 0.0, %v2369
      %v2371 = vpop.f32.mrb[0].mxu0
      %v2372 = vpop.f32.mrb[0].mxu0
      %v2373 = vpop.f32.mrb[0].mxu0
      %2374 = vdwg.mxu0
      %v2376 = vsel %vm1178, %v948, 0
      %v2379 = vsel %vm1178, %v1060, 0
      %2381 = vmatprep.subr.bf16.mxu0 0
      %2382 = vmatpush1.bf16.xpose.msra.mxu0 %v2379
      %2383 = vmatprep.subr.bf16.mxu0 0
      %2384 = vmatpush1.bf16.xpose.msra.mxu0 0
      %2385 = vmatprep.subr.bf16.mxu0 0
      %2386 = vmatpush1.bf16.xpose.msra.mxu0 0
      %2387 = vmatprep.subr.bf16.mxu0 0
      %2388 = vmatpush1.bf16.xpose.msra.mxu0 0
      %2389 = vmatprep.subr.bf16.mxu0 0
      %2390 = vmatpush1.bf16.xpose.msra.mxu0 0
      %2391 = vmatprep.subr.bf16.mxu0 0
      %2392 = vmatpush1.bf16.xpose.msra.mxu0 0
      %2393 = vmatprep.subr.bf16.mxu0 0
      %2394 = vmatpush1.bf16.xpose.msra.mxu0 0
      %2395 = vmatprep.subr.bf16.mxu0 0
      %2396 = vmatpush1.bf16.xpose.msra.mxu0 0
      %2397 = vmatprep.subr.bf16.mxu0 0
      %2398 = vmatpush1.bf16.xpose.msra.mxu0 0
      %2399 = vmatprep.subr.bf16.mxu0 0
      %2400 = vmatpush1.bf16.xpose.msra.mxu0 0
      %2401 = vmatprep.subr.bf16.mxu0 0
      %2402 = vmatpush1.bf16.xpose.msra.mxu0 0
      %2403 = vmatprep.subr.bf16.mxu0 0
      %2404 = vmatpush1.bf16.xpose.msra.mxu0 0
      %2405 = vmatprep.subr.bf16.mxu0 0
      %2406 = vmatpush1.bf16.xpose.msra.mxu0 0
      %2407 = vmatprep.subr.bf16.mxu0 0
      %2408 = vmatpush1.bf16.xpose.msra.mxu0 0
      %2409 = vmatprep.subr.bf16.mxu0 0
      %2410 = vmatpush1.bf16.xpose.msra.mxu0 0
      %2411 = vmatprep.subr.bf16.mxu0 0
      %2412 = vmatpush1.bf16.xpose.msra.mxu0 0
      %2413 = vmatprep.mubr.bf16.mxu0 0
      %2414 = vmatmul.mubr.bf16.gmra.mrb[0].mxu0 %v2376
      %v2415 = vpop.f32.mrb[0].mxu0
      %v2416 = vadd.f32 0.0, %v2415
      %v2417 = vpop.f32.mrb[0].mxu0
      %v2418 = vpop.f32.mrb[0].mxu0
      %v2419 = vpop.f32.mrb[0].mxu0
      %2420 = vdwg.mxu0
      %v2422 = vsel %vm1178, %v949, 0
      %v2425 = vsel %vm1178, %v1061, 0
      %2427 = vmatprep.subr.bf16.mxu0 0
      %2428 = vmatpush1.bf16.xpose.msra.mxu0 %v2425
      %2429 = vmatprep.subr.bf16.mxu0 0
      %2430 = vmatpush1.bf16.xpose.msra.mxu0 0
      %2431 = vmatprep.subr.bf16.mxu0 0
      %2432 = vmatpush1.bf16.xpose.msra.mxu0 0
      %2433 = vmatprep.subr.bf16.mxu0 0
      %2434 = vmatpush1.bf16.xpose.msra.mxu0 0
      %2435 = vmatprep.subr.bf16.mxu0 0
      %2436 = vmatpush1.bf16.xpose.msra.mxu0 0
      %2437 = vmatprep.subr.bf16.mxu0 0
      %2438 = vmatpush1.bf16.xpose.msra.mxu0 0
      %2439 = vmatprep.subr.bf16.mxu0 0
      %2440 = vmatpush1.bf16.xpose.msra.mxu0 0
      %2441 = vmatprep.subr.bf16.mxu0 0
      %2442 = vmatpush1.bf16.xpose.msra.mxu0 0
      %2443 = vmatprep.subr.bf16.mxu0 0
      %2444 = vmatpush1.bf16.xpose.msra.mxu0 0
      %2445 = vmatprep.subr.bf16.mxu0 0
      %2446 = vmatpush1.bf16.xpose.msra.mxu0 0
      %2447 = vmatprep.subr.bf16.mxu0 0
      %2448 = vmatpush1.bf16.xpose.msra.mxu0 0
      %2449 = vmatprep.subr.bf16.mxu0 0
      %2450 = vmatpush1.bf16.xpose.msra.mxu0 0
      %2451 = vmatprep.subr.bf16.mxu0 0
      %2452 = vmatpush1.bf16.xpose.msra.mxu0 0
      %2453 = vmatprep.subr.bf16.mxu0 0
      %2454 = vmatpush1.bf16.xpose.msra.mxu0 0
      %2455 = vmatprep.subr.bf16.mxu0 0
      %2456 = vmatpush1.bf16.xpose.msra.mxu0 0
      %2457 = vmatprep.subr.bf16.mxu0 0
      %2458 = vmatpush1.bf16.xpose.msra.mxu0 0
      %2459 = vmatprep.mubr.bf16.mxu0 0
      %2460 = vmatmul.mubr.bf16.gmra.mrb[0].mxu0 %v2422
      %v2461 = vpop.f32.mrb[0].mxu0
      %v2462 = vadd.f32 0.0, %v2461
      %v2463 = vpop.f32.mrb[0].mxu0
      %v2464 = vpop.f32.mrb[0].mxu0
      %v2465 = vpop.f32.mrb[0].mxu0
      %2466 = vdwg.mxu0
      %v2468 = vsel %vm1178, %v950, 0
      %v2471 = vsel %vm1178, %v1062, 0
      %2473 = vmatprep.subr.bf16.mxu0 0
      %2474 = vmatpush1.bf16.xpose.msra.mxu0 %v2471
      %2475 = vmatprep.subr.bf16.mxu0 0
      %2476 = vmatpush1.bf16.xpose.msra.mxu0 0
      %2477 = vmatprep.subr.bf16.mxu0 0
      %2478 = vmatpush1.bf16.xpose.msra.mxu0 0
      %2479 = vmatprep.subr.bf16.mxu0 0
      %2480 = vmatpush1.bf16.xpose.msra.mxu0 0
      %2481 = vmatprep.subr.bf16.mxu0 0
      %2482 = vmatpush1.bf16.xpose.msra.mxu0 0
      %2483 = vmatprep.subr.bf16.mxu0 0
      %2484 = vmatpush1.bf16.xpose.msra.mxu0 0
      %2485 = vmatprep.subr.bf16.mxu0 0
      %2486 = vmatpush1.bf16.xpose.msra.mxu0 0
      %2487 = vmatprep.subr.bf16.mxu0 0
      %2488 = vmatpush1.bf16.xpose.msra.mxu0 0
      %2489 = vmatprep.subr.bf16.mxu0 0
      %2490 = vmatpush1.bf16.xpose.msra.mxu0 0
      %2491 = vmatprep.subr.bf16.mxu0 0
      %2492 = vmatpush1.bf16.xpose.msra.mxu0 0
      %2493 = vmatprep.subr.bf16.mxu0 0
      %2494 = vmatpush1.bf16.xpose.msra.mxu0 0
      %2495 = vmatprep.subr.bf16.mxu0 0
      %2496 = vmatpush1.bf16.xpose.msra.mxu0 0
      %2497 = vmatprep.subr.bf16.mxu0 0
      %2498 = vmatpush1.bf16.xpose.msra.mxu0 0
      %2499 = vmatprep.subr.bf16.mxu0 0
      %2500 = vmatpush1.bf16.xpose.msra.mxu0 0
      %2501 = vmatprep.subr.bf16.mxu0 0
      %2502 = vmatpush1.bf16.xpose.msra.mxu0 0
      %2503 = vmatprep.subr.bf16.mxu0 0
      %2504 = vmatpush1.bf16.xpose.msra.mxu0 0
      %2505 = vmatprep.mubr.bf16.mxu0 0
      %2506 = vmatmul.mubr.bf16.gmra.mrb[0].mxu0 %v2468
      %v2507 = vpop.f32.mrb[0].mxu0
      %v2508 = vadd.f32 0.0, %v2507
      %v2509 = vpop.f32.mrb[0].mxu0
      %v2510 = vpop.f32.mrb[0].mxu0
      %v2511 = vpop.f32.mrb[0].mxu0
      %2512 = vdwg.mxu0
      %v2514 = vsel %vm1178, %v951, 0
      %v2517 = vsel %vm1178, %v1063, 0
      %2519 = vmatprep.subr.bf16.mxu0 0
      %2520 = vmatpush1.bf16.xpose.msra.mxu0 %v2517
      %2521 = vmatprep.subr.bf16.mxu0 0
      %2522 = vmatpush1.bf16.xpose.msra.mxu0 0
      %2523 = vmatprep.subr.bf16.mxu0 0
      %2524 = vmatpush1.bf16.xpose.msra.mxu0 0
      %2525 = vmatprep.subr.bf16.mxu0 0
      %2526 = vmatpush1.bf16.xpose.msra.mxu0 0
      %2527 = vmatprep.subr.bf16.mxu0 0
      %2528 = vmatpush1.bf16.xpose.msra.mxu0 0
      %2529 = vmatprep.subr.bf16.mxu0 0
      %2530 = vmatpush1.bf16.xpose.msra.mxu0 0
      %2531 = vmatprep.subr.bf16.mxu0 0
      %2532 = vmatpush1.bf16.xpose.msra.mxu0 0
      %2533 = vmatprep.subr.bf16.mxu0 0
      %2534 = vmatpush1.bf16.xpose.msra.mxu0 0
      %2535 = vmatprep.subr.bf16.mxu0 0
      %2536 = vmatpush1.bf16.xpose.msra.mxu0 0
      %2537 = vmatprep.subr.bf16.mxu0 0
      %2538 = vmatpush1.bf16.xpose.msra.mxu0 0
      %2539 = vmatprep.subr.bf16.mxu0 0
      %2540 = vmatpush1.bf16.xpose.msra.mxu0 0
      %2541 = vmatprep.subr.bf16.mxu0 0
      %2542 = vmatpush1.bf16.xpose.msra.mxu0 0
      %2543 = vmatprep.subr.bf16.mxu0 0
      %2544 = vmatpush1.bf16.xpose.msra.mxu0 0
      %2545 = vmatprep.subr.bf16.mxu0 0
      %2546 = vmatpush1.bf16.xpose.msra.mxu0 0
      %2547 = vmatprep.subr.bf16.mxu0 0
      %2548 = vmatpush1.bf16.xpose.msra.mxu0 0
      %2549 = vmatprep.subr.bf16.mxu0 0
      %2550 = vmatpush1.bf16.xpose.msra.mxu0 0
      %2551 = vmatprep.mubr.bf16.mxu0 0
      %2552 = vmatmul.mubr.bf16.gmra.mrb[0].mxu0 %v2514
      %v2553 = vpop.f32.mrb[0].mxu0
      %v2554 = vadd.f32 0.0, %v2553
      %v2555 = vpop.f32.mrb[0].mxu0
      %v2556 = vpop.f32.mrb[0].mxu0
      %v2557 = vpop.f32.mrb[0].mxu0
      %2558 = vdwg.mxu0
      %v2560 = vsel %vm1178, %v952, 0
      %v2563 = vsel %vm1178, %v1064, 0
      %2565 = vmatprep.subr.bf16.mxu0 0
      %2566 = vmatpush1.bf16.xpose.msra.mxu0 %v2563
      %2567 = vmatprep.subr.bf16.mxu0 0
      %2568 = vmatpush1.bf16.xpose.msra.mxu0 0
      %2569 = vmatprep.subr.bf16.mxu0 0
      %2570 = vmatpush1.bf16.xpose.msra.mxu0 0
      %2571 = vmatprep.subr.bf16.mxu0 0
      %2572 = vmatpush1.bf16.xpose.msra.mxu0 0
      %2573 = vmatprep.subr.bf16.mxu0 0
      %2574 = vmatpush1.bf16.xpose.msra.mxu0 0
      %2575 = vmatprep.subr.bf16.mxu0 0
      %2576 = vmatpush1.bf16.xpose.msra.mxu0 0
      %2577 = vmatprep.subr.bf16.mxu0 0
      %2578 = vmatpush1.bf16.xpose.msra.mxu0 0
      %2579 = vmatprep.subr.bf16.mxu0 0
      %2580 = vmatpush1.bf16.xpose.msra.mxu0 0
      %2581 = vmatprep.subr.bf16.mxu0 0
      %2582 = vmatpush1.bf16.xpose.msra.mxu0 0
      %2583 = vmatprep.subr.bf16.mxu0 0
      %2584 = vmatpush1.bf16.xpose.msra.mxu0 0
      %2585 = vmatprep.subr.bf16.mxu0 0
      %2586 = vmatpush1.bf16.xpose.msra.mxu0 0
      %2587 = vmatprep.subr.bf16.mxu0 0
      %2588 = vmatpush1.bf16.xpose.msra.mxu0 0
      %2589 = vmatprep.subr.bf16.mxu0 0
      %2590 = vmatpush1.bf16.xpose.msra.mxu0 0
      %2591 = vmatprep.subr.bf16.mxu0 0
      %2592 = vmatpush1.bf16.xpose.msra.mxu0 0
      %2593 = vmatprep.subr.bf16.mxu0 0
      %2594 = vmatpush1.bf16.xpose.msra.mxu0 0
      %2595 = vmatprep.subr.bf16.mxu0 0
      %2596 = vmatpush1.bf16.xpose.msra.mxu0 0
      %2597 = vmatprep.mubr.bf16.mxu0 0
      %2598 = vmatmul.mubr.bf16.gmra.mrb[0].mxu0 %v2560
      %v2599 = vpop.f32.mrb[0].mxu0
      %v2600 = vadd.f32 0.0, %v2599
      %v2601 = vpop.f32.mrb[0].mxu0
      %v2602 = vpop.f32.mrb[0].mxu0
      %v2603 = vpop.f32.mrb[0].mxu0
      %2604 = vdwg.mxu0
      %v2606 = vsel %vm1178, %v953, 0
      %v2609 = vsel %vm1178, %v1065, 0
      %2611 = vmatprep.subr.bf16.mxu0 0
      %2612 = vmatpush1.bf16.xpose.msra.mxu0 %v2609
      %2613 = vmatprep.subr.bf16.mxu0 0
      %2614 = vmatpush1.bf16.xpose.msra.mxu0 0
      %2615 = vmatprep.subr.bf16.mxu0 0
      %2616 = vmatpush1.bf16.xpose.msra.mxu0 0
      %2617 = vmatprep.subr.bf16.mxu0 0
      %2618 = vmatpush1.bf16.xpose.msra.mxu0 0
      %2619 = vmatprep.subr.bf16.mxu0 0
      %2620 = vmatpush1.bf16.xpose.msra.mxu0 0
      %2621 = vmatprep.subr.bf16.mxu0 0
      %2622 = vmatpush1.bf16.xpose.msra.mxu0 0
      %2623 = vmatprep.subr.bf16.mxu0 0
      %2624 = vmatpush1.bf16.xpose.msra.mxu0 0
      %2625 = vmatprep.subr.bf16.mxu0 0
      %2626 = vmatpush1.bf16.xpose.msra.mxu0 0
      %2627 = vmatprep.subr.bf16.mxu0 0
      %2628 = vmatpush1.bf16.xpose.msra.mxu0 0
      %2629 = vmatprep.subr.bf16.mxu0 0
      %2630 = vmatpush1.bf16.xpose.msra.mxu0 0
      %2631 = vmatprep.subr.bf16.mxu0 0
      %2632 = vmatpush1.bf16.xpose.msra.mxu0 0
      %2633 = vmatprep.subr.bf16.mxu0 0
      %2634 = vmatpush1.bf16.xpose.msra.mxu0 0
      %2635 = vmatprep.subr.bf16.mxu0 0
      %2636 = vmatpush1.bf16.xpose.msra.mxu0 0
      %2637 = vmatprep.subr.bf16.mxu0 0
      %2638 = vmatpush1.bf16.xpose.msra.mxu0 0
      %2639 = vmatprep.subr.bf16.mxu0 0
      %2640 = vmatpush1.bf16.xpose.msra.mxu0 0
      %2641 = vmatprep.subr.bf16.mxu0 0
      %2642 = vmatpush1.bf16.xpose.msra.mxu0 0
      %2643 = vmatprep.mubr.bf16.mxu0 0
      %2644 = vmatmul.mubr.bf16.gmra.mrb[0].mxu0 %v2606
      %v2645 = vpop.f32.mrb[0].mxu0
      %v2646 = vadd.f32 0.0, %v2645
      %v2647 = vpop.f32.mrb[0].mxu0
      %v2648 = vpop.f32.mrb[0].mxu0
      %v2649 = vpop.f32.mrb[0].mxu0
      %2650 = vdwg.mxu0
      %v2651 = vld [vmem:[%s1] sm:$0xff]
      %v2652 = vld [vmem:[%s1 + $0x8] sm:$0xff]
      %v2653 = vld [vmem:[%s1 + $0x10] sm:$0xff]
      %v2654 = vld [vmem:[%s1 + $0x18] sm:$0xff]
      %v2655 = vadd.f32 %v1220, %v2651
      %v2656 = vadd.f32 %v1266, %v2651
      %v2657 = vadd.f32 %v1312, %v2651
      %v2658 = vadd.f32 %v1358, %v2651
      %v2659 = vadd.f32 %v1404, %v2651
      %v2660 = vadd.f32 %v1450, %v2651
      %v2661 = vadd.f32 %v1496, %v2651
      %v2662 = vadd.f32 %v1542, %v2651
      %v2663 = vadd.f32 %v1588, %v2652
      %v2664 = vadd.f32 %v1634, %v2652
      %v2665 = vadd.f32 %v1680, %v2652
      %v2666 = vadd.f32 %v1726, %v2652
      %v2667 = vadd.f32 %v1772, %v2652
      %v2668 = vadd.f32 %v1818, %v2652
      %v2669 = vadd.f32 %v1864, %v2652
      %v2670 = vadd.f32 %v1910, %v2652
      %v2671 = vadd.f32 %v1956, %v2653
      %v2672 = vadd.f32 %v2002, %v2653
      %v2673 = vadd.f32 %v2048, %v2653
      %v2674 = vadd.f32 %v2094, %v2653
      %v2675 = vadd.f32 %v2140, %v2653
      %v2676 = vadd.f32 %v2186, %v2653
      %v2677 = vadd.f32 %v2232, %v2653
      %v2678 = vadd.f32 %v2278, %v2653
      %v2679 = vadd.f32 %v2324, %v2654
      %v2680 = vadd.f32 %v2370, %v2654
      %v2681 = vadd.f32 %v2416, %v2654
      %v2682 = vadd.f32 %v2462, %v2654
      %v2683 = vadd.f32 %v2508, %v2654
      %v2684 = vadd.f32 %v2554, %v2654
      %v2685 = vadd.f32 %v2600, %v2654
      %v2686 = vadd.f32 %v2646, %v2654
      %v2687 = vsel %vm1178, %v2655, -inf
      %2688 = vmax.xlane.f32.xlu0 %v2687
      %v2689 = vpop.xlane.xlu0 %2688
      %v2690 = vsel %vm1178, %v2656, -inf
      %2691 = vmax.xlane.f32.xlu0 %v2690
      %v2692 = vpop.xlane.xlu0 %2691
      %v2693 = vsel %vm1178, %v2657, -inf
      %2694 = vmax.xlane.f32.xlu0 %v2693
      %v2695 = vpop.xlane.xlu0 %2694
      %v2696 = vsel %vm1178, %v2658, -inf
      %2697 = vmax.xlane.f32.xlu0 %v2696
      %v2698 = vpop.xlane.xlu0 %2697
      %v2699 = vsel %vm1178, %v2659, -inf
      %2700 = vmax.xlane.f32.xlu0 %v2699
      %v2701 = vpop.xlane.xlu0 %2700
      %v2702 = vsel %vm1178, %v2660, -inf
      %2703 = vmax.xlane.f32.xlu0 %v2702
      %v2704 = vpop.xlane.xlu0 %2703
      %v2705 = vsel %vm1178, %v2661, -inf
      %2706 = vmax.xlane.f32.xlu0 %v2705
      %v2707 = vpop.xlane.xlu0 %2706
      %v2708 = vsel %vm1178, %v2662, -inf
      %2709 = vmax.xlane.f32.xlu0 %v2708
      %v2710 = vpop.xlane.xlu0 %2709
      %v2711 = vsel %vm1178, %v2663, -inf
      %2712 = vmax.xlane.f32.xlu0 %v2711
      %v2713 = vpop.xlane.xlu0 %2712
      %v2714 = vsel %vm1178, %v2664, -inf
      %2715 = vmax.xlane.f32.xlu0 %v2714
      %v2716 = vpop.xlane.xlu0 %2715
      %v2717 = vsel %vm1178, %v2665, -inf
      %2718 = vmax.xlane.f32.xlu0 %v2717
      %v2719 = vpop.xlane.xlu0 %2718
      %v2720 = vsel %vm1178, %v2666, -inf
      %2721 = vmax.xlane.f32.xlu0 %v2720
      %v2722 = vpop.xlane.xlu0 %2721
      %v2723 = vsel %vm1178, %v2667, -inf
      %2724 = vmax.xlane.f32.xlu0 %v2723
      %v2725 = vpop.xlane.xlu0 %2724
      %v2726 = vsel %vm1178, %v2668, -inf
      %2727 = vmax.xlane.f32.xlu0 %v2726
      %v2728 = vpop.xlane.xlu0 %2727
      %v2729 = vsel %vm1178, %v2669, -inf
      %2730 = vmax.xlane.f32.xlu0 %v2729
      %v2731 = vpop.xlane.xlu0 %2730
      %v2732 = vsel %vm1178, %v2670, -inf
      %2733 = vmax.xlane.f32.xlu0 %v2732
      %v2734 = vpop.xlane.xlu0 %2733
      %v2735 = vsel %vm1178, %v2671, -inf
      %2736 = vmax.xlane.f32.xlu0 %v2735
      %v2737 = vpop.xlane.xlu0 %2736
      %v2738 = vsel %vm1178, %v2672, -inf
      %2739 = vmax.xlane.f32.xlu0 %v2738
      %v2740 = vpop.xlane.xlu0 %2739
      %v2741 = vsel %vm1178, %v2673, -inf
      %2742 = vmax.xlane.f32.xlu0 %v2741
      %v2743 = vpop.xlane.xlu0 %2742
      %v2744 = vsel %vm1178, %v2674, -inf
      %2745 = vmax.xlane.f32.xlu0 %v2744
      %v2746 = vpop.xlane.xlu0 %2745
      %v2747 = vsel %vm1178, %v2675, -inf
      %2748 = vmax.xlane.f32.xlu0 %v2747
      %v2749 = vpop.xlane.xlu0 %2748
      %v2750 = vsel %vm1178, %v2676, -inf
      %2751 = vmax.xlane.f32.xlu0 %v2750
      %v2752 = vpop.xlane.xlu0 %2751
      %v2753 = vsel %vm1178, %v2677, -inf
      %2754 = vmax.xlane.f32.xlu0 %v2753
      %v2755 = vpop.xlane.xlu0 %2754
      %v2756 = vsel %vm1178, %v2678, -inf
      %2757 = vmax.xlane.f32.xlu0 %v2756
      %v2758 = vpop.xlane.xlu0 %2757
      %v2759 = vsel %vm1178, %v2679, -inf
      %2760 = vmax.xlane.f32.xlu0 %v2759
      %v2761 = vpop.xlane.xlu0 %2760
      %v2762 = vsel %vm1178, %v2680, -inf
      %2763 = vmax.xlane.f32.xlu0 %v2762
      %v2764 = vpop.xlane.xlu0 %2763
      %v2765 = vsel %vm1178, %v2681, -inf
      %2766 = vmax.xlane.f32.xlu0 %v2765
      %v2767 = vpop.xlane.xlu0 %2766
      %v2768 = vsel %vm1178, %v2682, -inf
      %2769 = vmax.xlane.f32.xlu0 %v2768
      %v2770 = vpop.xlane.xlu0 %2769
      %v2771 = vsel %vm1178, %v2683, -inf
      %2772 = vmax.xlane.f32.xlu0 %v2771
      %v2773 = vpop.xlane.xlu0 %2772
      %v2774 = vsel %vm1178, %v2684, -inf
      %2775 = vmax.xlane.f32.xlu0 %v2774
      %v2776 = vpop.xlane.xlu0 %2775
      %v2777 = vsel %vm1178, %v2685, -inf
      %2778 = vmax.xlane.f32.xlu0 %v2777
      %v2779 = vpop.xlane.xlu0 %2778
      %v2780 = vsel %vm1178, %v2686, -inf
      %2781 = vmax.xlane.f32.xlu0 %v2780
      %v2782 = vpop.xlane.xlu0 %2781
      %v2783 = vsub.f32 %v2655, %v2689
      %v2784 = vsub.f32 %v2656, %v2692
      %v2785 = vsub.f32 %v2657, %v2695
      %v2786 = vsub.f32 %v2658, %v2698
      %v2787 = vsub.f32 %v2659, %v2701
      %v2788 = vsub.f32 %v2660, %v2704
      %v2789 = vsub.f32 %v2661, %v2707
      %v2790 = vsub.f32 %v2662, %v2710
      %v2791 = vsub.f32 %v2663, %v2713
      %v2792 = vsub.f32 %v2664, %v2716
      %v2793 = vsub.f32 %v2665, %v2719
      %v2794 = vsub.f32 %v2666, %v2722
      %v2795 = vsub.f32 %v2667, %v2725
      %v2796 = vsub.f32 %v2668, %v2728
      %v2797 = vsub.f32 %v2669, %v2731
      %v2798 = vsub.f32 %v2670, %v2734
      %v2799 = vsub.f32 %v2671, %v2737
      %v2800 = vsub.f32 %v2672, %v2740
      %v2801 = vsub.f32 %v2673, %v2743
      %v2802 = vsub.f32 %v2674, %v2746
      %v2803 = vsub.f32 %v2675, %v2749
      %v2804 = vsub.f32 %v2676, %v2752
      %v2805 = vsub.f32 %v2677, %v2755
      %v2806 = vsub.f32 %v2678, %v2758
      %v2807 = vsub.f32 %v2679, %v2761
      %v2808 = vsub.f32 %v2680, %v2764
      %v2809 = vsub.f32 %v2681, %v2767
      %v2810 = vsub.f32 %v2682, %v2770
      %v2811 = vsub.f32 %v2683, %v2773
      %v2812 = vsub.f32 %v2684, %v2776
      %v2813 = vsub.f32 %v2685, %v2779
      %v2814 = vsub.f32 %v2686, %v2782
      %v2815 = vmul.f32 %v2783, 1.442695
      %v2816 = vpow.pop %v2815
      %v2817 = vmul.f32 %v2784, 1.442695
      %v2818 = vpow.pop %v2817
      %v2819 = vmul.f32 %v2785, 1.442695
      %v2820 = vpow.pop %v2819
      %v2821 = vmul.f32 %v2786, 1.442695
      %v2822 = vpow.pop %v2821
      %v2823 = vmul.f32 %v2787, 1.442695
      %v2824 = vpow.pop %v2823
      %v2825 = vmul.f32 %v2788, 1.442695
      %v2826 = vpow.pop %v2825
      %v2827 = vmul.f32 %v2789, 1.442695
      %v2828 = vpow.pop %v2827
      %v2829 = vmul.f32 %v2790, 1.442695
      %v2830 = vpow.pop %v2829
      %v2831 = vmul.f32 %v2791, 1.442695
      %v2832 = vpow.pop %v2831
      %v2833 = vmul.f32 %v2792, 1.442695
      %v2834 = vpow.pop %v2833
      %v2835 = vmul.f32 %v2793, 1.442695
      %v2836 = vpow.pop %v2835
      %v2837 = vmul.f32 %v2794, 1.442695
      %v2838 = vpow.pop %v2837
      %v2839 = vmul.f32 %v2795, 1.442695
      %v2840 = vpow.pop %v2839
      %v2841 = vmul.f32 %v2796, 1.442695
      %v2842 = vpow.pop %v2841
      %v2843 = vmul.f32 %v2797, 1.442695
      %v2844 = vpow.pop %v2843
      %v2845 = vmul.f32 %v2798, 1.442695
      %v2846 = vpow.pop %v2845
      %v2847 = vmul.f32 %v2799, 1.442695
      %v2848 = vpow.pop %v2847
      %v2849 = vmul.f32 %v2800, 1.442695
      %v2850 = vpow.pop %v2849
      %v2851 = vmul.f32 %v2801, 1.442695
      %v2852 = vpow.pop %v2851
      %v2853 = vmul.f32 %v2802, 1.442695
      %v2854 = vpow.pop %v2853
      %v2855 = vmul.f32 %v2803, 1.442695
      %v2856 = vpow.pop %v2855
      %v2857 = vmul.f32 %v2804, 1.442695
      %v2858 = vpow.pop %v2857
      %v2859 = vmul.f32 %v2805, 1.442695
      %v2860 = vpow.pop %v2859
      %v2861 = vmul.f32 %v2806, 1.442695
      %v2862 = vpow.pop %v2861
      %v2863 = vmul.f32 %v2807, 1.442695
      %v2864 = vpow.pop %v2863
      %v2865 = vmul.f32 %v2808, 1.442695
      %v2866 = vpow.pop %v2865
      %v2867 = vmul.f32 %v2809, 1.442695
      %v2868 = vpow.pop %v2867
      %v2869 = vmul.f32 %v2810, 1.442695
      %v2870 = vpow.pop %v2869
      %v2871 = vmul.f32 %v2811, 1.442695
      %v2872 = vpow.pop %v2871
      %v2873 = vmul.f32 %v2812, 1.442695
      %v2874 = vpow.pop %v2873
      %v2875 = vmul.f32 %v2813, 1.442695
      %v2876 = vpow.pop %v2875
      %v2877 = vmul.f32 %v2814, 1.442695
      %v2878 = vpow.pop %v2877
      %v2879 = vsel %vm1178, %v2816, 0.0
      %2880 = vadd.xlane.f32.xlu0 %v2879
      %v2881 = vpop.xlane.xlu0 %2880
      %v2882 = vsel %vm1178, %v2818, 0.0
      %2883 = vadd.xlane.f32.xlu0 %v2882
      %v2884 = vpop.xlane.xlu0 %2883
      %v2885 = vsel %vm1178, %v2820, 0.0
      %2886 = vadd.xlane.f32.xlu0 %v2885
      %v2887 = vpop.xlane.xlu0 %2886
      %v2888 = vsel %vm1178, %v2822, 0.0
      %2889 = vadd.xlane.f32.xlu0 %v2888
      %v2890 = vpop.xlane.xlu0 %2889
      %v2891 = vsel %vm1178, %v2824, 0.0
      %2892 = vadd.xlane.f32.xlu0 %v2891
      %v2893 = vpop.xlane.xlu0 %2892
      %v2894 = vsel %vm1178, %v2826, 0.0
      %2895 = vadd.xlane.f32.xlu0 %v2894
      %v2896 = vpop.xlane.xlu0 %2895
      %v2897 = vsel %vm1178, %v2828, 0.0
      %2898 = vadd.xlane.f32.xlu0 %v2897
      %v2899 = vpop.xlane.xlu0 %2898
      %v2900 = vsel %vm1178, %v2830, 0.0
      %2901 = vadd.xlane.f32.xlu0 %v2900
      %v2902 = vpop.xlane.xlu0 %2901
      %v2903 = vsel %vm1178, %v2832, 0.0
      %2904 = vadd.xlane.f32.xlu0 %v2903
      %v2905 = vpop.xlane.xlu0 %2904
      %v2906 = vsel %vm1178, %v2834, 0.0
      %2907 = vadd.xlane.f32.xlu0 %v2906
      %v2908 = vpop.xlane.xlu0 %2907
      %v2909 = vsel %vm1178, %v2836, 0.0
      %2910 = vadd.xlane.f32.xlu0 %v2909
      %v2911 = vpop.xlane.xlu0 %2910
      %v2912 = vsel %vm1178, %v2838, 0.0
      %2913 = vadd.xlane.f32.xlu0 %v2912
      %v2914 = vpop.xlane.xlu0 %2913
      %v2915 = vsel %vm1178, %v2840, 0.0
      %2916 = vadd.xlane.f32.xlu0 %v2915
      %v2917 = vpop.xlane.xlu0 %2916
      %v2918 = vsel %vm1178, %v2842, 0.0
      %2919 = vadd.xlane.f32.xlu0 %v2918
      %v2920 = vpop.xlane.xlu0 %2919
      %v2921 = vsel %vm1178, %v2844, 0.0
      %2922 = vadd.xlane.f32.xlu0 %v2921
      %v2923 = vpop.xlane.xlu0 %2922
      %v2924 = vsel %vm1178, %v2846, 0.0
      %2925 = vadd.xlane.f32.xlu0 %v2924
      %v2926 = vpop.xlane.xlu0 %2925
      %v2927 = vsel %vm1178, %v2848, 0.0
      %2928 = vadd.xlane.f32.xlu0 %v2927
      %v2929 = vpop.xlane.xlu0 %2928
      %v2930 = vsel %vm1178, %v2850, 0.0
      %2931 = vadd.xlane.f32.xlu0 %v2930
      %v2932 = vpop.xlane.xlu0 %2931
      %v2933 = vsel %vm1178, %v2852, 0.0
      %2934 = vadd.xlane.f32.xlu0 %v2933
      %v2935 = vpop.xlane.xlu0 %2934
      %v2936 = vsel %vm1178, %v2854, 0.0
      %2937 = vadd.xlane.f32.xlu0 %v2936
      %v2938 = vpop.xlane.xlu0 %2937
      %v2939 = vsel %vm1178, %v2856, 0.0
      %2940 = vadd.xlane.f32.xlu0 %v2939
      %v2941 = vpop.xlane.xlu0 %2940
      %v2942 = vsel %vm1178, %v2858, 0.0
      %2943 = vadd.xlane.f32.xlu0 %v2942
      %v2944 = vpop.xlane.xlu0 %2943
      %v2945 = vsel %vm1178, %v2860, 0.0
      %2946 = vadd.xlane.f32.xlu0 %v2945
      %v2947 = vpop.xlane.xlu0 %2946
      %v2948 = vsel %vm1178, %v2862, 0.0
      %2949 = vadd.xlane.f32.xlu0 %v2948
      %v2950 = vpop.xlane.xlu0 %2949
      %v2951 = vsel %vm1178, %v2864, 0.0
      %2952 = vadd.xlane.f32.xlu0 %v2951
      %v2953 = vpop.xlane.xlu0 %2952
      %v2954 = vsel %vm1178, %v2866, 0.0
      %2955 = vadd.xlane.f32.xlu0 %v2954
      %v2956 = vpop.xlane.xlu0 %2955
      %v2957 = vsel %vm1178, %v2868, 0.0
      %2958 = vadd.xlane.f32.xlu0 %v2957
      %v2959 = vpop.xlane.xlu0 %2958
      %v2960 = vsel %vm1178, %v2870, 0.0
      %2961 = vadd.xlane.f32.xlu0 %v2960
      %v2962 = vpop.xlane.xlu0 %2961
      %v2963 = vsel %vm1178, %v2872, 0.0
      %2964 = vadd.xlane.f32.xlu0 %v2963
      %v2965 = vpop.xlane.xlu0 %2964
      %v2966 = vsel %vm1178, %v2874, 0.0
      %2967 = vadd.xlane.f32.xlu0 %v2966
      %v2968 = vpop.xlane.xlu0 %2967
      %v2969 = vsel %vm1178, %v2876, 0.0
      %2970 = vadd.xlane.f32.xlu0 %v2969
      %v2971 = vpop.xlane.xlu0 %2970
      %v2972 = vsel %vm1178, %v2878, 0.0
      %2973 = vadd.xlane.f32.xlu0 %v2972
      %v2974 = vpop.xlane.xlu0 %2973
      %v2975 = vrcp.pop %v2881
      %v2976 = vrcp.pop %v2884
      %v2977 = vrcp.pop %v2887
      %v2978 = vrcp.pop %v2890
      %v2979 = vrcp.pop %v2893
      %v2980 = vrcp.pop %v2896
      %v2981 = vrcp.pop %v2899
      %v2982 = vrcp.pop %v2902
      %v2983 = vrcp.pop %v2905
      %v2984 = vrcp.pop %v2908
      %v2985 = vrcp.pop %v2911
      %v2986 = vrcp.pop %v2914
      %v2987 = vrcp.pop %v2917
      %v2988 = vrcp.pop %v2920
      %v2989 = vrcp.pop %v2923
      %v2990 = vrcp.pop %v2926
      %v2991 = vrcp.pop %v2929
      %v2992 = vrcp.pop %v2932
      %v2993 = vrcp.pop %v2935
      %v2994 = vrcp.pop %v2938
      %v2995 = vrcp.pop %v2941
      %v2996 = vrcp.pop %v2944
      %v2997 = vrcp.pop %v2947
      %v2998 = vrcp.pop %v2950
      %v2999 = vrcp.pop %v2953
      %v3000 = vrcp.pop %v2956
      %v3001 = vrcp.pop %v2959
      %v3002 = vrcp.pop %v2962
      %v3003 = vrcp.pop %v2965
      %v3004 = vrcp.pop %v2968
      %v3005 = vrcp.pop %v2971
      %v3006 = vrcp.pop %v2974
      %v3007 = vmul.f32 %v2816, %v2975
      %v3008 = vmul.f32 %v2818, %v2976
      %v3009 = vmul.f32 %v2820, %v2977
      %v3010 = vmul.f32 %v2822, %v2978
      %v3011 = vmul.f32 %v2824, %v2979
      %v3012 = vmul.f32 %v2826, %v2980
      %v3013 = vmul.f32 %v2828, %v2981
      %v3014 = vmul.f32 %v2830, %v2982
      %v3015 = vmul.f32 %v2832, %v2983
      %v3016 = vmul.f32 %v2834, %v2984
      %v3017 = vmul.f32 %v2836, %v2985
      %v3018 = vmul.f32 %v2838, %v2986
      %v3019 = vmul.f32 %v2840, %v2987
      %v3020 = vmul.f32 %v2842, %v2988
      %v3021 = vmul.f32 %v2844, %v2989
      %v3022 = vmul.f32 %v2846, %v2990
      %v3023 = vmul.f32 %v2848, %v2991
      %v3024 = vmul.f32 %v2850, %v2992
      %v3025 = vmul.f32 %v2852, %v2993
      %v3026 = vmul.f32 %v2854, %v2994
      %v3027 = vmul.f32 %v2856, %v2995
      %v3028 = vmul.f32 %v2858, %v2996
      %v3029 = vmul.f32 %v2860, %v2997
      %v3030 = vmul.f32 %v2862, %v2998
      %v3031 = vmul.f32 %v2864, %v2999
      %v3032 = vmul.f32 %v2866, %v3000
      %v3033 = vmul.f32 %v2868, %v3001
      %v3034 = vmul.f32 %v2870, %v3002
      %v3035 = vmul.f32 %v2872, %v3003
      %v3036 = vmul.f32 %v2874, %v3004
      %v3037 = vmul.f32 %v2876, %v3005
      %v3038 = vmul.f32 %v2878, %v3006
      %v3039 = vpack.c.bf16 %v3007, %v3007
      %v3040 = vpack.c.bf16 %v3008, %v3008
      %v3041 = vpack.c.bf16 %v3009, %v3009
      %v3042 = vpack.c.bf16 %v3010, %v3010
      %v3043 = vpack.c.bf16 %v3011, %v3011
      %v3044 = vpack.c.bf16 %v3012, %v3012
      %v3045 = vpack.c.bf16 %v3013, %v3013
      %v3046 = vpack.c.bf16 %v3014, %v3014
      %v3047 = vpack.c.bf16 %v3015, %v3015
      %v3048 = vpack.c.bf16 %v3016, %v3016
      %v3049 = vpack.c.bf16 %v3017, %v3017
      %v3050 = vpack.c.bf16 %v3018, %v3018
      %v3051 = vpack.c.bf16 %v3019, %v3019
      %v3052 = vpack.c.bf16 %v3020, %v3020
      %v3053 = vpack.c.bf16 %v3021, %v3021
      %v3054 = vpack.c.bf16 %v3022, %v3022
      %v3055 = vpack.c.bf16 %v3023, %v3023
      %v3056 = vpack.c.bf16 %v3024, %v3024
      %v3057 = vpack.c.bf16 %v3025, %v3025
      %v3058 = vpack.c.bf16 %v3026, %v3026
      %v3059 = vpack.c.bf16 %v3027, %v3027
      %v3060 = vpack.c.bf16 %v3028, %v3028
      %v3061 = vpack.c.bf16 %v3029, %v3029
      %v3062 = vpack.c.bf16 %v3030, %v3030
      %v3063 = vpack.c.bf16 %v3031, %v3031
      %v3064 = vpack.c.bf16 %v3032, %v3032
      %v3065 = vpack.c.bf16 %v3033, %v3033
      %v3066 = vpack.c.bf16 %v3034, %v3034
      %v3067 = vpack.c.bf16 %v3035, %v3035
      %v3068 = vpack.c.bf16 %v3036, %v3036
      %v3069 = vpack.c.bf16 %v3037, %v3037
      %v3070 = vpack.c.bf16 %v3038, %v3038
      %v3072 = vsel %vm1178, %v3039, 0
      %vm3074 = vcmask 1043456
      %v3076 = vsel %vm3074, %v1146, 0
      %3078 = vmatprep.subr.bf16.mxu0 0
      %3079 = vmatpush1.bf16.msra.mxu0 %v3076
      %3080 = vmatprep.subr.bf16.mxu0 0
      %3081 = vmatpush1.bf16.msra.mxu0 0
      %3082 = vmatprep.subr.bf16.mxu0 0
      %3083 = vmatpush1.bf16.msra.mxu0 0
      %3084 = vmatprep.subr.bf16.mxu0 0
      %3085 = vmatpush1.bf16.msra.mxu0 0
      %3086 = vmatprep.subr.bf16.mxu0 0
      %3087 = vmatpush1.bf16.msra.mxu0 0
      %3088 = vmatprep.subr.bf16.mxu0 0
      %3089 = vmatpush1.bf16.msra.mxu0 0
      %3090 = vmatprep.subr.bf16.mxu0 0
      %3091 = vmatpush1.bf16.msra.mxu0 0
      %3092 = vmatprep.subr.bf16.mxu0 0
      %3093 = vmatpush1.bf16.msra.mxu0 0
      %3094 = vmatprep.subr.bf16.mxu0 0
      %3095 = vmatpush1.bf16.msra.mxu0 0
      %3096 = vmatprep.subr.bf16.mxu0 0
      %3097 = vmatpush1.bf16.msra.mxu0 0
      %3098 = vmatprep.subr.bf16.mxu0 0
      %3099 = vmatpush1.bf16.msra.mxu0 0
      %3100 = vmatprep.subr.bf16.mxu0 0
      %3101 = vmatpush1.bf16.msra.mxu0 0
      %3102 = vmatprep.subr.bf16.mxu0 0
      %3103 = vmatpush1.bf16.msra.mxu0 0
      %3104 = vmatprep.subr.bf16.mxu0 0
      %3105 = vmatpush1.bf16.msra.mxu0 0
      %3106 = vmatprep.subr.bf16.mxu0 0
      %3107 = vmatpush1.bf16.msra.mxu0 0
      %3108 = vmatprep.subr.bf16.mxu0 0
      %3109 = vmatpush1.bf16.msra.mxu0 0
      %3110 = vmatprep.mubr.bf16.mxu0 0
      %3111 = vmatmul.mubr.bf16.gmra.mrb[0].mxu0 %v3072
      %v3112 = vpop.f32.mrb[0].mxu0
      %v3113 = vadd.f32 0.0, %v3112
      %v3114 = vpop.f32.mrb[0].mxu0
      %v3115 = vpop.f32.mrb[0].mxu0
      %v3116 = vpop.f32.mrb[0].mxu0
      %3117 = vdwg.mxu0
      %v3119 = vsel %vm1178, %v3040, 0
      %v3122 = vsel %vm3074, %v1147, 0
      %3124 = vmatprep.subr.bf16.mxu0 0
      %3125 = vmatpush1.bf16.msra.mxu0 %v3122
      %3126 = vmatprep.subr.bf16.mxu0 0
      %3127 = vmatpush1.bf16.msra.mxu0 0
      %3128 = vmatprep.subr.bf16.mxu0 0
      %3129 = vmatpush1.bf16.msra.mxu0 0
      %3130 = vmatprep.subr.bf16.mxu0 0
      %3131 = vmatpush1.bf16.msra.mxu0 0
      %3132 = vmatprep.subr.bf16.mxu0 0
      %3133 = vmatpush1.bf16.msra.mxu0 0
      %3134 = vmatprep.subr.bf16.mxu0 0
      %3135 = vmatpush1.bf16.msra.mxu0 0
      %3136 = vmatprep.subr.bf16.mxu0 0
      %3137 = vmatpush1.bf16.msra.mxu0 0
      %3138 = vmatprep.subr.bf16.mxu0 0
      %3139 = vmatpush1.bf16.msra.mxu0 0
      %3140 = vmatprep.subr.bf16.mxu0 0
      %3141 = vmatpush1.bf16.msra.mxu0 0
      %3142 = vmatprep.subr.bf16.mxu0 0
      %3143 = vmatpush1.bf16.msra.mxu0 0
      %3144 = vmatprep.subr.bf16.mxu0 0
      %3145 = vmatpush1.bf16.msra.mxu0 0
      %3146 = vmatprep.subr.bf16.mxu0 0
      %3147 = vmatpush1.bf16.msra.mxu0 0
      %3148 = vmatprep.subr.bf16.mxu0 0
      %3149 = vmatpush1.bf16.msra.mxu0 0
      %3150 = vmatprep.subr.bf16.mxu0 0
      %3151 = vmatpush1.bf16.msra.mxu0 0
      %3152 = vmatprep.subr.bf16.mxu0 0
      %3153 = vmatpush1.bf16.msra.mxu0 0
      %3154 = vmatprep.subr.bf16.mxu0 0
      %3155 = vmatpush1.bf16.msra.mxu0 0
      %3156 = vmatprep.mubr.bf16.mxu0 0
      %3157 = vmatmul.mubr.bf16.gmra.mrb[0].mxu0 %v3119
      %v3158 = vpop.f32.mrb[0].mxu0
      %v3159 = vadd.f32 0.0, %v3158
      %v3160 = vpop.f32.mrb[0].mxu0
      %v3161 = vpop.f32.mrb[0].mxu0
      %v3162 = vpop.f32.mrb[0].mxu0
      %3163 = vdwg.mxu0
      %v3165 = vsel %vm1178, %v3041, 0
      %v3168 = vsel %vm3074, %v1148, 0
      %3170 = vmatprep.subr.bf16.mxu0 0
      %3171 = vmatpush1.bf16.msra.mxu0 %v3168
      %3172 = vmatprep.subr.bf16.mxu0 0
      %3173 = vmatpush1.bf16.msra.mxu0 0
      %3174 = vmatprep.subr.bf16.mxu0 0
      %3175 = vmatpush1.bf16.msra.mxu0 0
      %3176 = vmatprep.subr.bf16.mxu0 0
      %3177 = vmatpush1.bf16.msra.mxu0 0
      %3178 = vmatprep.subr.bf16.mxu0 0
      %3179 = vmatpush1.bf16.msra.mxu0 0
      %3180 = vmatprep.subr.bf16.mxu0 0
      %3181 = vmatpush1.bf16.msra.mxu0 0
      %3182 = vmatprep.subr.bf16.mxu0 0
      %3183 = vmatpush1.bf16.msra.mxu0 0
      %3184 = vmatprep.subr.bf16.mxu0 0
      %3185 = vmatpush1.bf16.msra.mxu0 0
      %3186 = vmatprep.subr.bf16.mxu0 0
      %3187 = vmatpush1.bf16.msra.mxu0 0
      %3188 = vmatprep.subr.bf16.mxu0 0
      %3189 = vmatpush1.bf16.msra.mxu0 0
      %3190 = vmatprep.subr.bf16.mxu0 0
      %3191 = vmatpush1.bf16.msra.mxu0 0
      %3192 = vmatprep.subr.bf16.mxu0 0
      %3193 = vmatpush1.bf16.msra.mxu0 0
      %3194 = vmatprep.subr.bf16.mxu0 0
      %3195 = vmatpush1.bf16.msra.mxu0 0
      %3196 = vmatprep.subr.bf16.mxu0 0
      %3197 = vmatpush1.bf16.msra.mxu0 0
      %3198 = vmatprep.subr.bf16.mxu0 0
      %3199 = vmatpush1.bf16.msra.mxu0 0
      %3200 = vmatprep.subr.bf16.mxu0 0
      %3201 = vmatpush1.bf16.msra.mxu0 0
      %3202 = vmatprep.mubr.bf16.mxu0 0
      %3203 = vmatmul.mubr.bf16.gmra.mrb[0].mxu0 %v3165
      %v3204 = vpop.f32.mrb[0].mxu0
      %v3205 = vadd.f32 0.0, %v3204
      %v3206 = vpop.f32.mrb[0].mxu0
      %v3207 = vpop.f32.mrb[0].mxu0
      %v3208 = vpop.f32.mrb[0].mxu0
      %3209 = vdwg.mxu0
      %v3211 = vsel %vm1178, %v3042, 0
      %v3214 = vsel %vm3074, %v1149, 0
      %3216 = vmatprep.subr.bf16.mxu0 0
      %3217 = vmatpush1.bf16.msra.mxu0 %v3214
      %3218 = vmatprep.subr.bf16.mxu0 0
      %3219 = vmatpush1.bf16.msra.mxu0 0
      %3220 = vmatprep.subr.bf16.mxu0 0
      %3221 = vmatpush1.bf16.msra.mxu0 0
      %3222 = vmatprep.subr.bf16.mxu0 0
      %3223 = vmatpush1.bf16.msra.mxu0 0
      %3224 = vmatprep.subr.bf16.mxu0 0
      %3225 = vmatpush1.bf16.msra.mxu0 0
      %3226 = vmatprep.subr.bf16.mxu0 0
      %3227 = vmatpush1.bf16.msra.mxu0 0
      %3228 = vmatprep.subr.bf16.mxu0 0
      %3229 = vmatpush1.bf16.msra.mxu0 0
      %3230 = vmatprep.subr.bf16.mxu0 0
      %3231 = vmatpush1.bf16.msra.mxu0 0
      %3232 = vmatprep.subr.bf16.mxu0 0
      %3233 = vmatpush1.bf16.msra.mxu0 0
      %3234 = vmatprep.subr.bf16.mxu0 0
      %3235 = vmatpush1.bf16.msra.mxu0 0
      %3236 = vmatprep.subr.bf16.mxu0 0
      %3237 = vmatpush1.bf16.msra.mxu0 0
      %3238 = vmatprep.subr.bf16.mxu0 0
      %3239 = vmatpush1.bf16.msra.mxu0 0
      %3240 = vmatprep.subr.bf16.mxu0 0
      %3241 = vmatpush1.bf16.msra.mxu0 0
      %3242 = vmatprep.subr.bf16.mxu0 0
      %3243 = vmatpush1.bf16.msra.mxu0 0
      %3244 = vmatprep.subr.bf16.mxu0 0
      %3245 = vmatpush1.bf16.msra.mxu0 0
      %3246 = vmatprep.subr.bf16.mxu0 0
      %3247 = vmatpush1.bf16.msra.mxu0 0
      %3248 = vmatprep.mubr.bf16.mxu0 0
      %3249 = vmatmul.mubr.bf16.gmra.mrb[0].mxu0 %v3211
      %v3250 = vpop.f32.mrb[0].mxu0
      %v3251 = vadd.f32 0.0, %v3250
      %v3252 = vpop.f32.mrb[0].mxu0
      %v3253 = vpop.f32.mrb[0].mxu0
      %v3254 = vpop.f32.mrb[0].mxu0
      %3255 = vdwg.mxu0
      %v3257 = vsel %vm1178, %v3043, 0
      %v3260 = vsel %vm3074, %v1150, 0
      %3262 = vmatprep.subr.bf16.mxu0 0
      %3263 = vmatpush1.bf16.msra.mxu0 %v3260
      %3264 = vmatprep.subr.bf16.mxu0 0
      %3265 = vmatpush1.bf16.msra.mxu0 0
      %3266 = vmatprep.subr.bf16.mxu0 0
      %3267 = vmatpush1.bf16.msra.mxu0 0
      %3268 = vmatprep.subr.bf16.mxu0 0
      %3269 = vmatpush1.bf16.msra.mxu0 0
      %3270 = vmatprep.subr.bf16.mxu0 0
      %3271 = vmatpush1.bf16.msra.mxu0 0
      %3272 = vmatprep.subr.bf16.mxu0 0
      %3273 = vmatpush1.bf16.msra.mxu0 0
      %3274 = vmatprep.subr.bf16.mxu0 0
      %3275 = vmatpush1.bf16.msra.mxu0 0
      %3276 = vmatprep.subr.bf16.mxu0 0
      %3277 = vmatpush1.bf16.msra.mxu0 0
      %3278 = vmatprep.subr.bf16.mxu0 0
      %3279 = vmatpush1.bf16.msra.mxu0 0
      %3280 = vmatprep.subr.bf16.mxu0 0
      %3281 = vmatpush1.bf16.msra.mxu0 0
      %3282 = vmatprep.subr.bf16.mxu0 0
      %3283 = vmatpush1.bf16.msra.mxu0 0
      %3284 = vmatprep.subr.bf16.mxu0 0
      %3285 = vmatpush1.bf16.msra.mxu0 0
      %3286 = vmatprep.subr.bf16.mxu0 0
      %3287 = vmatpush1.bf16.msra.mxu0 0
      %3288 = vmatprep.subr.bf16.mxu0 0
      %3289 = vmatpush1.bf16.msra.mxu0 0
      %3290 = vmatprep.subr.bf16.mxu0 0
      %3291 = vmatpush1.bf16.msra.mxu0 0
      %3292 = vmatprep.subr.bf16.mxu0 0
      %3293 = vmatpush1.bf16.msra.mxu0 0
      %3294 = vmatprep.mubr.bf16.mxu0 0
      %3295 = vmatmul.mubr.bf16.gmra.mrb[0].mxu0 %v3257
      %v3296 = vpop.f32.mrb[0].mxu0
      %v3297 = vadd.f32 0.0, %v3296
      %v3298 = vpop.f32.mrb[0].mxu0
      %v3299 = vpop.f32.mrb[0].mxu0
      %v3300 = vpop.f32.mrb[0].mxu0
      %3301 = vdwg.mxu0
      %v3303 = vsel %vm1178, %v3044, 0
      %v3306 = vsel %vm3074, %v1151, 0
      %3308 = vmatprep.subr.bf16.mxu0 0
      %3309 = vmatpush1.bf16.msra.mxu0 %v3306
      %3310 = vmatprep.subr.bf16.mxu0 0
      %3311 = vmatpush1.bf16.msra.mxu0 0
      %3312 = vmatprep.subr.bf16.mxu0 0
      %3313 = vmatpush1.bf16.msra.mxu0 0
      %3314 = vmatprep.subr.bf16.mxu0 0
      %3315 = vmatpush1.bf16.msra.mxu0 0
      %3316 = vmatprep.subr.bf16.mxu0 0
      %3317 = vmatpush1.bf16.msra.mxu0 0
      %3318 = vmatprep.subr.bf16.mxu0 0
      %3319 = vmatpush1.bf16.msra.mxu0 0
      %3320 = vmatprep.subr.bf16.mxu0 0
      %3321 = vmatpush1.bf16.msra.mxu0 0
      %3322 = vmatprep.subr.bf16.mxu0 0
      %3323 = vmatpush1.bf16.msra.mxu0 0
      %3324 = vmatprep.subr.bf16.mxu0 0
      %3325 = vmatpush1.bf16.msra.mxu0 0
      %3326 = vmatprep.subr.bf16.mxu0 0
      %3327 = vmatpush1.bf16.msra.mxu0 0
      %3328 = vmatprep.subr.bf16.mxu0 0
      %3329 = vmatpush1.bf16.msra.mxu0 0
      %3330 = vmatprep.subr.bf16.mxu0 0
      %3331 = vmatpush1.bf16.msra.mxu0 0
      %3332 = vmatprep.subr.bf16.mxu0 0
      %3333 = vmatpush1.bf16.msra.mxu0 0
      %3334 = vmatprep.subr.bf16.mxu0 0
      %3335 = vmatpush1.bf16.msra.mxu0 0
      %3336 = vmatprep.subr.bf16.mxu0 0
      %3337 = vmatpush1.bf16.msra.mxu0 0
      %3338 = vmatprep.subr.bf16.mxu0 0
      %3339 = vmatpush1.bf16.msra.mxu0 0
      %3340 = vmatprep.mubr.bf16.mxu0 0
      %3341 = vmatmul.mubr.bf16.gmra.mrb[0].mxu0 %v3303
      %v3342 = vpop.f32.mrb[0].mxu0
      %v3343 = vadd.f32 0.0, %v3342
      %v3344 = vpop.f32.mrb[0].mxu0
      %v3345 = vpop.f32.mrb[0].mxu0
      %v3346 = vpop.f32.mrb[0].mxu0
      %3347 = vdwg.mxu0
      %v3349 = vsel %vm1178, %v3045, 0
      %v3352 = vsel %vm3074, %v1152, 0
      %3354 = vmatprep.subr.bf16.mxu0 0
      %3355 = vmatpush1.bf16.msra.mxu0 %v3352
      %3356 = vmatprep.subr.bf16.mxu0 0
      %3357 = vmatpush1.bf16.msra.mxu0 0
      %3358 = vmatprep.subr.bf16.mxu0 0
      %3359 = vmatpush1.bf16.msra.mxu0 0
      %3360 = vmatprep.subr.bf16.mxu0 0
      %3361 = vmatpush1.bf16.msra.mxu0 0
      %3362 = vmatprep.subr.bf16.mxu0 0
      %3363 = vmatpush1.bf16.msra.mxu0 0
      %3364 = vmatprep.subr.bf16.mxu0 0
      %3365 = vmatpush1.bf16.msra.mxu0 0
      %3366 = vmatprep.subr.bf16.mxu0 0
      %3367 = vmatpush1.bf16.msra.mxu0 0
      %3368 = vmatprep.subr.bf16.mxu0 0
      %3369 = vmatpush1.bf16.msra.mxu0 0
      %3370 = vmatprep.subr.bf16.mxu0 0
      %3371 = vmatpush1.bf16.msra.mxu0 0
      %3372 = vmatprep.subr.bf16.mxu0 0
      %3373 = vmatpush1.bf16.msra.mxu0 0
      %3374 = vmatprep.subr.bf16.mxu0 0
      %3375 = vmatpush1.bf16.msra.mxu0 0
      %3376 = vmatprep.subr.bf16.mxu0 0
      %3377 = vmatpush1.bf16.msra.mxu0 0
      %3378 = vmatprep.subr.bf16.mxu0 0
      %3379 = vmatpush1.bf16.msra.mxu0 0
      %3380 = vmatprep.subr.bf16.mxu0 0
      %3381 = vmatpush1.bf16.msra.mxu0 0
      %3382 = vmatprep.subr.bf16.mxu0 0
      %3383 = vmatpush1.bf16.msra.mxu0 0
      %3384 = vmatprep.subr.bf16.mxu0 0
      %3385 = vmatpush1.bf16.msra.mxu0 0
      %3386 = vmatprep.mubr.bf16.mxu0 0
      %3387 = vmatmul.mubr.bf16.gmra.mrb[0].mxu0 %v3349
      %v3388 = vpop.f32.mrb[0].mxu0
      %v3389 = vadd.f32 0.0, %v3388
      %v3390 = vpop.f32.mrb[0].mxu0
      %v3391 = vpop.f32.mrb[0].mxu0
      %v3392 = vpop.f32.mrb[0].mxu0
      %3393 = vdwg.mxu0
      %v3395 = vsel %vm1178, %v3046, 0
      %v3398 = vsel %vm3074, %v1153, 0
      %3400 = vmatprep.subr.bf16.mxu0 0
      %3401 = vmatpush1.bf16.msra.mxu0 %v3398
      %3402 = vmatprep.subr.bf16.mxu0 0
      %3403 = vmatpush1.bf16.msra.mxu0 0
      %3404 = vmatprep.subr.bf16.mxu0 0
      %3405 = vmatpush1.bf16.msra.mxu0 0
      %3406 = vmatprep.subr.bf16.mxu0 0
      %3407 = vmatpush1.bf16.msra.mxu0 0
      %3408 = vmatprep.subr.bf16.mxu0 0
      %3409 = vmatpush1.bf16.msra.mxu0 0
      %3410 = vmatprep.subr.bf16.mxu0 0
      %3411 = vmatpush1.bf16.msra.mxu0 0
      %3412 = vmatprep.subr.bf16.mxu0 0
      %3413 = vmatpush1.bf16.msra.mxu0 0
      %3414 = vmatprep.subr.bf16.mxu0 0
      %3415 = vmatpush1.bf16.msra.mxu0 0
      %3416 = vmatprep.subr.bf16.mxu0 0
      %3417 = vmatpush1.bf16.msra.mxu0 0
      %3418 = vmatprep.subr.bf16.mxu0 0
      %3419 = vmatpush1.bf16.msra.mxu0 0
      %3420 = vmatprep.subr.bf16.mxu0 0
      %3421 = vmatpush1.bf16.msra.mxu0 0
      %3422 = vmatprep.subr.bf16.mxu0 0
      %3423 = vmatpush1.bf16.msra.mxu0 0
      %3424 = vmatprep.subr.bf16.mxu0 0
      %3425 = vmatpush1.bf16.msra.mxu0 0
      %3426 = vmatprep.subr.bf16.mxu0 0
      %3427 = vmatpush1.bf16.msra.mxu0 0
      %3428 = vmatprep.subr.bf16.mxu0 0
      %3429 = vmatpush1.bf16.msra.mxu0 0
      %3430 = vmatprep.subr.bf16.mxu0 0
      %3431 = vmatpush1.bf16.msra.mxu0 0
      %3432 = vmatprep.mubr.bf16.mxu0 0
      %3433 = vmatmul.mubr.bf16.gmra.mrb[0].mxu0 %v3395
      %v3434 = vpop.f32.mrb[0].mxu0
      %v3435 = vadd.f32 0.0, %v3434
      %v3436 = vpop.f32.mrb[0].mxu0
      %v3437 = vpop.f32.mrb[0].mxu0
      %v3438 = vpop.f32.mrb[0].mxu0
      %3439 = vdwg.mxu0
      %v3441 = vsel %vm1178, %v3047, 0
      %v3444 = vsel %vm3074, %v1154, 0
      %3446 = vmatprep.subr.bf16.mxu0 0
      %3447 = vmatpush1.bf16.msra.mxu0 %v3444
      %3448 = vmatprep.subr.bf16.mxu0 0
      %3449 = vmatpush1.bf16.msra.mxu0 0
      %3450 = vmatprep.subr.bf16.mxu0 0
      %3451 = vmatpush1.bf16.msra.mxu0 0
      %3452 = vmatprep.subr.bf16.mxu0 0
      %3453 = vmatpush1.bf16.msra.mxu0 0
      %3454 = vmatprep.subr.bf16.mxu0 0
      %3455 = vmatpush1.bf16.msra.mxu0 0
      %3456 = vmatprep.subr.bf16.mxu0 0
      %3457 = vmatpush1.bf16.msra.mxu0 0
      %3458 = vmatprep.subr.bf16.mxu0 0
      %3459 = vmatpush1.bf16.msra.mxu0 0
      %3460 = vmatprep.subr.bf16.mxu0 0
      %3461 = vmatpush1.bf16.msra.mxu0 0
      %3462 = vmatprep.subr.bf16.mxu0 0
      %3463 = vmatpush1.bf16.msra.mxu0 0
      %3464 = vmatprep.subr.bf16.mxu0 0
      %3465 = vmatpush1.bf16.msra.mxu0 0
      %3466 = vmatprep.subr.bf16.mxu0 0
      %3467 = vmatpush1.bf16.msra.mxu0 0
      %3468 = vmatprep.subr.bf16.mxu0 0
      %3469 = vmatpush1.bf16.msra.mxu0 0
      %3470 = vmatprep.subr.bf16.mxu0 0
      %3471 = vmatpush1.bf16.msra.mxu0 0
      %3472 = vmatprep.subr.bf16.mxu0 0
      %3473 = vmatpush1.bf16.msra.mxu0 0
      %3474 = vmatprep.subr.bf16.mxu0 0
      %3475 = vmatpush1.bf16.msra.mxu0 0
      %3476 = vmatprep.subr.bf16.mxu0 0
      %3477 = vmatpush1.bf16.msra.mxu0 0
      %3478 = vmatprep.mubr.bf16.mxu0 0
      %3479 = vmatmul.mubr.bf16.gmra.mrb[0].mxu0 %v3441
      %v3480 = vpop.f32.mrb[0].mxu0
      %v3481 = vadd.f32 0.0, %v3480
      %v3482 = vpop.f32.mrb[0].mxu0
      %v3483 = vpop.f32.mrb[0].mxu0
      %v3484 = vpop.f32.mrb[0].mxu0
      %3485 = vdwg.mxu0
      %v3487 = vsel %vm1178, %v3048, 0
      %v3490 = vsel %vm3074, %v1155, 0
      %3492 = vmatprep.subr.bf16.mxu0 0
      %3493 = vmatpush1.bf16.msra.mxu0 %v3490
      %3494 = vmatprep.subr.bf16.mxu0 0
      %3495 = vmatpush1.bf16.msra.mxu0 0
      %3496 = vmatprep.subr.bf16.mxu0 0
      %3497 = vmatpush1.bf16.msra.mxu0 0
      %3498 = vmatprep.subr.bf16.mxu0 0
      %3499 = vmatpush1.bf16.msra.mxu0 0
      %3500 = vmatprep.subr.bf16.mxu0 0
      %3501 = vmatpush1.bf16.msra.mxu0 0
      %3502 = vmatprep.subr.bf16.mxu0 0
      %3503 = vmatpush1.bf16.msra.mxu0 0
      %3504 = vmatprep.subr.bf16.mxu0 0
      %3505 = vmatpush1.bf16.msra.mxu0 0
      %3506 = vmatprep.subr.bf16.mxu0 0
      %3507 = vmatpush1.bf16.msra.mxu0 0
      %3508 = vmatprep.subr.bf16.mxu0 0
      %3509 = vmatpush1.bf16.msra.mxu0 0
      %3510 = vmatprep.subr.bf16.mxu0 0
      %3511 = vmatpush1.bf16.msra.mxu0 0
      %3512 = vmatprep.subr.bf16.mxu0 0
      %3513 = vmatpush1.bf16.msra.mxu0 0
      %3514 = vmatprep.subr.bf16.mxu0 0
      %3515 = vmatpush1.bf16.msra.mxu0 0
      %3516 = vmatprep.subr.bf16.mxu0 0
      %3517 = vmatpush1.bf16.msra.mxu0 0
      %3518 = vmatprep.subr.bf16.mxu0 0
      %3519 = vmatpush1.bf16.msra.mxu0 0
      %3520 = vmatprep.subr.bf16.mxu0 0
      %3521 = vmatpush1.bf16.msra.mxu0 0
      %3522 = vmatprep.subr.bf16.mxu0 0
      %3523 = vmatpush1.bf16.msra.mxu0 0
      %3524 = vmatprep.mubr.bf16.mxu0 0
      %3525 = vmatmul.mubr.bf16.gmra.mrb[0].mxu0 %v3487
      %v3526 = vpop.f32.mrb[0].mxu0
      %v3527 = vadd.f32 0.0, %v3526
      %v3528 = vpop.f32.mrb[0].mxu0
      %v3529 = vpop.f32.mrb[0].mxu0
      %v3530 = vpop.f32.mrb[0].mxu0
      %3531 = vdwg.mxu0
      %v3533 = vsel %vm1178, %v3049, 0
      %v3536 = vsel %vm3074, %v1156, 0
      %3538 = vmatprep.subr.bf16.mxu0 0
      %3539 = vmatpush1.bf16.msra.mxu0 %v3536
      %3540 = vmatprep.subr.bf16.mxu0 0
      %3541 = vmatpush1.bf16.msra.mxu0 0
      %3542 = vmatprep.subr.bf16.mxu0 0
      %3543 = vmatpush1.bf16.msra.mxu0 0
      %3544 = vmatprep.subr.bf16.mxu0 0
      %3545 = vmatpush1.bf16.msra.mxu0 0
      %3546 = vmatprep.subr.bf16.mxu0 0
      %3547 = vmatpush1.bf16.msra.mxu0 0
      %3548 = vmatprep.subr.bf16.mxu0 0
      %3549 = vmatpush1.bf16.msra.mxu0 0
      %3550 = vmatprep.subr.bf16.mxu0 0
      %3551 = vmatpush1.bf16.msra.mxu0 0
      %3552 = vmatprep.subr.bf16.mxu0 0
      %3553 = vmatpush1.bf16.msra.mxu0 0
      %3554 = vmatprep.subr.bf16.mxu0 0
      %3555 = vmatpush1.bf16.msra.mxu0 0
      %3556 = vmatprep.subr.bf16.mxu0 0
      %3557 = vmatpush1.bf16.msra.mxu0 0
      %3558 = vmatprep.subr.bf16.mxu0 0
      %3559 = vmatpush1.bf16.msra.mxu0 0
      %3560 = vmatprep.subr.bf16.mxu0 0
      %3561 = vmatpush1.bf16.msra.mxu0 0
      %3562 = vmatprep.subr.bf16.mxu0 0
      %3563 = vmatpush1.bf16.msra.mxu0 0
      %3564 = vmatprep.subr.bf16.mxu0 0
      %3565 = vmatpush1.bf16.msra.mxu0 0
      %3566 = vmatprep.subr.bf16.mxu0 0
      %3567 = vmatpush1.bf16.msra.mxu0 0
      %3568 = vmatprep.subr.bf16.mxu0 0
      %3569 = vmatpush1.bf16.msra.mxu0 0
      %3570 = vmatprep.mubr.bf16.mxu0 0
      %3571 = vmatmul.mubr.bf16.gmra.mrb[0].mxu0 %v3533
      %v3572 = vpop.f32.mrb[0].mxu0
      %v3573 = vadd.f32 0.0, %v3572
      %v3574 = vpop.f32.mrb[0].mxu0
      %v3575 = vpop.f32.mrb[0].mxu0
      %v3576 = vpop.f32.mrb[0].mxu0
      %3577 = vdwg.mxu0
      %v3579 = vsel %vm1178, %v3050, 0
      %v3582 = vsel %vm3074, %v1157, 0
      %3584 = vmatprep.subr.bf16.mxu0 0
      %3585 = vmatpush1.bf16.msra.mxu0 %v3582
      %3586 = vmatprep.subr.bf16.mxu0 0
      %3587 = vmatpush1.bf16.msra.mxu0 0
      %3588 = vmatprep.subr.bf16.mxu0 0
      %3589 = vmatpush1.bf16.msra.mxu0 0
      %3590 = vmatprep.subr.bf16.mxu0 0
      %3591 = vmatpush1.bf16.msra.mxu0 0
      %3592 = vmatprep.subr.bf16.mxu0 0
      %3593 = vmatpush1.bf16.msra.mxu0 0
      %3594 = vmatprep.subr.bf16.mxu0 0
      %3595 = vmatpush1.bf16.msra.mxu0 0
      %3596 = vmatprep.subr.bf16.mxu0 0
      %3597 = vmatpush1.bf16.msra.mxu0 0
      %3598 = vmatprep.subr.bf16.mxu0 0
      %3599 = vmatpush1.bf16.msra.mxu0 0
      %3600 = vmatprep.subr.bf16.mxu0 0
      %3601 = vmatpush1.bf16.msra.mxu0 0
      %3602 = vmatprep.subr.bf16.mxu0 0
      %3603 = vmatpush1.bf16.msra.mxu0 0
      %3604 = vmatprep.subr.bf16.mxu0 0
      %3605 = vmatpush1.bf16.msra.mxu0 0
      %3606 = vmatprep.subr.bf16.mxu0 0
      %3607 = vmatpush1.bf16.msra.mxu0 0
      %3608 = vmatprep.subr.bf16.mxu0 0
      %3609 = vmatpush1.bf16.msra.mxu0 0
      %3610 = vmatprep.subr.bf16.mxu0 0
      %3611 = vmatpush1.bf16.msra.mxu0 0
      %3612 = vmatprep.subr.bf16.mxu0 0
      %3613 = vmatpush1.bf16.msra.mxu0 0
      %3614 = vmatprep.subr.bf16.mxu0 0
      %3615 = vmatpush1.bf16.msra.mxu0 0
      %3616 = vmatprep.mubr.bf16.mxu0 0
      %3617 = vmatmul.mubr.bf16.gmra.mrb[0].mxu0 %v3579
      %v3618 = vpop.f32.mrb[0].mxu0
      %v3619 = vadd.f32 0.0, %v3618
      %v3620 = vpop.f32.mrb[0].mxu0
      %v3621 = vpop.f32.mrb[0].mxu0
      %v3622 = vpop.f32.mrb[0].mxu0
      %3623 = vdwg.mxu0
      %v3625 = vsel %vm1178, %v3051, 0
      %v3628 = vsel %vm3074, %v1158, 0
      %3630 = vmatprep.subr.bf16.mxu0 0
      %3631 = vmatpush1.bf16.msra.mxu0 %v3628
      %3632 = vmatprep.subr.bf16.mxu0 0
      %3633 = vmatpush1.bf16.msra.mxu0 0
      %3634 = vmatprep.subr.bf16.mxu0 0
      %3635 = vmatpush1.bf16.msra.mxu0 0
      %3636 = vmatprep.subr.bf16.mxu0 0
      %3637 = vmatpush1.bf16.msra.mxu0 0
      %3638 = vmatprep.subr.bf16.mxu0 0
      %3639 = vmatpush1.bf16.msra.mxu0 0
      %3640 = vmatprep.subr.bf16.mxu0 0
      %3641 = vmatpush1.bf16.msra.mxu0 0
      %3642 = vmatprep.subr.bf16.mxu0 0
      %3643 = vmatpush1.bf16.msra.mxu0 0
      %3644 = vmatprep.subr.bf16.mxu0 0
      %3645 = vmatpush1.bf16.msra.mxu0 0
      %3646 = vmatprep.subr.bf16.mxu0 0
      %3647 = vmatpush1.bf16.msra.mxu0 0
      %3648 = vmatprep.subr.bf16.mxu0 0
      %3649 = vmatpush1.bf16.msra.mxu0 0
      %3650 = vmatprep.subr.bf16.mxu0 0
      %3651 = vmatpush1.bf16.msra.mxu0 0
      %3652 = vmatprep.subr.bf16.mxu0 0
      %3653 = vmatpush1.bf16.msra.mxu0 0
      %3654 = vmatprep.subr.bf16.mxu0 0
      %3655 = vmatpush1.bf16.msra.mxu0 0
      %3656 = vmatprep.subr.bf16.mxu0 0
      %3657 = vmatpush1.bf16.msra.mxu0 0
      %3658 = vmatprep.subr.bf16.mxu0 0
      %3659 = vmatpush1.bf16.msra.mxu0 0
      %3660 = vmatprep.subr.bf16.mxu0 0
      %3661 = vmatpush1.bf16.msra.mxu0 0
      %3662 = vmatprep.mubr.bf16.mxu0 0
      %3663 = vmatmul.mubr.bf16.gmra.mrb[0].mxu0 %v3625
      %v3664 = vpop.f32.mrb[0].mxu0
      %v3665 = vadd.f32 0.0, %v3664
      %v3666 = vpop.f32.mrb[0].mxu0
      %v3667 = vpop.f32.mrb[0].mxu0
      %v3668 = vpop.f32.mrb[0].mxu0
      %3669 = vdwg.mxu0
      %v3671 = vsel %vm1178, %v3052, 0
      %v3674 = vsel %vm3074, %v1159, 0
      %3676 = vmatprep.subr.bf16.mxu0 0
      %3677 = vmatpush1.bf16.msra.mxu0 %v3674
      %3678 = vmatprep.subr.bf16.mxu0 0
      %3679 = vmatpush1.bf16.msra.mxu0 0
      %3680 = vmatprep.subr.bf16.mxu0 0
      %3681 = vmatpush1.bf16.msra.mxu0 0
      %3682 = vmatprep.subr.bf16.mxu0 0
      %3683 = vmatpush1.bf16.msra.mxu0 0
      %3684 = vmatprep.subr.bf16.mxu0 0
      %3685 = vmatpush1.bf16.msra.mxu0 0
      %3686 = vmatprep.subr.bf16.mxu0 0
      %3687 = vmatpush1.bf16.msra.mxu0 0
      %3688 = vmatprep.subr.bf16.mxu0 0
      %3689 = vmatpush1.bf16.msra.mxu0 0
      %3690 = vmatprep.subr.bf16.mxu0 0
      %3691 = vmatpush1.bf16.msra.mxu0 0
      %3692 = vmatprep.subr.bf16.mxu0 0
      %3693 = vmatpush1.bf16.msra.mxu0 0
      %3694 = vmatprep.subr.bf16.mxu0 0
      %3695 = vmatpush1.bf16.msra.mxu0 0
      %3696 = vmatprep.subr.bf16.mxu0 0
      %3697 = vmatpush1.bf16.msra.mxu0 0
      %3698 = vmatprep.subr.bf16.mxu0 0
      %3699 = vmatpush1.bf16.msra.mxu0 0
      %3700 = vmatprep.subr.bf16.mxu0 0
      %3701 = vmatpush1.bf16.msra.mxu0 0
      %3702 = vmatprep.subr.bf16.mxu0 0
      %3703 = vmatpush1.bf16.msra.mxu0 0
      %3704 = vmatprep.subr.bf16.mxu0 0
      %3705 = vmatpush1.bf16.msra.mxu0 0
      %3706 = vmatprep.subr.bf16.mxu0 0
      %3707 = vmatpush1.bf16.msra.mxu0 0
      %3708 = vmatprep.mubr.bf16.mxu0 0
      %3709 = vmatmul.mubr.bf16.gmra.mrb[0].mxu0 %v3671
      %v3710 = vpop.f32.mrb[0].mxu0
      %v3711 = vadd.f32 0.0, %v3710
      %v3712 = vpop.f32.mrb[0].mxu0
      %v3713 = vpop.f32.mrb[0].mxu0
      %v3714 = vpop.f32.mrb[0].mxu0
      %3715 = vdwg.mxu0
      %v3717 = vsel %vm1178, %v3053, 0
      %v3720 = vsel %vm3074, %v1160, 0
      %3722 = vmatprep.subr.bf16.mxu0 0
      %3723 = vmatpush1.bf16.msra.mxu0 %v3720
      %3724 = vmatprep.subr.bf16.mxu0 0
      %3725 = vmatpush1.bf16.msra.mxu0 0
      %3726 = vmatprep.subr.bf16.mxu0 0
      %3727 = vmatpush1.bf16.msra.mxu0 0
      %3728 = vmatprep.subr.bf16.mxu0 0
      %3729 = vmatpush1.bf16.msra.mxu0 0
      %3730 = vmatprep.subr.bf16.mxu0 0
      %3731 = vmatpush1.bf16.msra.mxu0 0
      %3732 = vmatprep.subr.bf16.mxu0 0
      %3733 = vmatpush1.bf16.msra.mxu0 0
      %3734 = vmatprep.subr.bf16.mxu0 0
      %3735 = vmatpush1.bf16.msra.mxu0 0
      %3736 = vmatprep.subr.bf16.mxu0 0
      %3737 = vmatpush1.bf16.msra.mxu0 0
      %3738 = vmatprep.subr.bf16.mxu0 0
      %3739 = vmatpush1.bf16.msra.mxu0 0
      %3740 = vmatprep.subr.bf16.mxu0 0
      %3741 = vmatpush1.bf16.msra.mxu0 0
      %3742 = vmatprep.subr.bf16.mxu0 0
      %3743 = vmatpush1.bf16.msra.mxu0 0
      %3744 = vmatprep.subr.bf16.mxu0 0
      %3745 = vmatpush1.bf16.msra.mxu0 0
      %3746 = vmatprep.subr.bf16.mxu0 0
      %3747 = vmatpush1.bf16.msra.mxu0 0
      %3748 = vmatprep.subr.bf16.mxu0 0
      %3749 = vmatpush1.bf16.msra.mxu0 0
      %3750 = vmatprep.subr.bf16.mxu0 0
      %3751 = vmatpush1.bf16.msra.mxu0 0
      %3752 = vmatprep.subr.bf16.mxu0 0
      %3753 = vmatpush1.bf16.msra.mxu0 0
      %3754 = vmatprep.mubr.bf16.mxu0 0
      %3755 = vmatmul.mubr.bf16.gmra.mrb[0].mxu0 %v3717
      %v3756 = vpop.f32.mrb[0].mxu0
      %v3757 = vadd.f32 0.0, %v3756
      %v3758 = vpop.f32.mrb[0].mxu0
      %v3759 = vpop.f32.mrb[0].mxu0
      %v3760 = vpop.f32.mrb[0].mxu0
      %3761 = vdwg.mxu0
      %v3763 = vsel %vm1178, %v3054, 0
      %v3766 = vsel %vm3074, %v1161, 0
      %3768 = vmatprep.subr.bf16.mxu0 0
      %3769 = vmatpush1.bf16.msra.mxu0 %v3766
      %3770 = vmatprep.subr.bf16.mxu0 0
      %3771 = vmatpush1.bf16.msra.mxu0 0
      %3772 = vmatprep.subr.bf16.mxu0 0
      %3773 = vmatpush1.bf16.msra.mxu0 0
      %3774 = vmatprep.subr.bf16.mxu0 0
      %3775 = vmatpush1.bf16.msra.mxu0 0
      %3776 = vmatprep.subr.bf16.mxu0 0
      %3777 = vmatpush1.bf16.msra.mxu0 0
      %3778 = vmatprep.subr.bf16.mxu0 0
      %3779 = vmatpush1.bf16.msra.mxu0 0
      %3780 = vmatprep.subr.bf16.mxu0 0
      %3781 = vmatpush1.bf16.msra.mxu0 0
      %3782 = vmatprep.subr.bf16.mxu0 0
      %3783 = vmatpush1.bf16.msra.mxu0 0
      %3784 = vmatprep.subr.bf16.mxu0 0
      %3785 = vmatpush1.bf16.msra.mxu0 0
      %3786 = vmatprep.subr.bf16.mxu0 0
      %3787 = vmatpush1.bf16.msra.mxu0 0
      %3788 = vmatprep.subr.bf16.mxu0 0
      %3789 = vmatpush1.bf16.msra.mxu0 0
      %3790 = vmatprep.subr.bf16.mxu0 0
      %3791 = vmatpush1.bf16.msra.mxu0 0
      %3792 = vmatprep.subr.bf16.mxu0 0
      %3793 = vmatpush1.bf16.msra.mxu0 0
      %3794 = vmatprep.subr.bf16.mxu0 0
      %3795 = vmatpush1.bf16.msra.mxu0 0
      %3796 = vmatprep.subr.bf16.mxu0 0
      %3797 = vmatpush1.bf16.msra.mxu0 0
      %3798 = vmatprep.subr.bf16.mxu0 0
      %3799 = vmatpush1.bf16.msra.mxu0 0
      %3800 = vmatprep.mubr.bf16.mxu0 0
      %3801 = vmatmul.mubr.bf16.gmra.mrb[0].mxu0 %v3763
      %v3802 = vpop.f32.mrb[0].mxu0
      %v3803 = vadd.f32 0.0, %v3802
      %v3804 = vpop.f32.mrb[0].mxu0
      %v3805 = vpop.f32.mrb[0].mxu0
      %v3806 = vpop.f32.mrb[0].mxu0
      %3807 = vdwg.mxu0
      %v3809 = vsel %vm1178, %v3055, 0
      %v3812 = vsel %vm3074, %v1162, 0
      %3814 = vmatprep.subr.bf16.mxu0 0
      %3815 = vmatpush1.bf16.msra.mxu0 %v3812
      %3816 = vmatprep.subr.bf16.mxu0 0
      %3817 = vmatpush1.bf16.msra.mxu0 0
      %3818 = vmatprep.subr.bf16.mxu0 0
      %3819 = vmatpush1.bf16.msra.mxu0 0
      %3820 = vmatprep.subr.bf16.mxu0 0
      %3821 = vmatpush1.bf16.msra.mxu0 0
      %3822 = vmatprep.subr.bf16.mxu0 0
      %3823 = vmatpush1.bf16.msra.mxu0 0
      %3824 = vmatprep.subr.bf16.mxu0 0
      %3825 = vmatpush1.bf16.msra.mxu0 0
      %3826 = vmatprep.subr.bf16.mxu0 0
      %3827 = vmatpush1.bf16.msra.mxu0 0
      %3828 = vmatprep.subr.bf16.mxu0 0
      %3829 = vmatpush1.bf16.msra.mxu0 0
      %3830 = vmatprep.subr.bf16.mxu0 0
      %3831 = vmatpush1.bf16.msra.mxu0 0
      %3832 = vmatprep.subr.bf16.mxu0 0
      %3833 = vmatpush1.bf16.msra.mxu0 0
      %3834 = vmatprep.subr.bf16.mxu0 0
      %3835 = vmatpush1.bf16.msra.mxu0 0
      %3836 = vmatprep.subr.bf16.mxu0 0
      %3837 = vmatpush1.bf16.msra.mxu0 0
      %3838 = vmatprep.subr.bf16.mxu0 0
      %3839 = vmatpush1.bf16.msra.mxu0 0
      %3840 = vmatprep.subr.bf16.mxu0 0
      %3841 = vmatpush1.bf16.msra.mxu0 0
      %3842 = vmatprep.subr.bf16.mxu0 0
      %3843 = vmatpush1.bf16.msra.mxu0 0
      %3844 = vmatprep.subr.bf16.mxu0 0
      %3845 = vmatpush1.bf16.msra.mxu0 0
      %3846 = vmatprep.mubr.bf16.mxu0 0
      %3847 = vmatmul.mubr.bf16.gmra.mrb[0].mxu0 %v3809
      %v3848 = vpop.f32.mrb[0].mxu0
      %v3849 = vadd.f32 0.0, %v3848
      %v3850 = vpop.f32.mrb[0].mxu0
      %v3851 = vpop.f32.mrb[0].mxu0
      %v3852 = vpop.f32.mrb[0].mxu0
      %3853 = vdwg.mxu0
      %v3855 = vsel %vm1178, %v3056, 0
      %v3858 = vsel %vm3074, %v1163, 0
      %3860 = vmatprep.subr.bf16.mxu0 0
      %3861 = vmatpush1.bf16.msra.mxu0 %v3858
      %3862 = vmatprep.subr.bf16.mxu0 0
      %3863 = vmatpush1.bf16.msra.mxu0 0
      %3864 = vmatprep.subr.bf16.mxu0 0
      %3865 = vmatpush1.bf16.msra.mxu0 0
      %3866 = vmatprep.subr.bf16.mxu0 0
      %3867 = vmatpush1.bf16.msra.mxu0 0
      %3868 = vmatprep.subr.bf16.mxu0 0
      %3869 = vmatpush1.bf16.msra.mxu0 0
      %3870 = vmatprep.subr.bf16.mxu0 0
      %3871 = vmatpush1.bf16.msra.mxu0 0
      %3872 = vmatprep.subr.bf16.mxu0 0
      %3873 = vmatpush1.bf16.msra.mxu0 0
      %3874 = vmatprep.subr.bf16.mxu0 0
      %3875 = vmatpush1.bf16.msra.mxu0 0
      %3876 = vmatprep.subr.bf16.mxu0 0
      %3877 = vmatpush1.bf16.msra.mxu0 0
      %3878 = vmatprep.subr.bf16.mxu0 0
      %3879 = vmatpush1.bf16.msra.mxu0 0
      %3880 = vmatprep.subr.bf16.mxu0 0
      %3881 = vmatpush1.bf16.msra.mxu0 0
      %3882 = vmatprep.subr.bf16.mxu0 0
      %3883 = vmatpush1.bf16.msra.mxu0 0
      %3884 = vmatprep.subr.bf16.mxu0 0
      %3885 = vmatpush1.bf16.msra.mxu0 0
      %3886 = vmatprep.subr.bf16.mxu0 0
      %3887 = vmatpush1.bf16.msra.mxu0 0
      %3888 = vmatprep.subr.bf16.mxu0 0
      %3889 = vmatpush1.bf16.msra.mxu0 0
      %3890 = vmatprep.subr.bf16.mxu0 0
      %3891 = vmatpush1.bf16.msra.mxu0 0
      %3892 = vmatprep.mubr.bf16.mxu0 0
      %3893 = vmatmul.mubr.bf16.gmra.mrb[0].mxu0 %v3855
      %v3894 = vpop.f32.mrb[0].mxu0
      %v3895 = vadd.f32 0.0, %v3894
      %v3896 = vpop.f32.mrb[0].mxu0
      %v3897 = vpop.f32.mrb[0].mxu0
      %v3898 = vpop.f32.mrb[0].mxu0
      %3899 = vdwg.mxu0
      %v3901 = vsel %vm1178, %v3057, 0
      %v3904 = vsel %vm3074, %v1164, 0
      %3906 = vmatprep.subr.bf16.mxu0 0
      %3907 = vmatpush1.bf16.msra.mxu0 %v3904
      %3908 = vmatprep.subr.bf16.mxu0 0
      %3909 = vmatpush1.bf16.msra.mxu0 0
      %3910 = vmatprep.subr.bf16.mxu0 0
      %3911 = vmatpush1.bf16.msra.mxu0 0
      %3912 = vmatprep.subr.bf16.mxu0 0
      %3913 = vmatpush1.bf16.msra.mxu0 0
      %3914 = vmatprep.subr.bf16.mxu0 0
      %3915 = vmatpush1.bf16.msra.mxu0 0
      %3916 = vmatprep.subr.bf16.mxu0 0
      %3917 = vmatpush1.bf16.msra.mxu0 0
      %3918 = vmatprep.subr.bf16.mxu0 0
      %3919 = vmatpush1.bf16.msra.mxu0 0
      %3920 = vmatprep.subr.bf16.mxu0 0
      %3921 = vmatpush1.bf16.msra.mxu0 0
      %3922 = vmatprep.subr.bf16.mxu0 0
      %3923 = vmatpush1.bf16.msra.mxu0 0
      %3924 = vmatprep.subr.bf16.mxu0 0
      %3925 = vmatpush1.bf16.msra.mxu0 0
      %3926 = vmatprep.subr.bf16.mxu0 0
      %3927 = vmatpush1.bf16.msra.mxu0 0
      %3928 = vmatprep.subr.bf16.mxu0 0
      %3929 = vmatpush1.bf16.msra.mxu0 0
      %3930 = vmatprep.subr.bf16.mxu0 0
      %3931 = vmatpush1.bf16.msra.mxu0 0
      %3932 = vmatprep.subr.bf16.mxu0 0
      %3933 = vmatpush1.bf16.msra.mxu0 0
      %3934 = vmatprep.subr.bf16.mxu0 0
      %3935 = vmatpush1.bf16.msra.mxu0 0
      %3936 = vmatprep.subr.bf16.mxu0 0
      %3937 = vmatpush1.bf16.msra.mxu0 0
      %3938 = vmatprep.mubr.bf16.mxu0 0
      %3939 = vmatmul.mubr.bf16.gmra.mrb[0].mxu0 %v3901
      %v3940 = vpop.f32.mrb[0].mxu0
      %v3941 = vadd.f32 0.0, %v3940
      %v3942 = vpop.f32.mrb[0].mxu0
      %v3943 = vpop.f32.mrb[0].mxu0
      %v3944 = vpop.f32.mrb[0].mxu0
      %3945 = vdwg.mxu0
      %v3947 = vsel %vm1178, %v3058, 0
      %v3950 = vsel %vm3074, %v1165, 0
      %3952 = vmatprep.subr.bf16.mxu0 0
      %3953 = vmatpush1.bf16.msra.mxu0 %v3950
      %3954 = vmatprep.subr.bf16.mxu0 0
      %3955 = vmatpush1.bf16.msra.mxu0 0
      %3956 = vmatprep.subr.bf16.mxu0 0
      %3957 = vmatpush1.bf16.msra.mxu0 0
      %3958 = vmatprep.subr.bf16.mxu0 0
      %3959 = vmatpush1.bf16.msra.mxu0 0
      %3960 = vmatprep.subr.bf16.mxu0 0
      %3961 = vmatpush1.bf16.msra.mxu0 0
      %3962 = vmatprep.subr.bf16.mxu0 0
      %3963 = vmatpush1.bf16.msra.mxu0 0
      %3964 = vmatprep.subr.bf16.mxu0 0
      %3965 = vmatpush1.bf16.msra.mxu0 0
      %3966 = vmatprep.subr.bf16.mxu0 0
      %3967 = vmatpush1.bf16.msra.mxu0 0
      %3968 = vmatprep.subr.bf16.mxu0 0
      %3969 = vmatpush1.bf16.msra.mxu0 0
      %3970 = vmatprep.subr.bf16.mxu0 0
      %3971 = vmatpush1.bf16.msra.mxu0 0
      %3972 = vmatprep.subr.bf16.mxu0 0
      %3973 = vmatpush1.bf16.msra.mxu0 0
      %3974 = vmatprep.subr.bf16.mxu0 0
      %3975 = vmatpush1.bf16.msra.mxu0 0
      %3976 = vmatprep.subr.bf16.mxu0 0
      %3977 = vmatpush1.bf16.msra.mxu0 0
      %3978 = vmatprep.subr.bf16.mxu0 0
      %3979 = vmatpush1.bf16.msra.mxu0 0
      %3980 = vmatprep.subr.bf16.mxu0 0
      %3981 = vmatpush1.bf16.msra.mxu0 0
      %3982 = vmatprep.subr.bf16.mxu0 0
      %3983 = vmatpush1.bf16.msra.mxu0 0
      %3984 = vmatprep.mubr.bf16.mxu0 0
      %3985 = vmatmul.mubr.bf16.gmra.mrb[0].mxu0 %v3947
      %v3986 = vpop.f32.mrb[0].mxu0
      %v3987 = vadd.f32 0.0, %v3986
      %v3988 = vpop.f32.mrb[0].mxu0
      %v3989 = vpop.f32.mrb[0].mxu0
      %v3990 = vpop.f32.mrb[0].mxu0
      %3991 = vdwg.mxu0
      %v3993 = vsel %vm1178, %v3059, 0
      %v3996 = vsel %vm3074, %v1166, 0
      %3998 = vmatprep.subr.bf16.mxu0 0
      %3999 = vmatpush1.bf16.msra.mxu0 %v3996
      %4000 = vmatprep.subr.bf16.mxu0 0
      %4001 = vmatpush1.bf16.msra.mxu0 0
      %4002 = vmatprep.subr.bf16.mxu0 0
      %4003 = vmatpush1.bf16.msra.mxu0 0
      %4004 = vmatprep.subr.bf16.mxu0 0
      %4005 = vmatpush1.bf16.msra.mxu0 0
      %4006 = vmatprep.subr.bf16.mxu0 0
      %4007 = vmatpush1.bf16.msra.mxu0 0
      %4008 = vmatprep.subr.bf16.mxu0 0
      %4009 = vmatpush1.bf16.msra.mxu0 0
      %4010 = vmatprep.subr.bf16.mxu0 0
      %4011 = vmatpush1.bf16.msra.mxu0 0
      %4012 = vmatprep.subr.bf16.mxu0 0
      %4013 = vmatpush1.bf16.msra.mxu0 0
      %4014 = vmatprep.subr.bf16.mxu0 0
      %4015 = vmatpush1.bf16.msra.mxu0 0
      %4016 = vmatprep.subr.bf16.mxu0 0
      %4017 = vmatpush1.bf16.msra.mxu0 0
      %4018 = vmatprep.subr.bf16.mxu0 0
      %4019 = vmatpush1.bf16.msra.mxu0 0
      %4020 = vmatprep.subr.bf16.mxu0 0
      %4021 = vmatpush1.bf16.msra.mxu0 0
      %4022 = vmatprep.subr.bf16.mxu0 0
      %4023 = vmatpush1.bf16.msra.mxu0 0
      %4024 = vmatprep.subr.bf16.mxu0 0
      %4025 = vmatpush1.bf16.msra.mxu0 0
      %4026 = vmatprep.subr.bf16.mxu0 0
      %4027 = vmatpush1.bf16.msra.mxu0 0
      %4028 = vmatprep.subr.bf16.mxu0 0
      %4029 = vmatpush1.bf16.msra.mxu0 0
      %4030 = vmatprep.mubr.bf16.mxu0 0
      %4031 = vmatmul.mubr.bf16.gmra.mrb[0].mxu0 %v3993
      %v4032 = vpop.f32.mrb[0].mxu0
      %v4033 = vadd.f32 0.0, %v4032
      %v4034 = vpop.f32.mrb[0].mxu0
      %v4035 = vpop.f32.mrb[0].mxu0
      %v4036 = vpop.f32.mrb[0].mxu0
      %4037 = vdwg.mxu0
      %v4039 = vsel %vm1178, %v3060, 0
      %v4042 = vsel %vm3074, %v1167, 0
      %4044 = vmatprep.subr.bf16.mxu0 0
      %4045 = vmatpush1.bf16.msra.mxu0 %v4042
      %4046 = vmatprep.subr.bf16.mxu0 0
      %4047 = vmatpush1.bf16.msra.mxu0 0
      %4048 = vmatprep.subr.bf16.mxu0 0
      %4049 = vmatpush1.bf16.msra.mxu0 0
      %4050 = vmatprep.subr.bf16.mxu0 0
      %4051 = vmatpush1.bf16.msra.mxu0 0
      %4052 = vmatprep.subr.bf16.mxu0 0
      %4053 = vmatpush1.bf16.msra.mxu0 0
      %4054 = vmatprep.subr.bf16.mxu0 0
      %4055 = vmatpush1.bf16.msra.mxu0 0
      %4056 = vmatprep.subr.bf16.mxu0 0
      %4057 = vmatpush1.bf16.msra.mxu0 0
      %4058 = vmatprep.subr.bf16.mxu0 0
      %4059 = vmatpush1.bf16.msra.mxu0 0
      %4060 = vmatprep.subr.bf16.mxu0 0
      %4061 = vmatpush1.bf16.msra.mxu0 0
      %4062 = vmatprep.subr.bf16.mxu0 0
      %4063 = vmatpush1.bf16.msra.mxu0 0
      %4064 = vmatprep.subr.bf16.mxu0 0
      %4065 = vmatpush1.bf16.msra.mxu0 0
      %4066 = vmatprep.subr.bf16.mxu0 0
      %4067 = vmatpush1.bf16.msra.mxu0 0
      %4068 = vmatprep.subr.bf16.mxu0 0
      %4069 = vmatpush1.bf16.msra.mxu0 0
      %4070 = vmatprep.subr.bf16.mxu0 0
      %4071 = vmatpush1.bf16.msra.mxu0 0
      %4072 = vmatprep.subr.bf16.mxu0 0
      %4073 = vmatpush1.bf16.msra.mxu0 0
      %4074 = vmatprep.subr.bf16.mxu0 0
      %4075 = vmatpush1.bf16.msra.mxu0 0
      %4076 = vmatprep.mubr.bf16.mxu0 0
      %4077 = vmatmul.mubr.bf16.gmra.mrb[0].mxu0 %v4039
      %v4078 = vpop.f32.mrb[0].mxu0
      %v4079 = vadd.f32 0.0, %v4078
      %v4080 = vpop.f32.mrb[0].mxu0
      %v4081 = vpop.f32.mrb[0].mxu0
      %v4082 = vpop.f32.mrb[0].mxu0
      %4083 = vdwg.mxu0
      %v4085 = vsel %vm1178, %v3061, 0
      %v4088 = vsel %vm3074, %v1168, 0
      %4090 = vmatprep.subr.bf16.mxu0 0
      %4091 = vmatpush1.bf16.msra.mxu0 %v4088
      %4092 = vmatprep.subr.bf16.mxu0 0
      %4093 = vmatpush1.bf16.msra.mxu0 0
      %4094 = vmatprep.subr.bf16.mxu0 0
      %4095 = vmatpush1.bf16.msra.mxu0 0
      %4096 = vmatprep.subr.bf16.mxu0 0
      %4097 = vmatpush1.bf16.msra.mxu0 0
      %4098 = vmatprep.subr.bf16.mxu0 0
      %4099 = vmatpush1.bf16.msra.mxu0 0
      %4100 = vmatprep.subr.bf16.mxu0 0
      %4101 = vmatpush1.bf16.msra.mxu0 0
      %4102 = vmatprep.subr.bf16.mxu0 0
      %4103 = vmatpush1.bf16.msra.mxu0 0
      %4104 = vmatprep.subr.bf16.mxu0 0
      %4105 = vmatpush1.bf16.msra.mxu0 0
      %4106 = vmatprep.subr.bf16.mxu0 0
      %4107 = vmatpush1.bf16.msra.mxu0 0
      %4108 = vmatprep.subr.bf16.mxu0 0
      %4109 = vmatpush1.bf16.msra.mxu0 0
      %4110 = vmatprep.subr.bf16.mxu0 0
      %4111 = vmatpush1.bf16.msra.mxu0 0
      %4112 = vmatprep.subr.bf16.mxu0 0
      %4113 = vmatpush1.bf16.msra.mxu0 0
      %4114 = vmatprep.subr.bf16.mxu0 0
      %4115 = vmatpush1.bf16.msra.mxu0 0
      %4116 = vmatprep.subr.bf16.mxu0 0
      %4117 = vmatpush1.bf16.msra.mxu0 0
      %4118 = vmatprep.subr.bf16.mxu0 0
      %4119 = vmatpush1.bf16.msra.mxu0 0
      %4120 = vmatprep.subr.bf16.mxu0 0
      %4121 = vmatpush1.bf16.msra.mxu0 0
      %4122 = vmatprep.mubr.bf16.mxu0 0
      %4123 = vmatmul.mubr.bf16.gmra.mrb[0].mxu0 %v4085
      %v4124 = vpop.f32.mrb[0].mxu0
      %v4125 = vadd.f32 0.0, %v4124
      %v4126 = vpop.f32.mrb[0].mxu0
      %v4127 = vpop.f32.mrb[0].mxu0
      %v4128 = vpop.f32.mrb[0].mxu0
      %4129 = vdwg.mxu0
      %v4131 = vsel %vm1178, %v3062, 0
      %v4134 = vsel %vm3074, %v1169, 0
      %4136 = vmatprep.subr.bf16.mxu0 0
      %4137 = vmatpush1.bf16.msra.mxu0 %v4134
      %4138 = vmatprep.subr.bf16.mxu0 0
      %4139 = vmatpush1.bf16.msra.mxu0 0
      %4140 = vmatprep.subr.bf16.mxu0 0
      %4141 = vmatpush1.bf16.msra.mxu0 0
      %4142 = vmatprep.subr.bf16.mxu0 0
      %4143 = vmatpush1.bf16.msra.mxu0 0
      %4144 = vmatprep.subr.bf16.mxu0 0
      %4145 = vmatpush1.bf16.msra.mxu0 0
      %4146 = vmatprep.subr.bf16.mxu0 0
      %4147 = vmatpush1.bf16.msra.mxu0 0
      %4148 = vmatprep.subr.bf16.mxu0 0
      %4149 = vmatpush1.bf16.msra.mxu0 0
      %4150 = vmatprep.subr.bf16.mxu0 0
      %4151 = vmatpush1.bf16.msra.mxu0 0
      %4152 = vmatprep.subr.bf16.mxu0 0
      %4153 = vmatpush1.bf16.msra.mxu0 0
      %4154 = vmatprep.subr.bf16.mxu0 0
      %4155 = vmatpush1.bf16.msra.mxu0 0
      %4156 = vmatprep.subr.bf16.mxu0 0
      %4157 = vmatpush1.bf16.msra.mxu0 0
      %4158 = vmatprep.subr.bf16.mxu0 0
      %4159 = vmatpush1.bf16.msra.mxu0 0
      %4160 = vmatprep.subr.bf16.mxu0 0
      %4161 = vmatpush1.bf16.msra.mxu0 0
      %4162 = vmatprep.subr.bf16.mxu0 0
      %4163 = vmatpush1.bf16.msra.mxu0 0
      %4164 = vmatprep.subr.bf16.mxu0 0
      %4165 = vmatpush1.bf16.msra.mxu0 0
      %4166 = vmatprep.subr.bf16.mxu0 0
      %4167 = vmatpush1.bf16.msra.mxu0 0
      %4168 = vmatprep.mubr.bf16.mxu0 0
      %4169 = vmatmul.mubr.bf16.gmra.mrb[0].mxu0 %v4131
      %v4170 = vpop.f32.mrb[0].mxu0
      %v4171 = vadd.f32 0.0, %v4170
      %v4172 = vpop.f32.mrb[0].mxu0
      %v4173 = vpop.f32.mrb[0].mxu0
      %v4174 = vpop.f32.mrb[0].mxu0
      %4175 = vdwg.mxu0
      %v4177 = vsel %vm1178, %v3063, 0
      %v4180 = vsel %vm3074, %v1170, 0
      %4182 = vmatprep.subr.bf16.mxu0 0
      %4183 = vmatpush1.bf16.msra.mxu0 %v4180
      %4184 = vmatprep.subr.bf16.mxu0 0
      %4185 = vmatpush1.bf16.msra.mxu0 0
      %4186 = vmatprep.subr.bf16.mxu0 0
      %4187 = vmatpush1.bf16.msra.mxu0 0
      %4188 = vmatprep.subr.bf16.mxu0 0
      %4189 = vmatpush1.bf16.msra.mxu0 0
      %4190 = vmatprep.subr.bf16.mxu0 0
      %4191 = vmatpush1.bf16.msra.mxu0 0
      %4192 = vmatprep.subr.bf16.mxu0 0
      %4193 = vmatpush1.bf16.msra.mxu0 0
      %4194 = vmatprep.subr.bf16.mxu0 0
      %4195 = vmatpush1.bf16.msra.mxu0 0
      %4196 = vmatprep.subr.bf16.mxu0 0
      %4197 = vmatpush1.bf16.msra.mxu0 0
      %4198 = vmatprep.subr.bf16.mxu0 0
      %4199 = vmatpush1.bf16.msra.mxu0 0
      %4200 = vmatprep.subr.bf16.mxu0 0
      %4201 = vmatpush1.bf16.msra.mxu0 0
      %4202 = vmatprep.subr.bf16.mxu0 0
      %4203 = vmatpush1.bf16.msra.mxu0 0
      %4204 = vmatprep.subr.bf16.mxu0 0
      %4205 = vmatpush1.bf16.msra.mxu0 0
      %4206 = vmatprep.subr.bf16.mxu0 0
      %4207 = vmatpush1.bf16.msra.mxu0 0
      %4208 = vmatprep.subr.bf16.mxu0 0
      %4209 = vmatpush1.bf16.msra.mxu0 0
      %4210 = vmatprep.subr.bf16.mxu0 0
      %4211 = vmatpush1.bf16.msra.mxu0 0
      %4212 = vmatprep.subr.bf16.mxu0 0
      %4213 = vmatpush1.bf16.msra.mxu0 0
      %4214 = vmatprep.mubr.bf16.mxu0 0
      %4215 = vmatmul.mubr.bf16.gmra.mrb[0].mxu0 %v4177
      %v4216 = vpop.f32.mrb[0].mxu0
      %v4217 = vadd.f32 0.0, %v4216
      %v4218 = vpop.f32.mrb[0].mxu0
      %v4219 = vpop.f32.mrb[0].mxu0
      %v4220 = vpop.f32.mrb[0].mxu0
      %4221 = vdwg.mxu0
      %v4223 = vsel %vm1178, %v3064, 0
      %v4226 = vsel %vm3074, %v1171, 0
      %4228 = vmatprep.subr.bf16.mxu0 0
      %4229 = vmatpush1.bf16.msra.mxu0 %v4226
      %4230 = vmatprep.subr.bf16.mxu0 0
      %4231 = vmatpush1.bf16.msra.mxu0 0
      %4232 = vmatprep.subr.bf16.mxu0 0
      %4233 = vmatpush1.bf16.msra.mxu0 0
      %4234 = vmatprep.subr.bf16.mxu0 0
      %4235 = vmatpush1.bf16.msra.mxu0 0
      %4236 = vmatprep.subr.bf16.mxu0 0
      %4237 = vmatpush1.bf16.msra.mxu0 0
      %4238 = vmatprep.subr.bf16.mxu0 0
      %4239 = vmatpush1.bf16.msra.mxu0 0
      %4240 = vmatprep.subr.bf16.mxu0 0
      %4241 = vmatpush1.bf16.msra.mxu0 0
      %4242 = vmatprep.subr.bf16.mxu0 0
      %4243 = vmatpush1.bf16.msra.mxu0 0
      %4244 = vmatprep.subr.bf16.mxu0 0
      %4245 = vmatpush1.bf16.msra.mxu0 0
      %4246 = vmatprep.subr.bf16.mxu0 0
      %4247 = vmatpush1.bf16.msra.mxu0 0
      %4248 = vmatprep.subr.bf16.mxu0 0
      %4249 = vmatpush1.bf16.msra.mxu0 0
      %4250 = vmatprep.subr.bf16.mxu0 0
      %4251 = vmatpush1.bf16.msra.mxu0 0
      %4252 = vmatprep.subr.bf16.mxu0 0
      %4253 = vmatpush1.bf16.msra.mxu0 0
      %4254 = vmatprep.subr.bf16.mxu0 0
      %4255 = vmatpush1.bf16.msra.mxu0 0
      %4256 = vmatprep.subr.bf16.mxu0 0
      %4257 = vmatpush1.bf16.msra.mxu0 0
      %4258 = vmatprep.subr.bf16.mxu0 0
      %4259 = vmatpush1.bf16.msra.mxu0 0
      %4260 = vmatprep.mubr.bf16.mxu0 0
      %4261 = vmatmul.mubr.bf16.gmra.mrb[0].mxu0 %v4223
      %v4262 = vpop.f32.mrb[0].mxu0
      %v4263 = vadd.f32 0.0, %v4262
      %v4264 = vpop.f32.mrb[0].mxu0
      %v4265 = vpop.f32.mrb[0].mxu0
      %v4266 = vpop.f32.mrb[0].mxu0
      %4267 = vdwg.mxu0
      %v4269 = vsel %vm1178, %v3065, 0
      %v4272 = vsel %vm3074, %v1172, 0
      %4274 = vmatprep.subr.bf16.mxu0 0
      %4275 = vmatpush1.bf16.msra.mxu0 %v4272
      %4276 = vmatprep.subr.bf16.mxu0 0
      %4277 = vmatpush1.bf16.msra.mxu0 0
      %4278 = vmatprep.subr.bf16.mxu0 0
      %4279 = vmatpush1.bf16.msra.mxu0 0
      %4280 = vmatprep.subr.bf16.mxu0 0
      %4281 = vmatpush1.bf16.msra.mxu0 0
      %4282 = vmatprep.subr.bf16.mxu0 0
      %4283 = vmatpush1.bf16.msra.mxu0 0
      %4284 = vmatprep.subr.bf16.mxu0 0
      %4285 = vmatpush1.bf16.msra.mxu0 0
      %4286 = vmatprep.subr.bf16.mxu0 0
      %4287 = vmatpush1.bf16.msra.mxu0 0
      %4288 = vmatprep.subr.bf16.mxu0 0
      %4289 = vmatpush1.bf16.msra.mxu0 0
      %4290 = vmatprep.subr.bf16.mxu0 0
      %4291 = vmatpush1.bf16.msra.mxu0 0
      %4292 = vmatprep.subr.bf16.mxu0 0
      %4293 = vmatpush1.bf16.msra.mxu0 0
      %4294 = vmatprep.subr.bf16.mxu0 0
      %4295 = vmatpush1.bf16.msra.mxu0 0
      %4296 = vmatprep.subr.bf16.mxu0 0
      %4297 = vmatpush1.bf16.msra.mxu0 0
      %4298 = vmatprep.subr.bf16.mxu0 0
      %4299 = vmatpush1.bf16.msra.mxu0 0
      %4300 = vmatprep.subr.bf16.mxu0 0
      %4301 = vmatpush1.bf16.msra.mxu0 0
      %4302 = vmatprep.subr.bf16.mxu0 0
      %4303 = vmatpush1.bf16.msra.mxu0 0
      %4304 = vmatprep.subr.bf16.mxu0 0
      %4305 = vmatpush1.bf16.msra.mxu0 0
      %4306 = vmatprep.mubr.bf16.mxu0 0
      %4307 = vmatmul.mubr.bf16.gmra.mrb[0].mxu0 %v4269
      %v4308 = vpop.f32.mrb[0].mxu0
      %v4309 = vadd.f32 0.0, %v4308
      %v4310 = vpop.f32.mrb[0].mxu0
      %v4311 = vpop.f32.mrb[0].mxu0
      %v4312 = vpop.f32.mrb[0].mxu0
      %4313 = vdwg.mxu0
      %v4315 = vsel %vm1178, %v3066, 0
      %v4318 = vsel %vm3074, %v1173, 0
      %4320 = vmatprep.subr.bf16.mxu0 0
      %4321 = vmatpush1.bf16.msra.mxu0 %v4318
      %4322 = vmatprep.subr.bf16.mxu0 0
      %4323 = vmatpush1.bf16.msra.mxu0 0
      %4324 = vmatprep.subr.bf16.mxu0 0
      %4325 = vmatpush1.bf16.msra.mxu0 0
      %4326 = vmatprep.subr.bf16.mxu0 0
      %4327 = vmatpush1.bf16.msra.mxu0 0
      %4328 = vmatprep.subr.bf16.mxu0 0
      %4329 = vmatpush1.bf16.msra.mxu0 0
      %4330 = vmatprep.subr.bf16.mxu0 0
      %4331 = vmatpush1.bf16.msra.mxu0 0
      %4332 = vmatprep.subr.bf16.mxu0 0
      %4333 = vmatpush1.bf16.msra.mxu0 0
      %4334 = vmatprep.subr.bf16.mxu0 0
      %4335 = vmatpush1.bf16.msra.mxu0 0
      %4336 = vmatprep.subr.bf16.mxu0 0
      %4337 = vmatpush1.bf16.msra.mxu0 0
      %4338 = vmatprep.subr.bf16.mxu0 0
      %4339 = vmatpush1.bf16.msra.mxu0 0
      %4340 = vmatprep.subr.bf16.mxu0 0
      %4341 = vmatpush1.bf16.msra.mxu0 0
      %4342 = vmatprep.subr.bf16.mxu0 0
      %4343 = vmatpush1.bf16.msra.mxu0 0
      %4344 = vmatprep.subr.bf16.mxu0 0
      %4345 = vmatpush1.bf16.msra.mxu0 0
      %4346 = vmatprep.subr.bf16.mxu0 0
      %4347 = vmatpush1.bf16.msra.mxu0 0
      %4348 = vmatprep.subr.bf16.mxu0 0
      %4349 = vmatpush1.bf16.msra.mxu0 0
      %4350 = vmatprep.subr.bf16.mxu0 0
      %4351 = vmatpush1.bf16.msra.mxu0 0
      %4352 = vmatprep.mubr.bf16.mxu0 0
      %4353 = vmatmul.mubr.bf16.gmra.mrb[0].mxu0 %v4315
      %v4354 = vpop.f32.mrb[0].mxu0
      %v4355 = vadd.f32 0.0, %v4354
      %v4356 = vpop.f32.mrb[0].mxu0
      %v4357 = vpop.f32.mrb[0].mxu0
      %v4358 = vpop.f32.mrb[0].mxu0
      %4359 = vdwg.mxu0
      %v4361 = vsel %vm1178, %v3067, 0
      %v4364 = vsel %vm3074, %v1174, 0
      %4366 = vmatprep.subr.bf16.mxu0 0
      %4367 = vmatpush1.bf16.msra.mxu0 %v4364
      %4368 = vmatprep.subr.bf16.mxu0 0
      %4369 = vmatpush1.bf16.msra.mxu0 0
      %4370 = vmatprep.subr.bf16.mxu0 0
      %4371 = vmatpush1.bf16.msra.mxu0 0
      %4372 = vmatprep.subr.bf16.mxu0 0
      %4373 = vmatpush1.bf16.msra.mxu0 0
      %4374 = vmatprep.subr.bf16.mxu0 0
      %4375 = vmatpush1.bf16.msra.mxu0 0
      %4376 = vmatprep.subr.bf16.mxu0 0
      %4377 = vmatpush1.bf16.msra.mxu0 0
      %4378 = vmatprep.subr.bf16.mxu0 0
      %4379 = vmatpush1.bf16.msra.mxu0 0
      %4380 = vmatprep.subr.bf16.mxu0 0
      %4381 = vmatpush1.bf16.msra.mxu0 0
      %4382 = vmatprep.subr.bf16.mxu0 0
      %4383 = vmatpush1.bf16.msra.mxu0 0
      %4384 = vmatprep.subr.bf16.mxu0 0
      %4385 = vmatpush1.bf16.msra.mxu0 0
      %4386 = vmatprep.subr.bf16.mxu0 0
      %4387 = vmatpush1.bf16.msra.mxu0 0
      %4388 = vmatprep.subr.bf16.mxu0 0
      %4389 = vmatpush1.bf16.msra.mxu0 0
      %4390 = vmatprep.subr.bf16.mxu0 0
      %4391 = vmatpush1.bf16.msra.mxu0 0
      %4392 = vmatprep.subr.bf16.mxu0 0
      %4393 = vmatpush1.bf16.msra.mxu0 0
      %4394 = vmatprep.subr.bf16.mxu0 0
      %4395 = vmatpush1.bf16.msra.mxu0 0
      %4396 = vmatprep.subr.bf16.mxu0 0
      %4397 = vmatpush1.bf16.msra.mxu0 0
      %4398 = vmatprep.mubr.bf16.mxu0 0
      %4399 = vmatmul.mubr.bf16.gmra.mrb[0].mxu0 %v4361
      %v4400 = vpop.f32.mrb[0].mxu0
      %v4401 = vadd.f32 0.0, %v4400
      %v4402 = vpop.f32.mrb[0].mxu0
      %v4403 = vpop.f32.mrb[0].mxu0
      %v4404 = vpop.f32.mrb[0].mxu0
      %4405 = vdwg.mxu0
      %v4407 = vsel %vm1178, %v3068, 0
      %v4410 = vsel %vm3074, %v1175, 0
      %4412 = vmatprep.subr.bf16.mxu0 0
      %4413 = vmatpush1.bf16.msra.mxu0 %v4410
      %4414 = vmatprep.subr.bf16.mxu0 0
      %4415 = vmatpush1.bf16.msra.mxu0 0
      %4416 = vmatprep.subr.bf16.mxu0 0
      %4417 = vmatpush1.bf16.msra.mxu0 0
      %4418 = vmatprep.subr.bf16.mxu0 0
      %4419 = vmatpush1.bf16.msra.mxu0 0
      %4420 = vmatprep.subr.bf16.mxu0 0
      %4421 = vmatpush1.bf16.msra.mxu0 0
      %4422 = vmatprep.subr.bf16.mxu0 0
      %4423 = vmatpush1.bf16.msra.mxu0 0
      %4424 = vmatprep.subr.bf16.mxu0 0
      %4425 = vmatpush1.bf16.msra.mxu0 0
      %4426 = vmatprep.subr.bf16.mxu0 0
      %4427 = vmatpush1.bf16.msra.mxu0 0
      %4428 = vmatprep.subr.bf16.mxu0 0
      %4429 = vmatpush1.bf16.msra.mxu0 0
      %4430 = vmatprep.subr.bf16.mxu0 0
      %4431 = vmatpush1.bf16.msra.mxu0 0
      %4432 = vmatprep.subr.bf16.mxu0 0
      %4433 = vmatpush1.bf16.msra.mxu0 0
      %4434 = vmatprep.subr.bf16.mxu0 0
      %4435 = vmatpush1.bf16.msra.mxu0 0
      %4436 = vmatprep.subr.bf16.mxu0 0
      %4437 = vmatpush1.bf16.msra.mxu0 0
      %4438 = vmatprep.subr.bf16.mxu0 0
      %4439 = vmatpush1.bf16.msra.mxu0 0
      %4440 = vmatprep.subr.bf16.mxu0 0
      %4441 = vmatpush1.bf16.msra.mxu0 0
      %4442 = vmatprep.subr.bf16.mxu0 0
      %4443 = vmatpush1.bf16.msra.mxu0 0
      %4444 = vmatprep.mubr.bf16.mxu0 0
      %4445 = vmatmul.mubr.bf16.gmra.mrb[0].mxu0 %v4407
      %v4446 = vpop.f32.mrb[0].mxu0
      %v4447 = vadd.f32 0.0, %v4446
      %v4448 = vpop.f32.mrb[0].mxu0
      %v4449 = vpop.f32.mrb[0].mxu0
      %v4450 = vpop.f32.mrb[0].mxu0
      %4451 = vdwg.mxu0
      %v4453 = vsel %vm1178, %v3069, 0
      %v4456 = vsel %vm3074, %v1176, 0
      %4458 = vmatprep.subr.bf16.mxu0 0
      %4459 = vmatpush1.bf16.msra.mxu0 %v4456
      %4460 = vmatprep.subr.bf16.mxu0 0
      %4461 = vmatpush1.bf16.msra.mxu0 0
      %4462 = vmatprep.subr.bf16.mxu0 0
      %4463 = vmatpush1.bf16.msra.mxu0 0
      %4464 = vmatprep.subr.bf16.mxu0 0
      %4465 = vmatpush1.bf16.msra.mxu0 0
      %4466 = vmatprep.subr.bf16.mxu0 0
      %4467 = vmatpush1.bf16.msra.mxu0 0
      %4468 = vmatprep.subr.bf16.mxu0 0
      %4469 = vmatpush1.bf16.msra.mxu0 0
      %4470 = vmatprep.subr.bf16.mxu0 0
      %4471 = vmatpush1.bf16.msra.mxu0 0
      %4472 = vmatprep.subr.bf16.mxu0 0
      %4473 = vmatpush1.bf16.msra.mxu0 0
      %4474 = vmatprep.subr.bf16.mxu0 0
      %4475 = vmatpush1.bf16.msra.mxu0 0
      %4476 = vmatprep.subr.bf16.mxu0 0
      %4477 = vmatpush1.bf16.msra.mxu0 0
      %4478 = vmatprep.subr.bf16.mxu0 0
      %4479 = vmatpush1.bf16.msra.mxu0 0
      %4480 = vmatprep.subr.bf16.mxu0 0
      %4481 = vmatpush1.bf16.msra.mxu0 0
      %4482 = vmatprep.subr.bf16.mxu0 0
      %4483 = vmatpush1.bf16.msra.mxu0 0
      %4484 = vmatprep.subr.bf16.mxu0 0
      %4485 = vmatpush1.bf16.msra.mxu0 0
      %4486 = vmatprep.subr.bf16.mxu0 0
      %4487 = vmatpush1.bf16.msra.mxu0 0
      %4488 = vmatprep.subr.bf16.mxu0 0
      %4489 = vmatpush1.bf16.msra.mxu0 0
      %4490 = vmatprep.mubr.bf16.mxu0 0
      %4491 = vmatmul.mubr.bf16.gmra.mrb[0].mxu0 %v4453
      %v4492 = vpop.f32.mrb[0].mxu0
      %v4493 = vadd.f32 0.0, %v4492
      %v4494 = vpop.f32.mrb[0].mxu0
      %v4495 = vpop.f32.mrb[0].mxu0
      %v4496 = vpop.f32.mrb[0].mxu0
      %4497 = vdwg.mxu0
      %v4499 = vsel %vm1178, %v3070, 0
      %v4502 = vsel %vm3074, %v1177, 0
      %4504 = vmatprep.subr.bf16.mxu0 0
      %4505 = vmatpush1.bf16.msra.mxu0 %v4502
      %4506 = vmatprep.subr.bf16.mxu0 0
      %4507 = vmatpush1.bf16.msra.mxu0 0
      %4508 = vmatprep.subr.bf16.mxu0 0
      %4509 = vmatpush1.bf16.msra.mxu0 0
      %4510 = vmatprep.subr.bf16.mxu0 0
      %4511 = vmatpush1.bf16.msra.mxu0 0
      %4512 = vmatprep.subr.bf16.mxu0 0
      %4513 = vmatpush1.bf16.msra.mxu0 0
      %4514 = vmatprep.subr.bf16.mxu0 0
      %4515 = vmatpush1.bf16.msra.mxu0 0
      %4516 = vmatprep.subr.bf16.mxu0 0
      %4517 = vmatpush1.bf16.msra.mxu0 0
      %4518 = vmatprep.subr.bf16.mxu0 0
      %4519 = vmatpush1.bf16.msra.mxu0 0
      %4520 = vmatprep.subr.bf16.mxu0 0
      %4521 = vmatpush1.bf16.msra.mxu0 0
      %4522 = vmatprep.subr.bf16.mxu0 0
      %4523 = vmatpush1.bf16.msra.mxu0 0
      %4524 = vmatprep.subr.bf16.mxu0 0
      %4525 = vmatpush1.bf16.msra.mxu0 0
      %4526 = vmatprep.subr.bf16.mxu0 0
      %4527 = vmatpush1.bf16.msra.mxu0 0
      %4528 = vmatprep.subr.bf16.mxu0 0
      %4529 = vmatpush1.bf16.msra.mxu0 0
      %4530 = vmatprep.subr.bf16.mxu0 0
      %4531 = vmatpush1.bf16.msra.mxu0 0
      %4532 = vmatprep.subr.bf16.mxu0 0
      %4533 = vmatpush1.bf16.msra.mxu0 0
      %4534 = vmatprep.subr.bf16.mxu0 0
      %4535 = vmatpush1.bf16.msra.mxu0 0
      %4536 = vmatprep.mubr.bf16.mxu0 0
      %4537 = vmatmul.mubr.bf16.gmra.mrb[0].mxu0 %v4499
      %v4538 = vpop.f32.mrb[0].mxu0
      %v4539 = vadd.f32 0.0, %v4538
      %v4540 = vpop.f32.mrb[0].mxu0
      %v4541 = vpop.f32.mrb[0].mxu0
      %v4542 = vpop.f32.mrb[0].mxu0
      %4543 = vdwg.mxu0
      %4552 = vrot.lane.b32.xlu0 %v3481, 8
      %v4553 = vpop.permute.xlu0 %4552
      %4554 = vrot.lane.b32.xlu0 %v3527, 8
      %v4555 = vpop.permute.xlu0 %4554
      %4556 = vrot.lane.b32.xlu0 %v3573, 8
      %v4557 = vpop.permute.xlu0 %4556
      %4558 = vrot.lane.b32.xlu0 %v3619, 8
      %v4559 = vpop.permute.xlu0 %4558
      %4560 = vrot.lane.b32.xlu0 %v3665, 8
      %v4561 = vpop.permute.xlu0 %4560
      %4562 = vrot.lane.b32.xlu0 %v3711, 8
      %v4563 = vpop.permute.xlu0 %4562
      %4564 = vrot.lane.b32.xlu0 %v3757, 8
      %v4565 = vpop.permute.xlu0 %4564
      %4566 = vrot.lane.b32.xlu0 %v3803, 8
      %v4567 = vpop.permute.xlu0 %4566
      %4584 = vrot.lane.b32.xlu0 %v3849, 16
      %v4585 = vpop.permute.xlu0 %4584
      %4586 = vrot.lane.b32.xlu0 %v3895, 16
      %v4587 = vpop.permute.xlu0 %4586
      %4588 = vrot.lane.b32.xlu0 %v3941, 16
      %v4589 = vpop.permute.xlu0 %4588
      %4590 = vrot.lane.b32.xlu0 %v3987, 16
      %v4591 = vpop.permute.xlu0 %4590
      %4592 = vrot.lane.b32.xlu0 %v4033, 16
      %v4593 = vpop.permute.xlu0 %4592
      %4594 = vrot.lane.b32.xlu0 %v4079, 16
      %v4595 = vpop.permute.xlu0 %4594
      %4596 = vrot.lane.b32.xlu0 %v4125, 16
      %v4597 = vpop.permute.xlu0 %4596
      %4598 = vrot.lane.b32.xlu0 %v4171, 16
      %v4599 = vpop.permute.xlu0 %4598
      %4616 = vrot.lane.b32.xlu0 %v4217, 24
      %v4617 = vpop.permute.xlu0 %4616
      %4618 = vrot.lane.b32.xlu0 %v4263, 24
      %v4619 = vpop.permute.xlu0 %4618
      %4620 = vrot.lane.b32.xlu0 %v4309, 24
      %v4621 = vpop.permute.xlu0 %4620
      %4622 = vrot.lane.b32.xlu0 %v4355, 24
      %v4623 = vpop.permute.xlu0 %4622
      %4624 = vrot.lane.b32.xlu0 %v4401, 24
      %v4625 = vpop.permute.xlu0 %4624
      %4626 = vrot.lane.b32.xlu0 %v4447, 24
      %v4627 = vpop.permute.xlu0 %4626
      %4628 = vrot.lane.b32.xlu0 %v4493, 24
      %v4629 = vpop.permute.xlu0 %4628
      %4630 = vrot.lane.b32.xlu0 %v4539, 24
      %v4631 = vpop.permute.xlu0 %4630
      %v4640 = vsel %vm1178, %v3113, %v4553
      %v4641 = vsel %vm1178, %v3159, %v4555
      %v4642 = vsel %vm1178, %v3205, %v4557
      %v4643 = vsel %vm1178, %v3251, %v4559
      %v4644 = vsel %vm1178, %v3297, %v4561
      %v4645 = vsel %vm1178, %v3343, %v4563
      %v4646 = vsel %vm1178, %v3389, %v4565
      %v4647 = vsel %vm1178, %v3435, %v4567
      %vm4648 = vcmask 130048
      %v4649 = vsel %vm4648, %v4640, %v4585
      %v4650 = vsel %vm4648, %v4641, %v4587
      %v4651 = vsel %vm4648, %v4642, %v4589
      %v4652 = vsel %vm4648, %v4643, %v4591
      %v4653 = vsel %vm4648, %v4644, %v4593
      %v4654 = vsel %vm4648, %v4645, %v4595
      %v4655 = vsel %vm4648, %v4646, %v4597
      %v4656 = vsel %vm4648, %v4647, %v4599
      %vm4657 = vcmask 195584
      %v4658 = vsel %vm4657, %v4649, %v4617
      %v4659 = vsel %vm4657, %v4650, %v4619
      %v4660 = vsel %vm4657, %v4651, %v4621
      %v4661 = vsel %vm4657, %v4652, %v4623
      %v4662 = vsel %vm4657, %v4653, %v4625
      %v4663 = vsel %vm4657, %v4654, %v4627
      %v4664 = vsel %vm4657, %v4655, %v4629
      %v4665 = vsel %vm4657, %v4656, %v4631
      %v4666 = vpack.c.bf16 %v4659, %v4658
      %v4667 = vpack.c.bf16 %v4661, %v4660
      %v4668 = vpack.c.bf16 %v4663, %v4662
      %v4669 = vpack.c.bf16 %v4665, %v4664
      %v4670 = vld [vmem:[%s10] sm:$0xf]
      %v4671 = vld [vmem:[%s10 + $0x4] sm:$0xf]
      %v4672 = vld [vmem:[%s10 + $0x8] sm:$0xf]
      %v4673 = vld [vmem:[%s10 + $0xc] sm:$0xf]
      %v4674 = vld [vmem:[%s11] sm:$0x1]
      %v4676 = vlaneseq
      %v4677 = vshrl.u32 %v4676, 7
      %v4678 = vsub.s32 0, %v4677
      %v4679 = vrot.slane %v4674, %v4678
      %v4685 = vunpack.c.l.b16 %v4670
      %v4686 = vunpack.c.l.b16 %v4671
      %v4687 = vunpack.c.l.b16 %v4672
      %v4688 = vunpack.c.l.b16 %v4673
      %v4689 = vpack.c.b16 %v4686, %v4685
      %v4690 = vpack.c.b16 %v4688, %v4687
      %v4694 = vsel %vm426, %v4666, 0
      %v4697 = vsel %vm426, %v4667, 0
      %v4700 = vsel %vm426, %v4668, 0
      %v4703 = vsel %vm426, %v4669, 0
      %4705 = vmatprep.subr.bf16.mxu0 0
      %4706 = vmatpush1.bf16.msra.mxu0 %v4689
      %4707 = vmatprep.subr.bf16.mxu0 0
      %4708 = vmatpush1.bf16.msra.mxu0 %v4690
      %4709 = vmatprep.subr.bf16.mxu0 0
      %4710 = vmatpush1.bf16.msra.mxu0 0
      %4711 = vmatprep.subr.bf16.mxu0 0
      %4712 = vmatpush1.bf16.msra.mxu0 0
      %4713 = vmatprep.subr.bf16.mxu0 0
      %4714 = vmatpush1.bf16.msra.mxu0 0
      %4715 = vmatprep.subr.bf16.mxu0 0
      %4716 = vmatpush1.bf16.msra.mxu0 0
      %4717 = vmatprep.subr.bf16.mxu0 0
      %4718 = vmatpush1.bf16.msra.mxu0 0
      %4719 = vmatprep.subr.bf16.mxu0 0
      %4720 = vmatpush1.bf16.msra.mxu0 0
      %4721 = vmatprep.subr.bf16.mxu0 0
      %4722 = vmatpush1.bf16.msra.mxu0 0
      %4723 = vmatprep.subr.bf16.mxu0 0
      %4724 = vmatpush1.bf16.msra.mxu0 0
      %4725 = vmatprep.subr.bf16.mxu0 0
      %4726 = vmatpush1.bf16.msra.mxu0 0
      %4727 = vmatprep.subr.bf16.mxu0 0
      %4728 = vmatpush1.bf16.msra.mxu0 0
      %4729 = vmatprep.subr.bf16.mxu0 0
      %4730 = vmatpush1.bf16.msra.mxu0 0
      %4731 = vmatprep.subr.bf16.mxu0 0
      %4732 = vmatpush1.bf16.msra.mxu0 0
      %4733 = vmatprep.subr.bf16.mxu0 0
      %4734 = vmatpush1.bf16.msra.mxu0 0
      %4735 = vmatprep.subr.bf16.mxu0 0
      %4736 = vmatpush1.bf16.msra.mxu0 0
      %4737 = vmatprep.mubr.bf16.mxu0 0
      %4738 = vmatmul.mubr.bf16.gmra.mrb[0].mxu0 %v4694
      %v4739 = vpop.f32.mrb[0].mxu0
      %v4740 = vadd.f32 %v4679, %v4739
      %v4741 = vpop.f32.mrb[0].mxu0
      %v4742 = vpop.f32.mrb[0].mxu0
      %v4743 = vadd.f32 %v4679, %v4742
      %v4744 = vpop.f32.mrb[0].mxu0
      %4745 = vmatprep.mubr.bf16.mxu0 0
      %4746 = vmatmul.mubr.bf16.gmra.mrb[0].mxu0 %v4697
      %v4747 = vpop.f32.mrb[0].mxu0
      %v4748 = vadd.f32 %v4679, %v4747
      %v4749 = vpop.f32.mrb[0].mxu0
      %v4750 = vpop.f32.mrb[0].mxu0
      %v4751 = vadd.f32 %v4679, %v4750
      %v4752 = vpop.f32.mrb[0].mxu0
      %4753 = vmatprep.mubr.bf16.mxu0 0
      %4754 = vmatmul.mubr.bf16.gmra.mrb[0].mxu0 %v4700
      %v4755 = vpop.f32.mrb[0].mxu0
      %v4756 = vadd.f32 %v4679, %v4755
      %v4757 = vpop.f32.mrb[0].mxu0
      %v4758 = vpop.f32.mrb[0].mxu0
      %v4759 = vadd.f32 %v4679, %v4758
      %v4760 = vpop.f32.mrb[0].mxu0
      %4761 = vmatprep.mubr.bf16.mxu0 0
      %4762 = vmatmul.mubr.bf16.gmra.mrb[0].mxu0 %v4703
      %v4763 = vpop.f32.mrb[0].mxu0
      %v4764 = vadd.f32 %v4679, %v4763
      %v4765 = vpop.f32.mrb[0].mxu0
      %v4766 = vpop.f32.mrb[0].mxu0
      %v4767 = vadd.f32 %v4679, %v4766
      %v4768 = vpop.f32.mrb[0].mxu0
      %4769 = vdwg.mxu0
      %v4770 = vadd.f32 %v418, %v4740
      %v4771 = vadd.f32 %v419, %v4743
      %v4772 = vadd.f32 %v420, %v4748
      %v4773 = vadd.f32 %v421, %v4751
      %v4774 = vadd.f32 %v422, %v4756
      %v4775 = vadd.f32 %v423, %v4759
      %v4776 = vadd.f32 %v424, %v4764
      %v4777 = vadd.f32 %v425, %v4767
      %4778 = vst.msk [vmem:[%s415] sm:$0xff] %vm426, %v4770
      %4779 = vst.msk [vmem:[%s415 + $0x8] sm:$0xff] %vm426, %v4771
      %4780 = vst.msk [vmem:[%s415 + $0x10] sm:$0xff] %vm426, %v4772
      %4781 = vst.msk [vmem:[%s415 + $0x18] sm:$0xff] %vm426, %v4773
      %4782 = vst.msk [vmem:[%s415 + $0x20] sm:$0xff] %vm426, %v4774
      %4783 = vst.msk [vmem:[%s415 + $0x28] sm:$0xff] %vm426, %v4775
      %4784 = vst.msk [vmem:[%s415 + $0x30] sm:$0xff] %vm426, %v4776
      %4785 = vst.msk [vmem:[%s415 + $0x38] sm:$0xff] %vm426, %v4777
      %s4786 = smul.u32 8, %s23
      %p4787 = scmp.lt.s32.totalorder %s4786, 15
      %s4788 = scalar_select %p4787, %s4786, 15
      %s4789 = smul.addr %s4788, 8
      %s4790 = scalar_lea.vmem %s12, %s4789
      // Predicated region
      $region69: #{tpu_custom_call.1} parent=67 // pred_check
        %p4791 = pneg %p298
      $region70: #{tpu_custom_call.1} parent=67 // pred_check_branch
        %4793 = sbr.rel (%p4791) target = $region72
      $region71: #{tpu_custom_call.1} parent=67 // pred_region
        %s4794 = smul.u32 8, %s23
      $region72: #{tpu_custom_call.1} parent=67 // pred_fallthru
        _
    $region68: #{tpu_custom_call.1} parent=5 // pred_fallthru
      _
    %p4795 = scmp.le.s32.totalorder 2, %s18
    // Predicated region
    $region73: #{tpu_custom_call.1} parent=5 // pred_check
      %p4796 = pneg %p4795
    $region74: #{tpu_custom_call.1} parent=5 // pred_check_branch
      %4798 = sbr.rel (%p4796) target = $region76
    $region75: #{tpu_custom_call.1} parent=5 // pred_region
      %s4799 = ssub.s32 %s18, 2
      // Predicated region
      $region77: #{tpu_custom_call.1} parent=75 // pred_check
        %p4800 = pneg %p304
      $region78: #{tpu_custom_call.1} parent=75 // pred_check_branch
        %4802 = sbr.rel (%p4800) target = $region80
      $region79: #{tpu_custom_call.1} parent=75 // pred_region
        %s4803 = smul.u32 8, %s24
        %p4804 = scmp.lt.s32.totalorder %s4803, 15
        %s4805 = scalar_select %p4804, %s4803, 15
        %s4806 = smul.addr %s4805, 8
        %s4807 = scalar_lea.vmem %s12, %s4806
      $region80: #{tpu_custom_call.1} parent=75 // pred_fallthru
        _
    $region76: #{tpu_custom_call.1} parent=5 // pred_fallthru
      _
  $region6: #{tpu_custom_call.1} parent=0 // loop_footer
    %s22 = sadd.s32 1, %s18
  $region7: #{tpu_custom_call.1} parent=0 // loop_footer_branch
    %17 = sbr.rel target = $region3
  $region8: #{tpu_custom_call.1} parent=0 // loop_exit
    _

</llo_original>
